<compile_context>
chip_gen: v7x
topology: tpu7x:2x2x1
jax: 0.10.0
libtpu: 0.0.40
codegen_flags: <defaults>
</compile_context>

<pallas_src>
import jax
import jax.numpy as jnp
from jax.experimental import pallas as pl
from jax.experimental.pallas import tpu as pltpu

K = 16          # prototypes per codebook
KHALF = K // 2  # 8 tree nodes per level (padded)
DEPTH = 4       # hash-tree depth (log2(K))


def _maddness_kernel(cols_ref,    # VMEM (TN, DEPTH*C)     f32  compact split columns
                     vals_ref,    # VMEM (DEPTH, KHALF, C) f32  tree thresholds
                     expand_ref,  # VMEM (C, 16C)          f32  0/1 code->lane expansion
                     lut_ref,     # VMEM (16C, T_OUT)      bf16 flattened LUT
                     bias_ref,    # VMEM (1, T_OUT)        f32
                     out_ref):    # VMEM (TN, T_OUT)       f32
    tn = cols_ref.shape[0]
    ncb = vals_ref.shape[2]           # ncodebooks
    width = lut_ref.shape[0]          # ncodebooks * 16

    cols = cols_ref[...]              # (TN, DEPTH*C), f32 (exact strict-> compares)

    # Hash-tree descent on compact (TN, C) tensors (16x narrower than before).
    enc = jnp.zeros((tn, ncb), jnp.int32)
    for lvl in range(DEPTH):
        col = cols[:, lvl * ncb:(lvl + 1) * ncb]          # (TN, C)
        vals_lvl = vals_ref[lvl]                          # (KHALF, C)
        thr = jnp.zeros((tn, ncb), jnp.float32)
        for node in range(1 << lvl):                      # reachable nodes: 1,2,4,8
            thr = jnp.where(enc == node, vals_lvl[node:node + 1, :], thr)
        enc = 2 * enc + (col > thr).astype(jnp.int32)

    # Expand codes to the 16C lane layout with one tiny exact MXU matmul
    # (enc in [0,16) -> exact under any matmul precision), then one compare
    # against the per-lane code iota gives the fused one-hot.
    enc_lanes = jnp.dot(enc.astype(jnp.float32), expand_ref[...],
                        preferred_element_type=jnp.float32)          # (TN, 16C)
    code_ids = (jax.lax.broadcasted_iota(jnp.int32, (tn, width), 1) % K
                ).astype(jnp.float32)
    onehot = (jnp.abs(enc_lanes - code_ids) < 0.5).astype(lut_ref.dtype)

    # Single fused MXU matmul over all codebooks (contraction depth = 16C),
    # bf16 inputs, f32 accumulation.
    acc = jnp.dot(onehot, lut_ref[...], preferred_element_type=jnp.float32)
    out_ref[...] = (acc + bias_ref[...]).astype(out_ref.dtype)


def _round_up(a, b):
    return ((a + b - 1) // b) * b


def _pick_tile(total, preferred):
    for t in preferred:
        if t <= total and total % t == 0:
            return t
    return total  # fall back to the full (untiled) dimension


def maddness_linear(x, split_idxs, split_vals, lookup_tables, bias=None, *,
                    row_tile=None, out_tile=None):
    n, d = x.shape
    ncodebooks, k, out_features = lookup_tables.shape
    assert k == K
    assert d % ncodebooks == 0
    subvec_len = d // ncodebooks
    width = ncodebooks * K

    # ---- wrapper-side gather: only DEPTH columns per codebook reach the kernel,
    #      in a compact (N, DEPTH*C) lane layout (lane = lvl*C + c). No 16x repeat.
    split_idxs = split_idxs.astype(jnp.int32)
    offs = jnp.arange(ncodebooks, dtype=jnp.int32) * subvec_len
    gather = (split_idxs + offs[:, None]).T.reshape(-1)        # (DEPTH*C,)
    cols = x[:, gather].astype(jnp.float32)                    # (N, DEPTH*C)

    # Tree thresholds, tiny: (DEPTH, KHALF, C).
    vals = jnp.transpose(split_vals.astype(jnp.float32), (1, 2, 0))

    # Constant 0/1 expansion matrix: lane c*16+k picks codebook c's code.
    expand = (jnp.arange(width, dtype=jnp.int32)[None, :] // K
              == jnp.arange(ncodebooks, dtype=jnp.int32)[:, None]
              ).astype(jnp.float32)                            # (C, 16C)

    # Flatten LUT so row (c*16 + k) matches the one-hot lane layout; bf16 halves
    # its DMA/VMEM and triples matmul throughput (one-hot is exact in bf16).
    lut = lookup_tables.reshape(width, out_features).astype(jnp.bfloat16)

    if bias is None:
        bias = jnp.zeros((out_features,), jnp.float32)
    bias2d = bias.reshape(1, out_features).astype(jnp.float32)

    # ---- tile selection ----
    if row_tile is None:
        tn = 512 if n >= 512 else _round_up(n, 8)
    else:
        tn = row_tile
    assert tn % 8 == 0, "row tile must be a multiple of 8"
    n_pad = _round_up(n, tn)
    if n_pad != n:
        cols = jnp.pad(cols, ((0, n_pad - n), (0, 0)))

    if out_tile is None:
        if width * out_features * 2 <= (8 << 20):
            t_out = out_features                 # keep the whole LUT resident
        else:
            t_out = _pick_tile(out_features, (512, 256, 128))
    else:
        t_out = out_tile
    assert out_features % t_out == 0, "out_features must be divisible by the out tile"
    assert t_out == out_features or t_out % 128 == 0

    # ---- VMEM budget (double-buffered blocks); raise scoped limit only if
    #      needed and cap at 48 MiB so the config keeps headroom on v7x.
    est_bytes = 2 * (tn * DEPTH * ncodebooks * 4       # cols block
                     + width * t_out * 2               # lut block (bf16)
                     + t_out * 4                       # bias block
                     + tn * t_out * 4                  # out block
                     + (DEPTH * KHALF * ncodebooks + ncodebooks * width) * 4)
    vmem_limit = None
    if est_bytes > (16 << 20):
        vmem_limit = min(48 << 20, int(est_bytes * 1.25))

    # Grid: out-tile axis OUTER, row axis INNER -> the (large) LUT/bias blocks
    # are invariant along the inner axis (fetched once per outer step); the
    # small compact cols are the re-streamed operand.
    grid_spec = pltpu.PrefetchScalarGridSpec(
        num_scalar_prefetch=0,
        grid=(out_features // t_out, n_pad // tn),
        in_specs=[
            pl.BlockSpec((tn, DEPTH * ncodebooks), lambda j, i: (i, 0)),
            pl.BlockSpec((DEPTH, KHALF, ncodebooks), lambda j, i: (0, 0, 0)),
            pl.BlockSpec((ncodebooks, width), lambda j, i: (0, 0)),
            pl.BlockSpec((width, t_out), lambda j, i: (0, j)),
            pl.BlockSpec((1, t_out), lambda j, i: (0, j)),
        ],
        out_specs=pl.BlockSpec((tn, t_out), lambda j, i: (i, j)),
    )

    out = pl.pallas_call(
        _maddness_kernel,
        out_shape=jax.ShapeDtypeStruct((n_pad, out_features), jnp.float32),
        grid_spec=grid_spec,
        compiler_params=pltpu.CompilerParams(
            dimension_semantics=("parallel", "parallel"),
            vmem_limit_bytes=vmem_limit),
    )(cols, vals, expand, lut, bias2d)

    return out[:n] if n_pad != n else out


def maddness_linear_reference(x, split_idxs, split_vals, lookup_tables, bias):
    """Pure-JAX reference mirroring the PyTorch forward (f32 LUT)."""
    n, d = x.shape
    ncodebooks, _, out_features = lookup_tables.shape
    subvec_len = d // ncodebooks
    out = jnp.zeros((n, out_features), jnp.float32)
    for c in range(ncodebooks):
        xs = x[:, c * subvec_len:(c + 1) * subvec_len]
        enc = jnp.zeros((n,), jnp.int32)
        for lvl in range(DEPTH):
            col = xs[:, split_idxs[c, lvl]]
            thr = split_vals[c, lvl, enc]
            enc = 2 * enc + (col > thr).astype(jnp.int32)
        onehot = jax.nn.one_hot(enc, K, dtype=jnp.float32)
        out = out + onehot @ lookup_tables[c]
    return out + bias[None, :]


if __name__ == "__main__":
    # Small shapes consistent with the module.
    N, IN_FEATURES, NCODEBOOKS, OUT_FEATURES = 512, 64, 8, 256
    SUBVEC_LEN = IN_FEATURES // NCODEBOOKS

    key = jax.random.PRNGKey(0)
    kx, ki, kv, kl, kb = jax.random.split(key, 5)

    x = jax.random.normal(kx, (N, IN_FEATURES), jnp.float32)
    split_idxs = jax.random.randint(ki, (NCODEBOOKS, DEPTH), 0, SUBVEC_LEN,
                                    dtype=jnp.int32)
    split_vals = jax.random.normal(kv, (NCODEBOOKS, DEPTH, KHALF), jnp.float32)
    lookup_tables = jax.random.normal(kl, (NCODEBOOKS, K, OUT_FEATURES),
                                      jnp.float32)
    bias = jax.random.normal(kb, (OUT_FEATURES,), jnp.float32)

    ref = maddness_linear_reference(x, split_idxs, split_vals, lookup_tables, bias)

    # Default tiling: LUT fully resident, grid (1, 1).
    out0 = jax.block_until_ready(
        maddness_linear(x, split_idxs, split_vals, lookup_tables, bias))
    # Explicit tiling: exercises both grid axes and the pipelined path, grid (2, 2).
    out1 = jax.block_until_ready(
        maddness_linear(x, split_idxs, split_vals, lookup_tables, bias,
                        row_tile=256, out_tile=128))

    for out in (out0, out1):
        assert out.shape == (N, OUT_FEATURES)
        # bf16 LUT rounds table entries (~0.4% rel); loosened tolerance per review.
        assert jnp.allclose(out, ref, atol=5e-2, rtol=5e-2), "mismatch vs reference"

    print("KERNEL_OK")
</pallas_src>

<mosaic_0001>
module attributes {stable_mosaic.version = 11 : i64} {
  func.func @_maddness_kernel(%arg0: i32, %arg1: i32, %arg2: memref<512x32xf32, #tpu.memory_space<vmem>>, %arg3: memref<4x8x8xf32, #tpu.memory_space<vmem>>, %arg4: memref<8x128xf32, #tpu.memory_space<vmem>>, %arg5: memref<128x256xbf16, #tpu.memory_space<vmem>>, %arg6: memref<1x256xf32, #tpu.memory_space<vmem>>, %arg7: memref<512x256xf32, #tpu.memory_space<vmem>>) attributes {dimension_semantics = [#tpu.dimension_semantics<parallel>, #tpu.dimension_semantics<parallel>], iteration_bounds = array<i64: 1, 1>, scalar_prefetch = 0 : i64, scratch_operands = 0 : i64, tpu.core_type = #tpu.core_type<tc>, window_params = [{transform_indices = @transform_0, window_bounds = array<i64: 512, 32>}, {pipeline_mode = #tpu.pipeline_mode<synchronous>, transform_indices = @transform_1, window_bounds = array<i64: 4, 8, 8>}, {pipeline_mode = #tpu.pipeline_mode<synchronous>, transform_indices = @transform_2, window_bounds = array<i64: 8, 128>}, {transform_indices = @transform_3, window_bounds = array<i64: 128, 256>}, {transform_indices = @transform_4, window_bounds = array<i64: 1, 256>}, {transform_indices = @transform_5, window_bounds = array<i64: 512, 256>}]} {
    %c0 = arith.constant 0 : index
    %c0_0 = arith.constant 0 : index
    %0 = vector.load %arg2[%c0, %c0_0] : memref<512x32xf32, #tpu.memory_space<vmem>>, vector<512x32xf32>
    %c0_i32 = arith.constant 0 : i32
    %1 = vector.broadcast %c0_i32 : i32 to vector<512x8xi32>
    %2 = vector.extract_strided_slice %0 {offsets = [0, 0], sizes = [512, 8], strides = [1, 1]} : vector<512x32xf32> to vector<512x8xf32>
    %c0_1 = arith.constant 0 : index
    %c0_2 = arith.constant 0 : index
    %c0_3 = arith.constant 0 : index
    %3 = vector.load %arg3[%c0_1, %c0_2, %c0_3] : memref<4x8x8xf32, #tpu.memory_space<vmem>>, vector<1x8x8xf32>
    %4 = vector.shape_cast %3 : vector<1x8x8xf32> to vector<8x8xf32>
    %cst = arith.constant 0.000000e+00 : f32
    %5 = vector.broadcast %cst : f32 to vector<512x8xf32>
    %c0_i32_4 = arith.constant 0 : i32
    %6 = vector.broadcast %c0_i32_4 : i32 to vector<512x8xi32>
    %7 = arith.cmpi eq, %1, %6 : vector<512x8xi32>
    %8 = vector.extract_strided_slice %4 {offsets = [0, 0], sizes = [1, 8], strides = [1, 1]} : vector<8x8xf32> to vector<1x8xf32>
    %9 = vector.shape_cast %8 : vector<1x8xf32> to vector<1x8xf32>
    %10 = vector.broadcast %9 : vector<1x8xf32> to vector<512x8xf32>
    %11 = arith.select %7, %10, %5 : vector<512x8xi1>, vector<512x8xf32>
    %c2_i32 = arith.constant 2 : i32
    %12 = vector.broadcast %c2_i32 : i32 to vector<512x8xi32>
    %13 = arith.muli %12, %1 : vector<512x8xi32>
    %14 = arith.cmpf ogt, %2, %11 : vector<512x8xf32>
    %15 = arith.extui %14 : vector<512x8xi1> to vector<512x8xi32>
    %16 = arith.addi %13, %15 : vector<512x8xi32>
    %17 = vector.extract_strided_slice %0 {offsets = [0, 8], sizes = [512, 8], strides = [1, 1]} : vector<512x32xf32> to vector<512x8xf32>
    %c1 = arith.constant 1 : index
    %c0_5 = arith.constant 0 : index
    %c0_6 = arith.constant 0 : index
    %18 = vector.load %arg3[%c1, %c0_5, %c0_6] : memref<4x8x8xf32, #tpu.memory_space<vmem>>, vector<1x8x8xf32>
    %19 = vector.shape_cast %18 : vector<1x8x8xf32> to vector<8x8xf32>
    %cst_7 = arith.constant 0.000000e+00 : f32
    %20 = vector.broadcast %cst_7 : f32 to vector<512x8xf32>
    %c0_i32_8 = arith.constant 0 : i32
    %21 = vector.broadcast %c0_i32_8 : i32 to vector<512x8xi32>
    %22 = arith.cmpi eq, %16, %21 : vector<512x8xi32>
    %23 = vector.extract_strided_slice %19 {offsets = [0, 0], sizes = [1, 8], strides = [1, 1]} : vector<8x8xf32> to vector<1x8xf32>
    %24 = vector.shape_cast %23 : vector<1x8xf32> to vector<1x8xf32>
    %25 = vector.broadcast %24 : vector<1x8xf32> to vector<512x8xf32>
    %26 = arith.select %22, %25, %20 : vector<512x8xi1>, vector<512x8xf32>
    %c1_i32 = arith.constant 1 : i32
    %27 = vector.broadcast %c1_i32 : i32 to vector<512x8xi32>
    %28 = arith.cmpi eq, %16, %27 : vector<512x8xi32>
    %29 = vector.extract_strided_slice %19 {offsets = [1, 0], sizes = [1, 8], strides = [1, 1]} : vector<8x8xf32> to vector<1x8xf32>
    %30 = vector.shape_cast %29 : vector<1x8xf32> to vector<1x8xf32>
    %31 = vector.broadcast %30 : vector<1x8xf32> to vector<512x8xf32>
    %32 = arith.select %28, %31, %26 : vector<512x8xi1>, vector<512x8xf32>
    %c2_i32_9 = arith.constant 2 : i32
    %33 = vector.broadcast %c2_i32_9 : i32 to vector<512x8xi32>
    %34 = arith.muli %33, %16 : vector<512x8xi32>
    %35 = arith.cmpf ogt, %17, %32 : vector<512x8xf32>
    %36 = arith.extui %35 : vector<512x8xi1> to vector<512x8xi32>
    %37 = arith.addi %34, %36 : vector<512x8xi32>
    %38 = vector.extract_strided_slice %0 {offsets = [0, 16], sizes = [512, 8], strides = [1, 1]} : vector<512x32xf32> to vector<512x8xf32>
    %c2 = arith.constant 2 : index
    %c0_10 = arith.constant 0 : index
    %c0_11 = arith.constant 0 : index
    %39 = vector.load %arg3[%c2, %c0_10, %c0_11] : memref<4x8x8xf32, #tpu.memory_space<vmem>>, vector<1x8x8xf32>
    %40 = vector.shape_cast %39 : vector<1x8x8xf32> to vector<8x8xf32>
    %cst_12 = arith.constant 0.000000e+00 : f32
    %41 = vector.broadcast %cst_12 : f32 to vector<512x8xf32>
    %c0_i32_13 = arith.constant 0 : i32
    %42 = vector.broadcast %c0_i32_13 : i32 to vector<512x8xi32>
    %43 = arith.cmpi eq, %37, %42 : vector<512x8xi32>
    %44 = vector.extract_strided_slice %40 {offsets = [0, 0], sizes = [1, 8], strides = [1, 1]} : vector<8x8xf32> to vector<1x8xf32>
    %45 = vector.shape_cast %44 : vector<1x8xf32> to vector<1x8xf32>
    %46 = vector.broadcast %45 : vector<1x8xf32> to vector<512x8xf32>
    %47 = arith.select %43, %46, %41 : vector<512x8xi1>, vector<512x8xf32>
    %c1_i32_14 = arith.constant 1 : i32
    %48 = vector.broadcast %c1_i32_14 : i32 to vector<512x8xi32>
    %49 = arith.cmpi eq, %37, %48 : vector<512x8xi32>
    %50 = vector.extract_strided_slice %40 {offsets = [1, 0], sizes = [1, 8], strides = [1, 1]} : vector<8x8xf32> to vector<1x8xf32>
    %51 = vector.shape_cast %50 : vector<1x8xf32> to vector<1x8xf32>
    %52 = vector.broadcast %51 : vector<1x8xf32> to vector<512x8xf32>
    %53 = arith.select %49, %52, %47 : vector<512x8xi1>, vector<512x8xf32>
    %c2_i32_15 = arith.constant 2 : i32
    %54 = vector.broadcast %c2_i32_15 : i32 to vector<512x8xi32>
    %55 = arith.cmpi eq, %37, %54 : vector<512x8xi32>
    %56 = vector.extract_strided_slice %40 {offsets = [2, 0], sizes = [1, 8], strides = [1, 1]} : vector<8x8xf32> to vector<1x8xf32>
    %57 = vector.shape_cast %56 : vector<1x8xf32> to vector<1x8xf32>
    %58 = vector.broadcast %57 : vector<1x8xf32> to vector<512x8xf32>
    %59 = arith.select %55, %58, %53 : vector<512x8xi1>, vector<512x8xf32>
    %c3_i32 = arith.constant 3 : i32
    %60 = vector.broadcast %c3_i32 : i32 to vector<512x8xi32>
    %61 = arith.cmpi eq, %37, %60 : vector<512x8xi32>
    %62 = vector.extract_strided_slice %40 {offsets = [3, 0], sizes = [1, 8], strides = [1, 1]} : vector<8x8xf32> to vector<1x8xf32>
    %63 = vector.shape_cast %62 : vector<1x8xf32> to vector<1x8xf32>
    %64 = vector.broadcast %63 : vector<1x8xf32> to vector<512x8xf32>
    %65 = arith.select %61, %64, %59 : vector<512x8xi1>, vector<512x8xf32>
    %c2_i32_16 = arith.constant 2 : i32
    %66 = vector.broadcast %c2_i32_16 : i32 to vector<512x8xi32>
    %67 = arith.muli %66, %37 : vector<512x8xi32>
    %68 = arith.cmpf ogt, %38, %65 : vector<512x8xf32>
    %69 = arith.extui %68 : vector<512x8xi1> to vector<512x8xi32>
    %70 = arith.addi %67, %69 : vector<512x8xi32>
    %71 = vector.extract_strided_slice %0 {offsets = [0, 24], sizes = [512, 8], strides = [1, 1]} : vector<512x32xf32> to vector<512x8xf32>
    %c3 = arith.constant 3 : index
    %c0_17 = arith.constant 0 : index
    %c0_18 = arith.constant 0 : index
    %72 = vector.load %arg3[%c3, %c0_17, %c0_18] : memref<4x8x8xf32, #tpu.memory_space<vmem>>, vector<1x8x8xf32>
    %73 = vector.shape_cast %72 : vector<1x8x8xf32> to vector<8x8xf32>
    %cst_19 = arith.constant 0.000000e+00 : f32
    %74 = vector.broadcast %cst_19 : f32 to vector<512x8xf32>
    %c0_i32_20 = arith.constant 0 : i32
    %75 = vector.broadcast %c0_i32_20 : i32 to vector<512x8xi32>
    %76 = arith.cmpi eq, %70, %75 : vector<512x8xi32>
    %77 = vector.extract_strided_slice %73 {offsets = [0, 0], sizes = [1, 8], strides = [1, 1]} : vector<8x8xf32> to vector<1x8xf32>
    %78 = vector.shape_cast %77 : vector<1x8xf32> to vector<1x8xf32>
    %79 = vector.broadcast %78 : vector<1x8xf32> to vector<512x8xf32>
    %80 = arith.select %76, %79, %74 : vector<512x8xi1>, vector<512x8xf32>
    %c1_i32_21 = arith.constant 1 : i32
    %81 = vector.broadcast %c1_i32_21 : i32 to vector<512x8xi32>
    %82 = arith.cmpi eq, %70, %81 : vector<512x8xi32>
    %83 = vector.extract_strided_slice %73 {offsets = [1, 0], sizes = [1, 8], strides = [1, 1]} : vector<8x8xf32> to vector<1x8xf32>
    %84 = vector.shape_cast %83 : vector<1x8xf32> to vector<1x8xf32>
    %85 = vector.broadcast %84 : vector<1x8xf32> to vector<512x8xf32>
    %86 = arith.select %82, %85, %80 : vector<512x8xi1>, vector<512x8xf32>
    %c2_i32_22 = arith.constant 2 : i32
    %87 = vector.broadcast %c2_i32_22 : i32 to vector<512x8xi32>
    %88 = arith.cmpi eq, %70, %87 : vector<512x8xi32>
    %89 = vector.extract_strided_slice %73 {offsets = [2, 0], sizes = [1, 8], strides = [1, 1]} : vector<8x8xf32> to vector<1x8xf32>
    %90 = vector.shape_cast %89 : vector<1x8xf32> to vector<1x8xf32>
    %91 = vector.broadcast %90 : vector<1x8xf32> to vector<512x8xf32>
    %92 = arith.select %88, %91, %86 : vector<512x8xi1>, vector<512x8xf32>
    %c3_i32_23 = arith.constant 3 : i32
    %93 = vector.broadcast %c3_i32_23 : i32 to vector<512x8xi32>
    %94 = arith.cmpi eq, %70, %93 : vector<512x8xi32>
    %95 = vector.extract_strided_slice %73 {offsets = [3, 0], sizes = [1, 8], strides = [1, 1]} : vector<8x8xf32> to vector<1x8xf32>
    %96 = vector.shape_cast %95 : vector<1x8xf32> to vector<1x8xf32>
    %97 = vector.broadcast %96 : vector<1x8xf32> to vector<512x8xf32>
    %98 = arith.select %94, %97, %92 : vector<512x8xi1>, vector<512x8xf32>
    %c4_i32 = arith.constant 4 : i32
    %99 = vector.broadcast %c4_i32 : i32 to vector<512x8xi32>
    %100 = arith.cmpi eq, %70, %99 : vector<512x8xi32>
    %101 = vector.extract_strided_slice %73 {offsets = [4, 0], sizes = [1, 8], strides = [1, 1]} : vector<8x8xf32> to vector<1x8xf32>
    %102 = vector.shape_cast %101 : vector<1x8xf32> to vector<1x8xf32>
    %103 = vector.broadcast %102 : vector<1x8xf32> to vector<512x8xf32>
    %104 = arith.select %100, %103, %98 : vector<512x8xi1>, vector<512x8xf32>
    %c5_i32 = arith.constant 5 : i32
    %105 = vector.broadcast %c5_i32 : i32 to vector<512x8xi32>
    %106 = arith.cmpi eq, %70, %105 : vector<512x8xi32>
    %107 = vector.extract_strided_slice %73 {offsets = [5, 0], sizes = [1, 8], strides = [1, 1]} : vector<8x8xf32> to vector<1x8xf32>
    %108 = vector.shape_cast %107 : vector<1x8xf32> to vector<1x8xf32>
    %109 = vector.broadcast %108 : vector<1x8xf32> to vector<512x8xf32>
    %110 = arith.select %106, %109, %104 : vector<512x8xi1>, vector<512x8xf32>
    %c6_i32 = arith.constant 6 : i32
    %111 = vector.broadcast %c6_i32 : i32 to vector<512x8xi32>
    %112 = arith.cmpi eq, %70, %111 : vector<512x8xi32>
    %113 = vector.extract_strided_slice %73 {offsets = [6, 0], sizes = [1, 8], strides = [1, 1]} : vector<8x8xf32> to vector<1x8xf32>
    %114 = vector.shape_cast %113 : vector<1x8xf32> to vector<1x8xf32>
    %115 = vector.broadcast %114 : vector<1x8xf32> to vector<512x8xf32>
    %116 = arith.select %112, %115, %110 : vector<512x8xi1>, vector<512x8xf32>
    %c7_i32 = arith.constant 7 : i32
    %117 = vector.broadcast %c7_i32 : i32 to vector<512x8xi32>
    %118 = arith.cmpi eq, %70, %117 : vector<512x8xi32>
    %119 = vector.extract_strided_slice %73 {offsets = [7, 0], sizes = [1, 8], strides = [1, 1]} : vector<8x8xf32> to vector<1x8xf32>
    %120 = vector.shape_cast %119 : vector<1x8xf32> to vector<1x8xf32>
    %121 = vector.broadcast %120 : vector<1x8xf32> to vector<512x8xf32>
    %122 = arith.select %118, %121, %116 : vector<512x8xi1>, vector<512x8xf32>
    %c2_i32_24 = arith.constant 2 : i32
    %123 = vector.broadcast %c2_i32_24 : i32 to vector<512x8xi32>
    %124 = arith.muli %123, %70 : vector<512x8xi32>
    %125 = arith.cmpf ogt, %71, %122 : vector<512x8xf32>
    %126 = arith.extui %125 : vector<512x8xi1> to vector<512x8xi32>
    %127 = arith.addi %124, %126 : vector<512x8xi32>
    %128 = arith.sitofp %127 : vector<512x8xi32> to vector<512x8xf32>
    %c0_25 = arith.constant 0 : index
    %c0_26 = arith.constant 0 : index
    %129 = vector.load %arg4[%c0_25, %c0_26] : memref<8x128xf32, #tpu.memory_space<vmem>>, vector<8x128xf32>
    %cst_27 = arith.constant dense<0.000000e+00> : vector<512x128xf32>
    %130 = tpu.matmul %128, %129, %cst_27 {dimension_numbers = #tpu.dot_dimension_numbers<[1], [0], [0], [1], [0, 0, 1, 1], [], []>} : vector<512x8xf32>, vector<8x128xf32>, vector<512x128xf32> -> vector<512x128xf32>
    %131 = tpu.iota {dimensions = array<i32: 1>} : vector<512x128xi32>
    %c16_i32 = arith.constant 16 : i32
    %c0_i32_28 = arith.constant 0 : i32
    %132 = arith.cmpi eq, %c16_i32, %c0_i32_28 : i32
    %c1_i32_29 = arith.constant 1 : i32
    %133 = arith.select %132, %c1_i32_29, %c16_i32 : i32
    %134 = vector.broadcast %133 : i32 to vector<512x128xi32>
    %135 = arith.remsi %131, %134 : vector<512x128xi32>
    %c0_i32_30 = arith.constant 0 : i32
    %136 = vector.broadcast %c0_i32_30 : i32 to vector<512x128xi32>
    %137 = arith.cmpi ne, %135, %136 : vector<512x128xi32>
    %c0_i32_31 = arith.constant 0 : i32
    %138 = vector.broadcast %c0_i32_31 : i32 to vector<512x128xi32>
    %139 = arith.cmpi slt, %135, %138 : vector<512x128xi32>
    %c0_i32_32 = arith.constant 0 : i32
    %140 = arith.cmpi slt, %133, %c0_i32_32 : i32
    %141 = vector.broadcast %140 : i1 to vector<512x128xi1>
    %142 = vector.broadcast %141 : vector<512x128xi1> to vector<512x128xi1>
    %143 = arith.xori %139, %142 : vector<512x128xi1>
    %144 = arith.andi %143, %137 : vector<512x128xi1>
    %145 = vector.broadcast %133 : i32 to vector<512x128xi32>
    %146 = arith.addi %135, %145 : vector<512x128xi32>
    %147 = arith.select %144, %146, %135 : vector<512x128xi1>, vector<512x128xi32>
    %148 = arith.sitofp %147 : vector<512x128xi32> to vector<512x128xf32>
    %149 = arith.subf %130, %148 : vector<512x128xf32>
    %150 = math.absf %149 : vector<512x128xf32>
    %cst_33 = arith.constant 5.000000e-01 : f32
    %151 = vector.broadcast %cst_33 : f32 to vector<512x128xf32>
    %152 = arith.cmpf olt, %150, %151 : vector<512x128xf32>
    %153 = arith.extui %152 : vector<512x128xi1> to vector<512x128xi32>
    %154 = arith.sitofp %153 : vector<512x128xi32> to vector<512x128xf32>
    %155 = arith.truncf %154 : vector<512x128xf32> to vector<512x128xbf16>
    %c0_34 = arith.constant 0 : index
    %c0_35 = arith.constant 0 : index
    %156 = vector.load %arg5[%c0_34, %c0_35] : memref<128x256xbf16, #tpu.memory_space<vmem>>, vector<128x256xbf16>
    %cst_36 = arith.constant dense<0.000000e+00> : vector<512x256xf32>
    %157 = tpu.matmul %155, %156, %cst_36 {dimension_numbers = #tpu.dot_dimension_numbers<[1], [0], [0], [1], [0, 0, 1, 1], [], []>} : vector<512x128xbf16>, vector<128x256xbf16>, vector<512x256xf32> -> vector<512x256xf32>
    %c0_37 = arith.constant 0 : index
    %c0_38 = arith.constant 0 : index
    %158 = vector.load %arg6[%c0_37, %c0_38] : memref<1x256xf32, #tpu.memory_space<vmem>>, vector<1x256xf32>
    %159 = vector.broadcast %158 : vector<1x256xf32> to vector<512x256xf32>
    %160 = arith.addf %157, %159 : vector<512x256xf32>
    %c0_39 = arith.constant 0 : index
    %c0_40 = arith.constant 0 : index
    %161 = vector.load %arg7[%c0_39, %c0_40] : memref<512x256xf32, #tpu.memory_space<vmem>>, vector<512x256xf32>
    tpu.vector_store %arg7[%c0_39, %c0_40], %160 {strides = array<i32>} : memref<512x256xf32, #tpu.memory_space<vmem>>, vector<512x256xf32>,
    return
  }
  func.func @transform_0(%arg0: i32, %arg1: i32) -> (i32, i32) {
    %c0_i32 = arith.constant 0 : i32
    %c0_i32_0 = arith.constant 0 : i32
    return %arg1, %c0_i32 : i32, i32
  }
  func.func @transform_1(%arg0: i32, %arg1: i32) -> (i32, i32, i32) {
    %c0_i32 = arith.constant 0 : i32
    %c0_i32_0 = arith.constant 0 : i32
    %c0_i32_1 = arith.constant 0 : i32
    %c0_i32_2 = arith.constant 0 : i32
    return %c0_i32, %c0_i32_0, %c0_i32_1 : i32, i32, i32
  }
  func.func @transform_2(%arg0: i32, %arg1: i32) -> (i32, i32) {
    %c0_i32 = arith.constant 0 : i32
    %c0_i32_0 = arith.constant 0 : i32
    %c0_i32_1 = arith.constant 0 : i32
    return %c0_i32, %c0_i32_0 : i32, i32
  }
  func.func @transform_3(%arg0: i32, %arg1: i32) -> (i32, i32) {
    %c0_i32 = arith.constant 0 : i32
    %c0_i32_0 = arith.constant 0 : i32
    return %c0_i32, %arg0 : i32, i32
  }
  func.func @transform_4(%arg0: i32, %arg1: i32) -> (i32, i32) {
    %c0_i32 = arith.constant 0 : i32
    %c0_i32_0 = arith.constant 0 : i32
    return %c0_i32, %arg0 : i32, i32
  }
  func.func @transform_5(%arg0: i32, %arg1: i32) -> (i32, i32) {
    %c0_i32 = arith.constant 0 : i32
    return %arg1, %arg0 : i32, i32
  }
}

</mosaic_0001>

<llo_original>
// kernel: tpu_custom_call.1
$region0: #{tpu_custom_call.1}
  #allocation0 [shape = 'u32[]', space=smem, size = 0x4, offset = 0x4, fixed_abs, tag = 'smem constant byte address 0x4 - core index']
  #allocation1 [shape = 'u32[144,128]{1,0:T(1,128)}', space=vmem, size = 0x12000, scoped, tag = 'internal scratch']
  %s0 = inlined_call_operand.vmem [shape: f32[512,32], index: 0, kind: input, shape index: {}]
  %s1 = inlined_call_operand.vmem [shape: f32[4,8,8], index: 1, kind: input, shape index: {}]
  %s2 = inlined_call_operand.vmem [shape: f32[8,128], index: 2, kind: input, shape index: {}]
  %s3 = inlined_call_operand.vmem [shape: bf16[128,256], index: 3, kind: input, shape index: {}]
  %s4 = inlined_call_operand.vmem [shape: f32[1,256], index: 4, kind: input, shape index: {}]
  %s5 = inlined_call_operand.hbm [shape: f32[512,256], index: 5, kind: output, shape index: {}]
  %s6 = sld [smem:[#allocation0]]
  $region30: #{tpu_custom_call.1} parent=0
    _
  %s8 = ssub.s32 1, %s6
  %s9 = scalar_select 0, %s8, %s6
  $region1: #{tpu_custom_call.1} parent=0
    #allocation2 [shape = 'u8[524288]{0}', space=vmem, size = 0x80000, scoped, tag = 'output window, operand 0, single buffered']
    #allocation3 [shape = 's32[1]{0}', space=sflag, size = 0x4, scoped, tag = 'scoped memory for tpu_custom_call.1']
    %10 = vsyncpa [#allocation3], 0
    // Predicated region
    $region2: #{tpu_custom_call.1} parent=1 // pred_check
      _
    $region3: #{tpu_custom_call.1} parent=1 // pred_check_branch
      %12 = sbr.rel (0) target = $region5
    $region4: #{tpu_custom_call.1} parent=1 // pred_region
      _
    $region5: #{tpu_custom_call.1} parent=1 // pred_fallthru
      _
    // Predicated region
    $region6: #{tpu_custom_call.1} parent=1 // pred_check
      _
    $region7: #{tpu_custom_call.1} parent=1 // pred_check_branch
      %14 = sbr.rel (0) target = $region9
    $region8: #{tpu_custom_call.1} parent=1 // pred_region
      _
    $region9: #{tpu_custom_call.1} parent=1 // pred_fallthru
      _
    // Predicated region
    $region10: #{tpu_custom_call.1} parent=1 // pred_check
      _
    $region11: #{tpu_custom_call.1} parent=1 // pred_check_branch
      %16 = sbr.rel (0) target = $region13
    $region12: #{tpu_custom_call.1} parent=1 // pred_region
      _
    $region13: #{tpu_custom_call.1} parent=1 // pred_fallthru
      _
    // Predicated region
    $region14: #{tpu_custom_call.1} parent=1 // pred_check
      _
    $region15: #{tpu_custom_call.1} parent=1 // pred_check_branch
      %18 = sbr.rel (0) target = $region17
    $region16: #{tpu_custom_call.1} parent=1 // pred_region
      _
    $region17: #{tpu_custom_call.1} parent=1 // pred_fallthru
      _
    // Predicated region
    $region18: #{tpu_custom_call.1} parent=1 // pred_check
      _
    $region19: #{tpu_custom_call.1} parent=1 // pred_check_branch
      %20 = sbr.rel (0) target = $region21
    $region20: #{tpu_custom_call.1} parent=1 // pred_region
      _
    $region21: #{tpu_custom_call.1} parent=1 // pred_fallthru
      _
    %v22 = vld [vmem:[%s0] sm:$0xff]
    %v23 = vld [vmem:[%s0 + $0x8] sm:$0xff]
    %v24 = vld [vmem:[%s0 + $0x10] sm:$0xff]
    %v25 = vld [vmem:[%s0 + $0x18] sm:$0xff]
    %v26 = vld [vmem:[%s0 + $0x20] sm:$0xff]
    %v27 = vld [vmem:[%s0 + $0x28] sm:$0xff]
    %v28 = vld [vmem:[%s0 + $0x30] sm:$0xff]
    %v29 = vld [vmem:[%s0 + $0x38] sm:$0xff]
    %v30 = vld [vmem:[%s0 + $0x40] sm:$0xff]
    %v31 = vld [vmem:[%s0 + $0x48] sm:$0xff]
    %v32 = vld [vmem:[%s0 + $0x50] sm:$0xff]
    %v33 = vld [vmem:[%s0 + $0x58] sm:$0xff]
    %v34 = vld [vmem:[%s0 + $0x60] sm:$0xff]
    %v35 = vld [vmem:[%s0 + $0x68] sm:$0xff]
    %v36 = vld [vmem:[%s0 + $0x70] sm:$0xff]
    %v37 = vld [vmem:[%s0 + $0x78] sm:$0xff]
    %v38 = vld [vmem:[%s0 + $0x80] sm:$0xff]
    %v39 = vld [vmem:[%s0 + $0x88] sm:$0xff]
    %v40 = vld [vmem:[%s0 + $0x90] sm:$0xff]
    %v41 = vld [vmem:[%s0 + $0x98] sm:$0xff]
    %v42 = vld [vmem:[%s0 + $0xa0] sm:$0xff]
    %v43 = vld [vmem:[%s0 + $0xa8] sm:$0xff]
    %v44 = vld [vmem:[%s0 + $0xb0] sm:$0xff]
    %v45 = vld [vmem:[%s0 + $0xb8] sm:$0xff]
    %v46 = vld [vmem:[%s0 + $0xc0] sm:$0xff]
    %v47 = vld [vmem:[%s0 + $0xc8] sm:$0xff]
    %v48 = vld [vmem:[%s0 + $0xd0] sm:$0xff]
    %v49 = vld [vmem:[%s0 + $0xd8] sm:$0xff]
    %v50 = vld [vmem:[%s0 + $0xe0] sm:$0xff]
    %v51 = vld [vmem:[%s0 + $0xe8] sm:$0xff]
    %v52 = vld [vmem:[%s0 + $0xf0] sm:$0xff]
    %v53 = vld [vmem:[%s0 + $0xf8] sm:$0xff]
    %v54 = vld [vmem:[%s0 + $0x100] sm:$0xff]
    %v55 = vld [vmem:[%s0 + $0x108] sm:$0xff]
    %v56 = vld [vmem:[%s0 + $0x110] sm:$0xff]
    %v57 = vld [vmem:[%s0 + $0x118] sm:$0xff]
    %v58 = vld [vmem:[%s0 + $0x120] sm:$0xff]
    %v59 = vld [vmem:[%s0 + $0x128] sm:$0xff]
    %v60 = vld [vmem:[%s0 + $0x130] sm:$0xff]
    %v61 = vld [vmem:[%s0 + $0x138] sm:$0xff]
    %v62 = vld [vmem:[%s0 + $0x140] sm:$0xff]
    %v63 = vld [vmem:[%s0 + $0x148] sm:$0xff]
    %v64 = vld [vmem:[%s0 + $0x150] sm:$0xff]
    %v65 = vld [vmem:[%s0 + $0x158] sm:$0xff]
    %v66 = vld [vmem:[%s0 + $0x160] sm:$0xff]
    %v67 = vld [vmem:[%s0 + $0x168] sm:$0xff]
    %v68 = vld [vmem:[%s0 + $0x170] sm:$0xff]
    %v69 = vld [vmem:[%s0 + $0x178] sm:$0xff]
    %v70 = vld [vmem:[%s0 + $0x180] sm:$0xff]
    %v71 = vld [vmem:[%s0 + $0x188] sm:$0xff]
    %v72 = vld [vmem:[%s0 + $0x190] sm:$0xff]
    %v73 = vld [vmem:[%s0 + $0x198] sm:$0xff]
    %v74 = vld [vmem:[%s0 + $0x1a0] sm:$0xff]
    %v75 = vld [vmem:[%s0 + $0x1a8] sm:$0xff]
    %v76 = vld [vmem:[%s0 + $0x1b0] sm:$0xff]
    %v77 = vld [vmem:[%s0 + $0x1b8] sm:$0xff]
    %v78 = vld [vmem:[%s0 + $0x1c0] sm:$0xff]
    %v79 = vld [vmem:[%s0 + $0x1c8] sm:$0xff]
    %v80 = vld [vmem:[%s0 + $0x1d0] sm:$0xff]
    %v81 = vld [vmem:[%s0 + $0x1d8] sm:$0xff]
    %v82 = vld [vmem:[%s0 + $0x1e0] sm:$0xff]
    %v83 = vld [vmem:[%s0 + $0x1e8] sm:$0xff]
    %v84 = vld [vmem:[%s0 + $0x1f0] sm:$0xff]
    %v85 = vld [vmem:[%s0 + $0x1f8] sm:$0xff]
    %v86 = vld [vmem:[%s1] sm:$0xff]
    %v87 = vlaneseq
    %v88 = vshrl.u32 %v87, 7
    %v89 = vsub.s32 0, %v88
    %v90 = vrot.slane %v86, %v89
    %vm91 = vcmp.gt.f32.partialorder %v22, %v90
    %vm92 = vcmp.gt.f32.partialorder %v23, %v90
    %vm93 = vcmp.gt.f32.partialorder %v24, %v90
    %vm94 = vcmp.gt.f32.partialorder %v25, %v90
    %vm95 = vcmp.gt.f32.partialorder %v26, %v90
    %vm96 = vcmp.gt.f32.partialorder %v27, %v90
    %vm97 = vcmp.gt.f32.partialorder %v28, %v90
    %vm98 = vcmp.gt.f32.partialorder %v29, %v90
    %vm99 = vcmp.gt.f32.partialorder %v30, %v90
    %vm100 = vcmp.gt.f32.partialorder %v31, %v90
    %vm101 = vcmp.gt.f32.partialorder %v32, %v90
    %vm102 = vcmp.gt.f32.partialorder %v33, %v90
    %vm103 = vcmp.gt.f32.partialorder %v34, %v90
    %vm104 = vcmp.gt.f32.partialorder %v35, %v90
    %vm105 = vcmp.gt.f32.partialorder %v36, %v90
    %vm106 = vcmp.gt.f32.partialorder %v37, %v90
    %vm107 = vcmp.gt.f32.partialorder %v38, %v90
    %vm108 = vcmp.gt.f32.partialorder %v39, %v90
    %vm109 = vcmp.gt.f32.partialorder %v40, %v90
    %vm110 = vcmp.gt.f32.partialorder %v41, %v90
    %vm111 = vcmp.gt.f32.partialorder %v42, %v90
    %vm112 = vcmp.gt.f32.partialorder %v43, %v90
    %vm113 = vcmp.gt.f32.partialorder %v44, %v90
    %vm114 = vcmp.gt.f32.partialorder %v45, %v90
    %vm115 = vcmp.gt.f32.partialorder %v46, %v90
    %vm116 = vcmp.gt.f32.partialorder %v47, %v90
    %vm117 = vcmp.gt.f32.partialorder %v48, %v90
    %vm118 = vcmp.gt.f32.partialorder %v49, %v90
    %vm119 = vcmp.gt.f32.partialorder %v50, %v90
    %vm120 = vcmp.gt.f32.partialorder %v51, %v90
    %vm121 = vcmp.gt.f32.partialorder %v52, %v90
    %vm122 = vcmp.gt.f32.partialorder %v53, %v90
    %vm123 = vcmp.gt.f32.partialorder %v54, %v90
    %vm124 = vcmp.gt.f32.partialorder %v55, %v90
    %vm125 = vcmp.gt.f32.partialorder %v56, %v90
    %vm126 = vcmp.gt.f32.partialorder %v57, %v90
    %vm127 = vcmp.gt.f32.partialorder %v58, %v90
    %vm128 = vcmp.gt.f32.partialorder %v59, %v90
    %vm129 = vcmp.gt.f32.partialorder %v60, %v90
    %vm130 = vcmp.gt.f32.partialorder %v61, %v90
    %vm131 = vcmp.gt.f32.partialorder %v62, %v90
    %vm132 = vcmp.gt.f32.partialorder %v63, %v90
    %vm133 = vcmp.gt.f32.partialorder %v64, %v90
    %vm134 = vcmp.gt.f32.partialorder %v65, %v90
    %vm135 = vcmp.gt.f32.partialorder %v66, %v90
    %vm136 = vcmp.gt.f32.partialorder %v67, %v90
    %vm137 = vcmp.gt.f32.partialorder %v68, %v90
    %vm138 = vcmp.gt.f32.partialorder %v69, %v90
    %vm139 = vcmp.gt.f32.partialorder %v70, %v90
    %vm140 = vcmp.gt.f32.partialorder %v71, %v90
    %vm141 = vcmp.gt.f32.partialorder %v72, %v90
    %vm142 = vcmp.gt.f32.partialorder %v73, %v90
    %vm143 = vcmp.gt.f32.partialorder %v74, %v90
    %vm144 = vcmp.gt.f32.partialorder %v75, %v90
    %vm145 = vcmp.gt.f32.partialorder %v76, %v90
    %vm146 = vcmp.gt.f32.partialorder %v77, %v90
    %vm147 = vcmp.gt.f32.partialorder %v78, %v90
    %vm148 = vcmp.gt.f32.partialorder %v79, %v90
    %vm149 = vcmp.gt.f32.partialorder %v80, %v90
    %vm150 = vcmp.gt.f32.partialorder %v81, %v90
    %vm151 = vcmp.gt.f32.partialorder %v82, %v90
    %vm152 = vcmp.gt.f32.partialorder %v83, %v90
    %vm153 = vcmp.gt.f32.partialorder %v84, %v90
    %vm154 = vcmp.gt.f32.partialorder %v85, %v90
    %v155 = vsel %vm91, 1, 0
    %v156 = vsel %vm92, 1, 0
    %v157 = vsel %vm93, 1, 0
    %v158 = vsel %vm94, 1, 0
    %v159 = vsel %vm95, 1, 0
    %v160 = vsel %vm96, 1, 0
    %v161 = vsel %vm97, 1, 0
    %v162 = vsel %vm98, 1, 0
    %v163 = vsel %vm99, 1, 0
    %v164 = vsel %vm100, 1, 0
    %v165 = vsel %vm101, 1, 0
    %v166 = vsel %vm102, 1, 0
    %v167 = vsel %vm103, 1, 0
    %v168 = vsel %vm104, 1, 0
    %v169 = vsel %vm105, 1, 0
    %v170 = vsel %vm106, 1, 0
    %v171 = vsel %vm107, 1, 0
    %v172 = vsel %vm108, 1, 0
    %v173 = vsel %vm109, 1, 0
    %v174 = vsel %vm110, 1, 0
    %v175 = vsel %vm111, 1, 0
    %v176 = vsel %vm112, 1, 0
    %v177 = vsel %vm113, 1, 0
    %v178 = vsel %vm114, 1, 0
    %v179 = vsel %vm115, 1, 0
    %v180 = vsel %vm116, 1, 0
    %v181 = vsel %vm117, 1, 0
    %v182 = vsel %vm118, 1, 0
    %v183 = vsel %vm119, 1, 0
    %v184 = vsel %vm120, 1, 0
    %v185 = vsel %vm121, 1, 0
    %v186 = vsel %vm122, 1, 0
    %v187 = vsel %vm123, 1, 0
    %v188 = vsel %vm124, 1, 0
    %v189 = vsel %vm125, 1, 0
    %v190 = vsel %vm126, 1, 0
    %v191 = vsel %vm127, 1, 0
    %v192 = vsel %vm128, 1, 0
    %v193 = vsel %vm129, 1, 0
    %v194 = vsel %vm130, 1, 0
    %v195 = vsel %vm131, 1, 0
    %v196 = vsel %vm132, 1, 0
    %v197 = vsel %vm133, 1, 0
    %v198 = vsel %vm134, 1, 0
    %v199 = vsel %vm135, 1, 0
    %v200 = vsel %vm136, 1, 0
    %v201 = vsel %vm137, 1, 0
    %v202 = vsel %vm138, 1, 0
    %v203 = vsel %vm139, 1, 0
    %v204 = vsel %vm140, 1, 0
    %v205 = vsel %vm141, 1, 0
    %v206 = vsel %vm142, 1, 0
    %v207 = vsel %vm143, 1, 0
    %v208 = vsel %vm144, 1, 0
    %v209 = vsel %vm145, 1, 0
    %v210 = vsel %vm146, 1, 0
    %v211 = vsel %vm147, 1, 0
    %v212 = vsel %vm148, 1, 0
    %v213 = vsel %vm149, 1, 0
    %v214 = vsel %vm150, 1, 0
    %v215 = vsel %vm151, 1, 0
    %v216 = vsel %vm152, 1, 0
    %v217 = vsel %vm153, 1, 0
    %v218 = vsel %vm154, 1, 0
    %s219 = scalar_lea.vmem %s1, 8
    %v220 = vld [vmem:[%s219] sm:$0xff]
    %vm221 = vcmp.eq.s32.totalorder %v155, 0
    %vm222 = vcmp.eq.s32.totalorder %v156, 0
    %vm223 = vcmp.eq.s32.totalorder %v157, 0
    %vm224 = vcmp.eq.s32.totalorder %v158, 0
    %vm225 = vcmp.eq.s32.totalorder %v159, 0
    %vm226 = vcmp.eq.s32.totalorder %v160, 0
    %vm227 = vcmp.eq.s32.totalorder %v161, 0
    %vm228 = vcmp.eq.s32.totalorder %v162, 0
    %vm229 = vcmp.eq.s32.totalorder %v163, 0
    %vm230 = vcmp.eq.s32.totalorder %v164, 0
    %vm231 = vcmp.eq.s32.totalorder %v165, 0
    %vm232 = vcmp.eq.s32.totalorder %v166, 0
    %vm233 = vcmp.eq.s32.totalorder %v167, 0
    %vm234 = vcmp.eq.s32.totalorder %v168, 0
    %vm235 = vcmp.eq.s32.totalorder %v169, 0
    %vm236 = vcmp.eq.s32.totalorder %v170, 0
    %vm237 = vcmp.eq.s32.totalorder %v171, 0
    %vm238 = vcmp.eq.s32.totalorder %v172, 0
    %vm239 = vcmp.eq.s32.totalorder %v173, 0
    %vm240 = vcmp.eq.s32.totalorder %v174, 0
    %vm241 = vcmp.eq.s32.totalorder %v175, 0
    %vm242 = vcmp.eq.s32.totalorder %v176, 0
    %vm243 = vcmp.eq.s32.totalorder %v177, 0
    %vm244 = vcmp.eq.s32.totalorder %v178, 0
    %vm245 = vcmp.eq.s32.totalorder %v179, 0
    %vm246 = vcmp.eq.s32.totalorder %v180, 0
    %vm247 = vcmp.eq.s32.totalorder %v181, 0
    %vm248 = vcmp.eq.s32.totalorder %v182, 0
    %vm249 = vcmp.eq.s32.totalorder %v183, 0
    %vm250 = vcmp.eq.s32.totalorder %v184, 0
    %vm251 = vcmp.eq.s32.totalorder %v185, 0
    %vm252 = vcmp.eq.s32.totalorder %v186, 0
    %vm253 = vcmp.eq.s32.totalorder %v187, 0
    %vm254 = vcmp.eq.s32.totalorder %v188, 0
    %vm255 = vcmp.eq.s32.totalorder %v189, 0
    %vm256 = vcmp.eq.s32.totalorder %v190, 0
    %vm257 = vcmp.eq.s32.totalorder %v191, 0
    %vm258 = vcmp.eq.s32.totalorder %v192, 0
    %vm259 = vcmp.eq.s32.totalorder %v193, 0
    %vm260 = vcmp.eq.s32.totalorder %v194, 0
    %vm261 = vcmp.eq.s32.totalorder %v195, 0
    %vm262 = vcmp.eq.s32.totalorder %v196, 0
    %vm263 = vcmp.eq.s32.totalorder %v197, 0
    %vm264 = vcmp.eq.s32.totalorder %v198, 0
    %vm265 = vcmp.eq.s32.totalorder %v199, 0
    %vm266 = vcmp.eq.s32.totalorder %v200, 0
    %vm267 = vcmp.eq.s32.totalorder %v201, 0
    %vm268 = vcmp.eq.s32.totalorder %v202, 0
    %vm269 = vcmp.eq.s32.totalorder %v203, 0
    %vm270 = vcmp.eq.s32.totalorder %v204, 0
    %vm271 = vcmp.eq.s32.totalorder %v205, 0
    %vm272 = vcmp.eq.s32.totalorder %v206, 0
    %vm273 = vcmp.eq.s32.totalorder %v207, 0
    %vm274 = vcmp.eq.s32.totalorder %v208, 0
    %vm275 = vcmp.eq.s32.totalorder %v209, 0
    %vm276 = vcmp.eq.s32.totalorder %v210, 0
    %vm277 = vcmp.eq.s32.totalorder %v211, 0
    %vm278 = vcmp.eq.s32.totalorder %v212, 0
    %vm279 = vcmp.eq.s32.totalorder %v213, 0
    %vm280 = vcmp.eq.s32.totalorder %v214, 0
    %vm281 = vcmp.eq.s32.totalorder %v215, 0
    %vm282 = vcmp.eq.s32.totalorder %v216, 0
    %vm283 = vcmp.eq.s32.totalorder %v217, 0
    %vm284 = vcmp.eq.s32.totalorder %v218, 0
    %v285 = vlaneseq
    %v286 = vshrl.u32 %v285, 7
    %v287 = vsub.s32 0, %v286
    %v288 = vrot.slane %v220, %v287
    %v289 = vsel %vm221, %v288, 0.0
    %v290 = vsel %vm222, %v288, 0.0
    %v291 = vsel %vm223, %v288, 0.0
    %v292 = vsel %vm224, %v288, 0.0
    %v293 = vsel %vm225, %v288, 0.0
    %v294 = vsel %vm226, %v288, 0.0
    %v295 = vsel %vm227, %v288, 0.0
    %v296 = vsel %vm228, %v288, 0.0
    %v297 = vsel %vm229, %v288, 0.0
    %v298 = vsel %vm230, %v288, 0.0
    %v299 = vsel %vm231, %v288, 0.0
    %v300 = vsel %vm232, %v288, 0.0
    %v301 = vsel %vm233, %v288, 0.0
    %v302 = vsel %vm234, %v288, 0.0
    %v303 = vsel %vm235, %v288, 0.0
    %v304 = vsel %vm236, %v288, 0.0
    %v305 = vsel %vm237, %v288, 0.0
    %v306 = vsel %vm238, %v288, 0.0
    %v307 = vsel %vm239, %v288, 0.0
    %v308 = vsel %vm240, %v288, 0.0
    %v309 = vsel %vm241, %v288, 0.0
    %v310 = vsel %vm242, %v288, 0.0
    %v311 = vsel %vm243, %v288, 0.0
    %v312 = vsel %vm244, %v288, 0.0
    %v313 = vsel %vm245, %v288, 0.0
    %v314 = vsel %vm246, %v288, 0.0
    %v315 = vsel %vm247, %v288, 0.0
    %v316 = vsel %vm248, %v288, 0.0
    %v317 = vsel %vm249, %v288, 0.0
    %v318 = vsel %vm250, %v288, 0.0
    %v319 = vsel %vm251, %v288, 0.0
    %v320 = vsel %vm252, %v288, 0.0
    %v321 = vsel %vm253, %v288, 0.0
    %v322 = vsel %vm254, %v288, 0.0
    %v323 = vsel %vm255, %v288, 0.0
    %v324 = vsel %vm256, %v288, 0.0
    %v325 = vsel %vm257, %v288, 0.0
    %v326 = vsel %vm258, %v288, 0.0
    %v327 = vsel %vm259, %v288, 0.0
    %v328 = vsel %vm260, %v288, 0.0
    %v329 = vsel %vm261, %v288, 0.0
    %v330 = vsel %vm262, %v288, 0.0
    %v331 = vsel %vm263, %v288, 0.0
    %v332 = vsel %vm264, %v288, 0.0
    %v333 = vsel %vm265, %v288, 0.0
    %v334 = vsel %vm266, %v288, 0.0
    %v335 = vsel %vm267, %v288, 0.0
    %v336 = vsel %vm268, %v288, 0.0
    %v337 = vsel %vm269, %v288, 0.0
    %v338 = vsel %vm270, %v288, 0.0
    %v339 = vsel %vm271, %v288, 0.0
    %v340 = vsel %vm272, %v288, 0.0
    %v341 = vsel %vm273, %v288, 0.0
    %v342 = vsel %vm274, %v288, 0.0
    %v343 = vsel %vm275, %v288, 0.0
    %v344 = vsel %vm276, %v288, 0.0
    %v345 = vsel %vm277, %v288, 0.0
    %v346 = vsel %vm278, %v288, 0.0
    %v347 = vsel %vm279, %v288, 0.0
    %v348 = vsel %vm280, %v288, 0.0
    %v349 = vsel %vm281, %v288, 0.0
    %v350 = vsel %vm282, %v288, 0.0
    %v351 = vsel %vm283, %v288, 0.0
    %v352 = vsel %vm284, %v288, 0.0
    %vm353 = vcmp.eq.s32.totalorder %v155, 1
    %vm354 = vcmp.eq.s32.totalorder %v156, 1
    %vm355 = vcmp.eq.s32.totalorder %v157, 1
    %vm356 = vcmp.eq.s32.totalorder %v158, 1
    %vm357 = vcmp.eq.s32.totalorder %v159, 1
    %vm358 = vcmp.eq.s32.totalorder %v160, 1
    %vm359 = vcmp.eq.s32.totalorder %v161, 1
    %vm360 = vcmp.eq.s32.totalorder %v162, 1
    %vm361 = vcmp.eq.s32.totalorder %v163, 1
    %vm362 = vcmp.eq.s32.totalorder %v164, 1
    %vm363 = vcmp.eq.s32.totalorder %v165, 1
    %vm364 = vcmp.eq.s32.totalorder %v166, 1
    %vm365 = vcmp.eq.s32.totalorder %v167, 1
    %vm366 = vcmp.eq.s32.totalorder %v168, 1
    %vm367 = vcmp.eq.s32.totalorder %v169, 1
    %vm368 = vcmp.eq.s32.totalorder %v170, 1
    %vm369 = vcmp.eq.s32.totalorder %v171, 1
    %vm370 = vcmp.eq.s32.totalorder %v172, 1
    %vm371 = vcmp.eq.s32.totalorder %v173, 1
    %vm372 = vcmp.eq.s32.totalorder %v174, 1
    %vm373 = vcmp.eq.s32.totalorder %v175, 1
    %vm374 = vcmp.eq.s32.totalorder %v176, 1
    %vm375 = vcmp.eq.s32.totalorder %v177, 1
    %vm376 = vcmp.eq.s32.totalorder %v178, 1
    %vm377 = vcmp.eq.s32.totalorder %v179, 1
    %vm378 = vcmp.eq.s32.totalorder %v180, 1
    %vm379 = vcmp.eq.s32.totalorder %v181, 1
    %vm380 = vcmp.eq.s32.totalorder %v182, 1
    %vm381 = vcmp.eq.s32.totalorder %v183, 1
    %vm382 = vcmp.eq.s32.totalorder %v184, 1
    %vm383 = vcmp.eq.s32.totalorder %v185, 1
    %vm384 = vcmp.eq.s32.totalorder %v186, 1
    %vm385 = vcmp.eq.s32.totalorder %v187, 1
    %vm386 = vcmp.eq.s32.totalorder %v188, 1
    %vm387 = vcmp.eq.s32.totalorder %v189, 1
    %vm388 = vcmp.eq.s32.totalorder %v190, 1
    %vm389 = vcmp.eq.s32.totalorder %v191, 1
    %vm390 = vcmp.eq.s32.totalorder %v192, 1
    %vm391 = vcmp.eq.s32.totalorder %v193, 1
    %vm392 = vcmp.eq.s32.totalorder %v194, 1
    %vm393 = vcmp.eq.s32.totalorder %v195, 1
    %vm394 = vcmp.eq.s32.totalorder %v196, 1
    %vm395 = vcmp.eq.s32.totalorder %v197, 1
    %vm396 = vcmp.eq.s32.totalorder %v198, 1
    %vm397 = vcmp.eq.s32.totalorder %v199, 1
    %vm398 = vcmp.eq.s32.totalorder %v200, 1
    %vm399 = vcmp.eq.s32.totalorder %v201, 1
    %vm400 = vcmp.eq.s32.totalorder %v202, 1
    %vm401 = vcmp.eq.s32.totalorder %v203, 1
    %vm402 = vcmp.eq.s32.totalorder %v204, 1
    %vm403 = vcmp.eq.s32.totalorder %v205, 1
    %vm404 = vcmp.eq.s32.totalorder %v206, 1
    %vm405 = vcmp.eq.s32.totalorder %v207, 1
    %vm406 = vcmp.eq.s32.totalorder %v208, 1
    %vm407 = vcmp.eq.s32.totalorder %v209, 1
    %vm408 = vcmp.eq.s32.totalorder %v210, 1
    %vm409 = vcmp.eq.s32.totalorder %v211, 1
    %vm410 = vcmp.eq.s32.totalorder %v212, 1
    %vm411 = vcmp.eq.s32.totalorder %v213, 1
    %vm412 = vcmp.eq.s32.totalorder %v214, 1
    %vm413 = vcmp.eq.s32.totalorder %v215, 1
    %vm414 = vcmp.eq.s32.totalorder %v216, 1
    %vm415 = vcmp.eq.s32.totalorder %v217, 1
    %vm416 = vcmp.eq.s32.totalorder %v218, 1
    %v417 = vlaneseq
    %v418 = vshrl.u32 %v417, 7
    %v419 = vsub.s32 1, %v418
    %v420 = vrot.slane %v220, %v419
    %v421 = vsel %vm353, %v420, %v289
    %v422 = vsel %vm354, %v420, %v290
    %v423 = vsel %vm355, %v420, %v291
    %v424 = vsel %vm356, %v420, %v292
    %v425 = vsel %vm357, %v420, %v293
    %v426 = vsel %vm358, %v420, %v294
    %v427 = vsel %vm359, %v420, %v295
    %v428 = vsel %vm360, %v420, %v296
    %v429 = vsel %vm361, %v420, %v297
    %v430 = vsel %vm362, %v420, %v298
    %v431 = vsel %vm363, %v420, %v299
    %v432 = vsel %vm364, %v420, %v300
    %v433 = vsel %vm365, %v420, %v301
    %v434 = vsel %vm366, %v420, %v302
    %v435 = vsel %vm367, %v420, %v303
    %v436 = vsel %vm368, %v420, %v304
    %v437 = vsel %vm369, %v420, %v305
    %v438 = vsel %vm370, %v420, %v306
    %v439 = vsel %vm371, %v420, %v307
    %v440 = vsel %vm372, %v420, %v308
    %v441 = vsel %vm373, %v420, %v309
    %v442 = vsel %vm374, %v420, %v310
    %v443 = vsel %vm375, %v420, %v311
    %v444 = vsel %vm376, %v420, %v312
    %v445 = vsel %vm377, %v420, %v313
    %v446 = vsel %vm378, %v420, %v314
    %v447 = vsel %vm379, %v420, %v315
    %v448 = vsel %vm380, %v420, %v316
    %v449 = vsel %vm381, %v420, %v317
    %v450 = vsel %vm382, %v420, %v318
    %v451 = vsel %vm383, %v420, %v319
    %v452 = vsel %vm384, %v420, %v320
    %v453 = vsel %vm385, %v420, %v321
    %v454 = vsel %vm386, %v420, %v322
    %v455 = vsel %vm387, %v420, %v323
    %v456 = vsel %vm388, %v420, %v324
    %v457 = vsel %vm389, %v420, %v325
    %v458 = vsel %vm390, %v420, %v326
    %v459 = vsel %vm391, %v420, %v327
    %v460 = vsel %vm392, %v420, %v328
    %v461 = vsel %vm393, %v420, %v329
    %v462 = vsel %vm394, %v420, %v330
    %v463 = vsel %vm395, %v420, %v331
    %v464 = vsel %vm396, %v420, %v332
    %v465 = vsel %vm397, %v420, %v333
    %v466 = vsel %vm398, %v420, %v334
    %v467 = vsel %vm399, %v420, %v335
    %v468 = vsel %vm400, %v420, %v336
    %v469 = vsel %vm401, %v420, %v337
    %v470 = vsel %vm402, %v420, %v338
    %v471 = vsel %vm403, %v420, %v339
    %v472 = vsel %vm404, %v420, %v340
    %v473 = vsel %vm405, %v420, %v341
    %v474 = vsel %vm406, %v420, %v342
    %v475 = vsel %vm407, %v420, %v343
    %v476 = vsel %vm408, %v420, %v344
    %v477 = vsel %vm409, %v420, %v345
    %v478 = vsel %vm410, %v420, %v346
    %v479 = vsel %vm411, %v420, %v347
    %v480 = vsel %vm412, %v420, %v348
    %v481 = vsel %vm413, %v420, %v349
    %v482 = vsel %vm414, %v420, %v350
    %v483 = vsel %vm415, %v420, %v351
    %v484 = vsel %vm416, %v420, %v352
    %v485 = vmul.u32 %v155, 2
    %v486 = vmul.u32 %v156, 2
    %v487 = vmul.u32 %v157, 2
    %v488 = vmul.u32 %v158, 2
    %v489 = vmul.u32 %v159, 2
    %v490 = vmul.u32 %v160, 2
    %v491 = vmul.u32 %v161, 2
    %v492 = vmul.u32 %v162, 2
    %v493 = vmul.u32 %v163, 2
    %v494 = vmul.u32 %v164, 2
    %v495 = vmul.u32 %v165, 2
    %v496 = vmul.u32 %v166, 2
    %v497 = vmul.u32 %v167, 2
    %v498 = vmul.u32 %v168, 2
    %v499 = vmul.u32 %v169, 2
    %v500 = vmul.u32 %v170, 2
    %v501 = vmul.u32 %v171, 2
    %v502 = vmul.u32 %v172, 2
    %v503 = vmul.u32 %v173, 2
    %v504 = vmul.u32 %v174, 2
    %v505 = vmul.u32 %v175, 2
    %v506 = vmul.u32 %v176, 2
    %v507 = vmul.u32 %v177, 2
    %v508 = vmul.u32 %v178, 2
    %v509 = vmul.u32 %v179, 2
    %v510 = vmul.u32 %v180, 2
    %v511 = vmul.u32 %v181, 2
    %v512 = vmul.u32 %v182, 2
    %v513 = vmul.u32 %v183, 2
    %v514 = vmul.u32 %v184, 2
    %v515 = vmul.u32 %v185, 2
    %v516 = vmul.u32 %v186, 2
    %v517 = vmul.u32 %v187, 2
    %v518 = vmul.u32 %v188, 2
    %v519 = vmul.u32 %v189, 2
    %v520 = vmul.u32 %v190, 2
    %v521 = vmul.u32 %v191, 2
    %v522 = vmul.u32 %v192, 2
    %v523 = vmul.u32 %v193, 2
    %v524 = vmul.u32 %v194, 2
    %v525 = vmul.u32 %v195, 2
    %v526 = vmul.u32 %v196, 2
    %v527 = vmul.u32 %v197, 2
    %v528 = vmul.u32 %v198, 2
    %v529 = vmul.u32 %v199, 2
    %v530 = vmul.u32 %v200, 2
    %v531 = vmul.u32 %v201, 2
    %v532 = vmul.u32 %v202, 2
    %v533 = vmul.u32 %v203, 2
    %v534 = vmul.u32 %v204, 2
    %v535 = vmul.u32 %v205, 2
    %v536 = vmul.u32 %v206, 2
    %v537 = vmul.u32 %v207, 2
    %v538 = vmul.u32 %v208, 2
    %v539 = vmul.u32 %v209, 2
    %v540 = vmul.u32 %v210, 2
    %v541 = vmul.u32 %v211, 2
    %v542 = vmul.u32 %v212, 2
    %v543 = vmul.u32 %v213, 2
    %v544 = vmul.u32 %v214, 2
    %v545 = vmul.u32 %v215, 2
    %v546 = vmul.u32 %v216, 2
    %v547 = vmul.u32 %v217, 2
    %v548 = vmul.u32 %v218, 2
    %613 = vrot.lane.b32.xlu0 %v421, 8
    %v614 = vpop.permute.xlu0 %613
    %615 = vrot.lane.b32.xlu0 %v422, 8
    %v616 = vpop.permute.xlu0 %615
    %617 = vrot.lane.b32.xlu0 %v423, 8
    %v618 = vpop.permute.xlu0 %617
    %619 = vrot.lane.b32.xlu0 %v424, 8
    %v620 = vpop.permute.xlu0 %619
    %621 = vrot.lane.b32.xlu0 %v425, 8
    %v622 = vpop.permute.xlu0 %621
    %623 = vrot.lane.b32.xlu0 %v426, 8
    %v624 = vpop.permute.xlu0 %623
    %625 = vrot.lane.b32.xlu0 %v427, 8
    %v626 = vpop.permute.xlu0 %625
    %627 = vrot.lane.b32.xlu0 %v428, 8
    %v628 = vpop.permute.xlu0 %627
    %629 = vrot.lane.b32.xlu0 %v429, 8
    %v630 = vpop.permute.xlu0 %629
    %631 = vrot.lane.b32.xlu0 %v430, 8
    %v632 = vpop.permute.xlu0 %631
    %633 = vrot.lane.b32.xlu0 %v431, 8
    %v634 = vpop.permute.xlu0 %633
    %635 = vrot.lane.b32.xlu0 %v432, 8
    %v636 = vpop.permute.xlu0 %635
    %637 = vrot.lane.b32.xlu0 %v433, 8
    %v638 = vpop.permute.xlu0 %637
    %639 = vrot.lane.b32.xlu0 %v434, 8
    %v640 = vpop.permute.xlu0 %639
    %641 = vrot.lane.b32.xlu0 %v435, 8
    %v642 = vpop.permute.xlu0 %641
    %643 = vrot.lane.b32.xlu0 %v436, 8
    %v644 = vpop.permute.xlu0 %643
    %645 = vrot.lane.b32.xlu0 %v437, 8
    %v646 = vpop.permute.xlu0 %645
    %647 = vrot.lane.b32.xlu0 %v438, 8
    %v648 = vpop.permute.xlu0 %647
    %649 = vrot.lane.b32.xlu0 %v439, 8
    %v650 = vpop.permute.xlu0 %649
    %651 = vrot.lane.b32.xlu0 %v440, 8
    %v652 = vpop.permute.xlu0 %651
    %653 = vrot.lane.b32.xlu0 %v441, 8
    %v654 = vpop.permute.xlu0 %653
    %655 = vrot.lane.b32.xlu0 %v442, 8
    %v656 = vpop.permute.xlu0 %655
    %657 = vrot.lane.b32.xlu0 %v443, 8
    %v658 = vpop.permute.xlu0 %657
    %659 = vrot.lane.b32.xlu0 %v444, 8
    %v660 = vpop.permute.xlu0 %659
    %661 = vrot.lane.b32.xlu0 %v445, 8
    %v662 = vpop.permute.xlu0 %661
    %663 = vrot.lane.b32.xlu0 %v446, 8
    %v664 = vpop.permute.xlu0 %663
    %665 = vrot.lane.b32.xlu0 %v447, 8
    %v666 = vpop.permute.xlu0 %665
    %667 = vrot.lane.b32.xlu0 %v448, 8
    %v668 = vpop.permute.xlu0 %667
    %669 = vrot.lane.b32.xlu0 %v449, 8
    %v670 = vpop.permute.xlu0 %669
    %671 = vrot.lane.b32.xlu0 %v450, 8
    %v672 = vpop.permute.xlu0 %671
    %673 = vrot.lane.b32.xlu0 %v451, 8
    %v674 = vpop.permute.xlu0 %673
    %675 = vrot.lane.b32.xlu0 %v452, 8
    %v676 = vpop.permute.xlu0 %675
    %677 = vrot.lane.b32.xlu0 %v453, 8
    %v678 = vpop.permute.xlu0 %677
    %679 = vrot.lane.b32.xlu0 %v454, 8
    %v680 = vpop.permute.xlu0 %679
    %681 = vrot.lane.b32.xlu0 %v455, 8
    %v682 = vpop.permute.xlu0 %681
    %683 = vrot.lane.b32.xlu0 %v456, 8
    %v684 = vpop.permute.xlu0 %683
    %685 = vrot.lane.b32.xlu0 %v457, 8
    %v686 = vpop.permute.xlu0 %685
    %687 = vrot.lane.b32.xlu0 %v458, 8
    %v688 = vpop.permute.xlu0 %687
    %689 = vrot.lane.b32.xlu0 %v459, 8
    %v690 = vpop.permute.xlu0 %689
    %691 = vrot.lane.b32.xlu0 %v460, 8
    %v692 = vpop.permute.xlu0 %691
    %693 = vrot.lane.b32.xlu0 %v461, 8
    %v694 = vpop.permute.xlu0 %693
    %695 = vrot.lane.b32.xlu0 %v462, 8
    %v696 = vpop.permute.xlu0 %695
    %697 = vrot.lane.b32.xlu0 %v463, 8
    %v698 = vpop.permute.xlu0 %697
    %699 = vrot.lane.b32.xlu0 %v464, 8
    %v700 = vpop.permute.xlu0 %699
    %701 = vrot.lane.b32.xlu0 %v465, 8
    %v702 = vpop.permute.xlu0 %701
    %703 = vrot.lane.b32.xlu0 %v466, 8
    %v704 = vpop.permute.xlu0 %703
    %705 = vrot.lane.b32.xlu0 %v467, 8
    %v706 = vpop.permute.xlu0 %705
    %707 = vrot.lane.b32.xlu0 %v468, 8
    %v708 = vpop.permute.xlu0 %707
    %709 = vrot.lane.b32.xlu0 %v469, 8
    %v710 = vpop.permute.xlu0 %709
    %711 = vrot.lane.b32.xlu0 %v470, 8
    %v712 = vpop.permute.xlu0 %711
    %713 = vrot.lane.b32.xlu0 %v471, 8
    %v714 = vpop.permute.xlu0 %713
    %715 = vrot.lane.b32.xlu0 %v472, 8
    %v716 = vpop.permute.xlu0 %715
    %717 = vrot.lane.b32.xlu0 %v473, 8
    %v718 = vpop.permute.xlu0 %717
    %719 = vrot.lane.b32.xlu0 %v474, 8
    %v720 = vpop.permute.xlu0 %719
    %721 = vrot.lane.b32.xlu0 %v475, 8
    %v722 = vpop.permute.xlu0 %721
    %723 = vrot.lane.b32.xlu0 %v476, 8
    %v724 = vpop.permute.xlu0 %723
    %725 = vrot.lane.b32.xlu0 %v477, 8
    %v726 = vpop.permute.xlu0 %725
    %727 = vrot.lane.b32.xlu0 %v478, 8
    %v728 = vpop.permute.xlu0 %727
    %729 = vrot.lane.b32.xlu0 %v479, 8
    %v730 = vpop.permute.xlu0 %729
    %731 = vrot.lane.b32.xlu0 %v480, 8
    %v732 = vpop.permute.xlu0 %731
    %733 = vrot.lane.b32.xlu0 %v481, 8
    %v734 = vpop.permute.xlu0 %733
    %735 = vrot.lane.b32.xlu0 %v482, 8
    %v736 = vpop.permute.xlu0 %735
    %737 = vrot.lane.b32.xlu0 %v483, 8
    %v738 = vpop.permute.xlu0 %737
    %739 = vrot.lane.b32.xlu0 %v484, 8
    %v740 = vpop.permute.xlu0 %739
    %vm805 = vcmp.gt.f32.partialorder %v22, %v614
    %vm806 = vcmp.gt.f32.partialorder %v23, %v616
    %vm807 = vcmp.gt.f32.partialorder %v24, %v618
    %vm808 = vcmp.gt.f32.partialorder %v25, %v620
    %vm809 = vcmp.gt.f32.partialorder %v26, %v622
    %vm810 = vcmp.gt.f32.partialorder %v27, %v624
    %vm811 = vcmp.gt.f32.partialorder %v28, %v626
    %vm812 = vcmp.gt.f32.partialorder %v29, %v628
    %vm813 = vcmp.gt.f32.partialorder %v30, %v630
    %vm814 = vcmp.gt.f32.partialorder %v31, %v632
    %vm815 = vcmp.gt.f32.partialorder %v32, %v634
    %vm816 = vcmp.gt.f32.partialorder %v33, %v636
    %vm817 = vcmp.gt.f32.partialorder %v34, %v638
    %vm818 = vcmp.gt.f32.partialorder %v35, %v640
    %vm819 = vcmp.gt.f32.partialorder %v36, %v642
    %vm820 = vcmp.gt.f32.partialorder %v37, %v644
    %vm821 = vcmp.gt.f32.partialorder %v38, %v646
    %vm822 = vcmp.gt.f32.partialorder %v39, %v648
    %vm823 = vcmp.gt.f32.partialorder %v40, %v650
    %vm824 = vcmp.gt.f32.partialorder %v41, %v652
    %vm825 = vcmp.gt.f32.partialorder %v42, %v654
    %vm826 = vcmp.gt.f32.partialorder %v43, %v656
    %vm827 = vcmp.gt.f32.partialorder %v44, %v658
    %vm828 = vcmp.gt.f32.partialorder %v45, %v660
    %vm829 = vcmp.gt.f32.partialorder %v46, %v662
    %vm830 = vcmp.gt.f32.partialorder %v47, %v664
    %vm831 = vcmp.gt.f32.partialorder %v48, %v666
    %vm832 = vcmp.gt.f32.partialorder %v49, %v668
    %vm833 = vcmp.gt.f32.partialorder %v50, %v670
    %vm834 = vcmp.gt.f32.partialorder %v51, %v672
    %vm835 = vcmp.gt.f32.partialorder %v52, %v674
    %vm836 = vcmp.gt.f32.partialorder %v53, %v676
    %vm837 = vcmp.gt.f32.partialorder %v54, %v678
    %vm838 = vcmp.gt.f32.partialorder %v55, %v680
    %vm839 = vcmp.gt.f32.partialorder %v56, %v682
    %vm840 = vcmp.gt.f32.partialorder %v57, %v684
    %vm841 = vcmp.gt.f32.partialorder %v58, %v686
    %vm842 = vcmp.gt.f32.partialorder %v59, %v688
    %vm843 = vcmp.gt.f32.partialorder %v60, %v690
    %vm844 = vcmp.gt.f32.partialorder %v61, %v692
    %vm845 = vcmp.gt.f32.partialorder %v62, %v694
    %vm846 = vcmp.gt.f32.partialorder %v63, %v696
    %vm847 = vcmp.gt.f32.partialorder %v64, %v698
    %vm848 = vcmp.gt.f32.partialorder %v65, %v700
    %vm849 = vcmp.gt.f32.partialorder %v66, %v702
    %vm850 = vcmp.gt.f32.partialorder %v67, %v704
    %vm851 = vcmp.gt.f32.partialorder %v68, %v706
    %vm852 = vcmp.gt.f32.partialorder %v69, %v708
    %vm853 = vcmp.gt.f32.partialorder %v70, %v710
    %vm854 = vcmp.gt.f32.partialorder %v71, %v712
    %vm855 = vcmp.gt.f32.partialorder %v72, %v714
    %vm856 = vcmp.gt.f32.partialorder %v73, %v716
    %vm857 = vcmp.gt.f32.partialorder %v74, %v718
    %vm858 = vcmp.gt.f32.partialorder %v75, %v720
    %vm859 = vcmp.gt.f32.partialorder %v76, %v722
    %vm860 = vcmp.gt.f32.partialorder %v77, %v724
    %vm861 = vcmp.gt.f32.partialorder %v78, %v726
    %vm862 = vcmp.gt.f32.partialorder %v79, %v728
    %vm863 = vcmp.gt.f32.partialorder %v80, %v730
    %vm864 = vcmp.gt.f32.partialorder %v81, %v732
    %vm865 = vcmp.gt.f32.partialorder %v82, %v734
    %vm866 = vcmp.gt.f32.partialorder %v83, %v736
    %vm867 = vcmp.gt.f32.partialorder %v84, %v738
    %vm868 = vcmp.gt.f32.partialorder %v85, %v740
    %v869 = vsel %vm805, 1, 0
    %v870 = vsel %vm806, 1, 0
    %v871 = vsel %vm807, 1, 0
    %v872 = vsel %vm808, 1, 0
    %v873 = vsel %vm809, 1, 0
    %v874 = vsel %vm810, 1, 0
    %v875 = vsel %vm811, 1, 0
    %v876 = vsel %vm812, 1, 0
    %v877 = vsel %vm813, 1, 0
    %v878 = vsel %vm814, 1, 0
    %v879 = vsel %vm815, 1, 0
    %v880 = vsel %vm816, 1, 0
    %v881 = vsel %vm817, 1, 0
    %v882 = vsel %vm818, 1, 0
    %v883 = vsel %vm819, 1, 0
    %v884 = vsel %vm820, 1, 0
    %v885 = vsel %vm821, 1, 0
    %v886 = vsel %vm822, 1, 0
    %v887 = vsel %vm823, 1, 0
    %v888 = vsel %vm824, 1, 0
    %v889 = vsel %vm825, 1, 0
    %v890 = vsel %vm826, 1, 0
    %v891 = vsel %vm827, 1, 0
    %v892 = vsel %vm828, 1, 0
    %v893 = vsel %vm829, 1, 0
    %v894 = vsel %vm830, 1, 0
    %v895 = vsel %vm831, 1, 0
    %v896 = vsel %vm832, 1, 0
    %v897 = vsel %vm833, 1, 0
    %v898 = vsel %vm834, 1, 0
    %v899 = vsel %vm835, 1, 0
    %v900 = vsel %vm836, 1, 0
    %v901 = vsel %vm837, 1, 0
    %v902 = vsel %vm838, 1, 0
    %v903 = vsel %vm839, 1, 0
    %v904 = vsel %vm840, 1, 0
    %v905 = vsel %vm841, 1, 0
    %v906 = vsel %vm842, 1, 0
    %v907 = vsel %vm843, 1, 0
    %v908 = vsel %vm844, 1, 0
    %v909 = vsel %vm845, 1, 0
    %v910 = vsel %vm846, 1, 0
    %v911 = vsel %vm847, 1, 0
    %v912 = vsel %vm848, 1, 0
    %v913 = vsel %vm849, 1, 0
    %v914 = vsel %vm850, 1, 0
    %v915 = vsel %vm851, 1, 0
    %v916 = vsel %vm852, 1, 0
    %v917 = vsel %vm853, 1, 0
    %v918 = vsel %vm854, 1, 0
    %v919 = vsel %vm855, 1, 0
    %v920 = vsel %vm856, 1, 0
    %v921 = vsel %vm857, 1, 0
    %v922 = vsel %vm858, 1, 0
    %v923 = vsel %vm859, 1, 0
    %v924 = vsel %vm860, 1, 0
    %v925 = vsel %vm861, 1, 0
    %v926 = vsel %vm862, 1, 0
    %v927 = vsel %vm863, 1, 0
    %v928 = vsel %vm864, 1, 0
    %v929 = vsel %vm865, 1, 0
    %v930 = vsel %vm866, 1, 0
    %v931 = vsel %vm867, 1, 0
    %v932 = vsel %vm868, 1, 0
    %933 = vrot.lane.b32.xlu0 %v869, 120
    %v934 = vpop.permute.xlu0 %933
    %935 = vrot.lane.b32.xlu0 %v870, 120
    %v936 = vpop.permute.xlu0 %935
    %937 = vrot.lane.b32.xlu0 %v871, 120
    %v938 = vpop.permute.xlu0 %937
    %939 = vrot.lane.b32.xlu0 %v872, 120
    %v940 = vpop.permute.xlu0 %939
    %941 = vrot.lane.b32.xlu0 %v873, 120
    %v942 = vpop.permute.xlu0 %941
    %943 = vrot.lane.b32.xlu0 %v874, 120
    %v944 = vpop.permute.xlu0 %943
    %945 = vrot.lane.b32.xlu0 %v875, 120
    %v946 = vpop.permute.xlu0 %945
    %947 = vrot.lane.b32.xlu0 %v876, 120
    %v948 = vpop.permute.xlu0 %947
    %949 = vrot.lane.b32.xlu0 %v877, 120
    %v950 = vpop.permute.xlu0 %949
    %951 = vrot.lane.b32.xlu0 %v878, 120
    %v952 = vpop.permute.xlu0 %951
    %953 = vrot.lane.b32.xlu0 %v879, 120
    %v954 = vpop.permute.xlu0 %953
    %955 = vrot.lane.b32.xlu0 %v880, 120
    %v956 = vpop.permute.xlu0 %955
    %957 = vrot.lane.b32.xlu0 %v881, 120
    %v958 = vpop.permute.xlu0 %957
    %959 = vrot.lane.b32.xlu0 %v882, 120
    %v960 = vpop.permute.xlu0 %959
    %961 = vrot.lane.b32.xlu0 %v883, 120
    %v962 = vpop.permute.xlu0 %961
    %963 = vrot.lane.b32.xlu0 %v884, 120
    %v964 = vpop.permute.xlu0 %963
    %965 = vrot.lane.b32.xlu0 %v885, 120
    %v966 = vpop.permute.xlu0 %965
    %967 = vrot.lane.b32.xlu0 %v886, 120
    %v968 = vpop.permute.xlu0 %967
    %969 = vrot.lane.b32.xlu0 %v887, 120
    %v970 = vpop.permute.xlu0 %969
    %971 = vrot.lane.b32.xlu0 %v888, 120
    %v972 = vpop.permute.xlu0 %971
    %973 = vrot.lane.b32.xlu0 %v889, 120
    %v974 = vpop.permute.xlu0 %973
    %975 = vrot.lane.b32.xlu0 %v890, 120
    %v976 = vpop.permute.xlu0 %975
    %977 = vrot.lane.b32.xlu0 %v891, 120
    %v978 = vpop.permute.xlu0 %977
    %979 = vrot.lane.b32.xlu0 %v892, 120
    %v980 = vpop.permute.xlu0 %979
    %981 = vrot.lane.b32.xlu0 %v893, 120
    %v982 = vpop.permute.xlu0 %981
    %983 = vrot.lane.b32.xlu0 %v894, 120
    %v984 = vpop.permute.xlu0 %983
    %985 = vrot.lane.b32.xlu0 %v895, 120
    %v986 = vpop.permute.xlu0 %985
    %987 = vrot.lane.b32.xlu0 %v896, 120
    %v988 = vpop.permute.xlu0 %987
    %989 = vrot.lane.b32.xlu0 %v897, 120
    %v990 = vpop.permute.xlu0 %989
    %991 = vrot.lane.b32.xlu0 %v898, 120
    %v992 = vpop.permute.xlu0 %991
    %993 = vrot.lane.b32.xlu0 %v899, 120
    %v994 = vpop.permute.xlu0 %993
    %995 = vrot.lane.b32.xlu0 %v900, 120
    %v996 = vpop.permute.xlu0 %995
    %997 = vrot.lane.b32.xlu0 %v901, 120
    %v998 = vpop.permute.xlu0 %997
    %999 = vrot.lane.b32.xlu0 %v902, 120
    %v1000 = vpop.permute.xlu0 %999
    %1001 = vrot.lane.b32.xlu0 %v903, 120
    %v1002 = vpop.permute.xlu0 %1001
    %1003 = vrot.lane.b32.xlu0 %v904, 120
    %v1004 = vpop.permute.xlu0 %1003
    %1005 = vrot.lane.b32.xlu0 %v905, 120
    %v1006 = vpop.permute.xlu0 %1005
    %1007 = vrot.lane.b32.xlu0 %v906, 120
    %v1008 = vpop.permute.xlu0 %1007
    %1009 = vrot.lane.b32.xlu0 %v907, 120
    %v1010 = vpop.permute.xlu0 %1009
    %1011 = vrot.lane.b32.xlu0 %v908, 120
    %v1012 = vpop.permute.xlu0 %1011
    %1013 = vrot.lane.b32.xlu0 %v909, 120
    %v1014 = vpop.permute.xlu0 %1013
    %1015 = vrot.lane.b32.xlu0 %v910, 120
    %v1016 = vpop.permute.xlu0 %1015
    %1017 = vrot.lane.b32.xlu0 %v911, 120
    %v1018 = vpop.permute.xlu0 %1017
    %1019 = vrot.lane.b32.xlu0 %v912, 120
    %v1020 = vpop.permute.xlu0 %1019
    %1021 = vrot.lane.b32.xlu0 %v913, 120
    %v1022 = vpop.permute.xlu0 %1021
    %1023 = vrot.lane.b32.xlu0 %v914, 120
    %v1024 = vpop.permute.xlu0 %1023
    %1025 = vrot.lane.b32.xlu0 %v915, 120
    %v1026 = vpop.permute.xlu0 %1025
    %1027 = vrot.lane.b32.xlu0 %v916, 120
    %v1028 = vpop.permute.xlu0 %1027
    %1029 = vrot.lane.b32.xlu0 %v917, 120
    %v1030 = vpop.permute.xlu0 %1029
    %1031 = vrot.lane.b32.xlu0 %v918, 120
    %v1032 = vpop.permute.xlu0 %1031
    %1033 = vrot.lane.b32.xlu0 %v919, 120
    %v1034 = vpop.permute.xlu0 %1033
    %1035 = vrot.lane.b32.xlu0 %v920, 120
    %v1036 = vpop.permute.xlu0 %1035
    %1037 = vrot.lane.b32.xlu0 %v921, 120
    %v1038 = vpop.permute.xlu0 %1037
    %1039 = vrot.lane.b32.xlu0 %v922, 120
    %v1040 = vpop.permute.xlu0 %1039
    %1041 = vrot.lane.b32.xlu0 %v923, 120
    %v1042 = vpop.permute.xlu0 %1041
    %1043 = vrot.lane.b32.xlu0 %v924, 120
    %v1044 = vpop.permute.xlu0 %1043
    %1045 = vrot.lane.b32.xlu0 %v925, 120
    %v1046 = vpop.permute.xlu0 %1045
    %1047 = vrot.lane.b32.xlu0 %v926, 120
    %v1048 = vpop.permute.xlu0 %1047
    %1049 = vrot.lane.b32.xlu0 %v927, 120
    %v1050 = vpop.permute.xlu0 %1049
    %1051 = vrot.lane.b32.xlu0 %v928, 120
    %v1052 = vpop.permute.xlu0 %1051
    %1053 = vrot.lane.b32.xlu0 %v929, 120
    %v1054 = vpop.permute.xlu0 %1053
    %1055 = vrot.lane.b32.xlu0 %v930, 120
    %v1056 = vpop.permute.xlu0 %1055
    %1057 = vrot.lane.b32.xlu0 %v931, 120
    %v1058 = vpop.permute.xlu0 %1057
    %1059 = vrot.lane.b32.xlu0 %v932, 120
    %v1060 = vpop.permute.xlu0 %1059
    %v1061 = vadd.s32 %v485, %v934
    %v1062 = vadd.s32 %v486, %v936
    %v1063 = vadd.s32 %v487, %v938
    %v1064 = vadd.s32 %v488, %v940
    %v1065 = vadd.s32 %v489, %v942
    %v1066 = vadd.s32 %v490, %v944
    %v1067 = vadd.s32 %v491, %v946
    %v1068 = vadd.s32 %v492, %v948
    %v1069 = vadd.s32 %v493, %v950
    %v1070 = vadd.s32 %v494, %v952
    %v1071 = vadd.s32 %v495, %v954
    %v1072 = vadd.s32 %v496, %v956
    %v1073 = vadd.s32 %v497, %v958
    %v1074 = vadd.s32 %v498, %v960
    %v1075 = vadd.s32 %v499, %v962
    %v1076 = vadd.s32 %v500, %v964
    %v1077 = vadd.s32 %v501, %v966
    %v1078 = vadd.s32 %v502, %v968
    %v1079 = vadd.s32 %v503, %v970
    %v1080 = vadd.s32 %v504, %v972
    %v1081 = vadd.s32 %v505, %v974
    %v1082 = vadd.s32 %v506, %v976
    %v1083 = vadd.s32 %v507, %v978
    %v1084 = vadd.s32 %v508, %v980
    %v1085 = vadd.s32 %v509, %v982
    %v1086 = vadd.s32 %v510, %v984
    %v1087 = vadd.s32 %v511, %v986
    %v1088 = vadd.s32 %v512, %v988
    %v1089 = vadd.s32 %v513, %v990
    %v1090 = vadd.s32 %v514, %v992
    %v1091 = vadd.s32 %v515, %v994
    %v1092 = vadd.s32 %v516, %v996
    %v1093 = vadd.s32 %v517, %v998
    %v1094 = vadd.s32 %v518, %v1000
    %v1095 = vadd.s32 %v519, %v1002
    %v1096 = vadd.s32 %v520, %v1004
    %v1097 = vadd.s32 %v521, %v1006
    %v1098 = vadd.s32 %v522, %v1008
    %v1099 = vadd.s32 %v523, %v1010
    %v1100 = vadd.s32 %v524, %v1012
    %v1101 = vadd.s32 %v525, %v1014
    %v1102 = vadd.s32 %v526, %v1016
    %v1103 = vadd.s32 %v527, %v1018
    %v1104 = vadd.s32 %v528, %v1020
    %v1105 = vadd.s32 %v529, %v1022
    %v1106 = vadd.s32 %v530, %v1024
    %v1107 = vadd.s32 %v531, %v1026
    %v1108 = vadd.s32 %v532, %v1028
    %v1109 = vadd.s32 %v533, %v1030
    %v1110 = vadd.s32 %v534, %v1032
    %v1111 = vadd.s32 %v535, %v1034
    %v1112 = vadd.s32 %v536, %v1036
    %v1113 = vadd.s32 %v537, %v1038
    %v1114 = vadd.s32 %v538, %v1040
    %v1115 = vadd.s32 %v539, %v1042
    %v1116 = vadd.s32 %v540, %v1044
    %v1117 = vadd.s32 %v541, %v1046
    %v1118 = vadd.s32 %v542, %v1048
    %v1119 = vadd.s32 %v543, %v1050
    %v1120 = vadd.s32 %v544, %v1052
    %v1121 = vadd.s32 %v545, %v1054
    %v1122 = vadd.s32 %v546, %v1056
    %v1123 = vadd.s32 %v547, %v1058
    %v1124 = vadd.s32 %v548, %v1060
    %s1125 = scalar_lea.vmem %s1, 16
    %v1126 = vld [vmem:[%s1125] sm:$0xff]
    %vm1127 = vcmp.eq.s32.totalorder %v1061, 0
    %vm1128 = vcmp.eq.s32.totalorder %v1062, 0
    %vm1129 = vcmp.eq.s32.totalorder %v1063, 0
    %vm1130 = vcmp.eq.s32.totalorder %v1064, 0
    %vm1131 = vcmp.eq.s32.totalorder %v1065, 0
    %vm1132 = vcmp.eq.s32.totalorder %v1066, 0
    %vm1133 = vcmp.eq.s32.totalorder %v1067, 0
    %vm1134 = vcmp.eq.s32.totalorder %v1068, 0
    %vm1135 = vcmp.eq.s32.totalorder %v1069, 0
    %vm1136 = vcmp.eq.s32.totalorder %v1070, 0
    %vm1137 = vcmp.eq.s32.totalorder %v1071, 0
    %vm1138 = vcmp.eq.s32.totalorder %v1072, 0
    %vm1139 = vcmp.eq.s32.totalorder %v1073, 0
    %vm1140 = vcmp.eq.s32.totalorder %v1074, 0
    %vm1141 = vcmp.eq.s32.totalorder %v1075, 0
    %vm1142 = vcmp.eq.s32.totalorder %v1076, 0
    %vm1143 = vcmp.eq.s32.totalorder %v1077, 0
    %vm1144 = vcmp.eq.s32.totalorder %v1078, 0
    %vm1145 = vcmp.eq.s32.totalorder %v1079, 0
    %vm1146 = vcmp.eq.s32.totalorder %v1080, 0
    %vm1147 = vcmp.eq.s32.totalorder %v1081, 0
    %vm1148 = vcmp.eq.s32.totalorder %v1082, 0
    %vm1149 = vcmp.eq.s32.totalorder %v1083, 0
    %vm1150 = vcmp.eq.s32.totalorder %v1084, 0
    %vm1151 = vcmp.eq.s32.totalorder %v1085, 0
    %vm1152 = vcmp.eq.s32.totalorder %v1086, 0
    %vm1153 = vcmp.eq.s32.totalorder %v1087, 0
    %vm1154 = vcmp.eq.s32.totalorder %v1088, 0
    %vm1155 = vcmp.eq.s32.totalorder %v1089, 0
    %vm1156 = vcmp.eq.s32.totalorder %v1090, 0
    %vm1157 = vcmp.eq.s32.totalorder %v1091, 0
    %vm1158 = vcmp.eq.s32.totalorder %v1092, 0
    %vm1159 = vcmp.eq.s32.totalorder %v1093, 0
    %vm1160 = vcmp.eq.s32.totalorder %v1094, 0
    %vm1161 = vcmp.eq.s32.totalorder %v1095, 0
    %vm1162 = vcmp.eq.s32.totalorder %v1096, 0
    %vm1163 = vcmp.eq.s32.totalorder %v1097, 0
    %vm1164 = vcmp.eq.s32.totalorder %v1098, 0
    %vm1165 = vcmp.eq.s32.totalorder %v1099, 0
    %vm1166 = vcmp.eq.s32.totalorder %v1100, 0
    %vm1167 = vcmp.eq.s32.totalorder %v1101, 0
    %vm1168 = vcmp.eq.s32.totalorder %v1102, 0
    %vm1169 = vcmp.eq.s32.totalorder %v1103, 0
    %vm1170 = vcmp.eq.s32.totalorder %v1104, 0
    %vm1171 = vcmp.eq.s32.totalorder %v1105, 0
    %vm1172 = vcmp.eq.s32.totalorder %v1106, 0
    %vm1173 = vcmp.eq.s32.totalorder %v1107, 0
    %vm1174 = vcmp.eq.s32.totalorder %v1108, 0
    %vm1175 = vcmp.eq.s32.totalorder %v1109, 0
    %vm1176 = vcmp.eq.s32.totalorder %v1110, 0
    %vm1177 = vcmp.eq.s32.totalorder %v1111, 0
    %vm1178 = vcmp.eq.s32.totalorder %v1112, 0
    %vm1179 = vcmp.eq.s32.totalorder %v1113, 0
    %vm1180 = vcmp.eq.s32.totalorder %v1114, 0
    %vm1181 = vcmp.eq.s32.totalorder %v1115, 0
    %vm1182 = vcmp.eq.s32.totalorder %v1116, 0
    %vm1183 = vcmp.eq.s32.totalorder %v1117, 0
    %vm1184 = vcmp.eq.s32.totalorder %v1118, 0
    %vm1185 = vcmp.eq.s32.totalorder %v1119, 0
    %vm1186 = vcmp.eq.s32.totalorder %v1120, 0
    %vm1187 = vcmp.eq.s32.totalorder %v1121, 0
    %vm1188 = vcmp.eq.s32.totalorder %v1122, 0
    %vm1189 = vcmp.eq.s32.totalorder %v1123, 0
    %vm1190 = vcmp.eq.s32.totalorder %v1124, 0
    %v1191 = vlaneseq
    %v1192 = vshrl.u32 %v1191, 7
    %v1193 = vsub.s32 0, %v1192
    %v1194 = vrot.slane %v1126, %v1193
    %v1195 = vsel %vm1127, %v1194, 0.0
    %v1196 = vsel %vm1128, %v1194, 0.0
    %v1197 = vsel %vm1129, %v1194, 0.0
    %v1198 = vsel %vm1130, %v1194, 0.0
    %v1199 = vsel %vm1131, %v1194, 0.0
    %v1200 = vsel %vm1132, %v1194, 0.0
    %v1201 = vsel %vm1133, %v1194, 0.0
    %v1202 = vsel %vm1134, %v1194, 0.0
    %v1203 = vsel %vm1135, %v1194, 0.0
    %v1204 = vsel %vm1136, %v1194, 0.0
    %v1205 = vsel %vm1137, %v1194, 0.0
    %v1206 = vsel %vm1138, %v1194, 0.0
    %v1207 = vsel %vm1139, %v1194, 0.0
    %v1208 = vsel %vm1140, %v1194, 0.0
    %v1209 = vsel %vm1141, %v1194, 0.0
    %v1210 = vsel %vm1142, %v1194, 0.0
    %v1211 = vsel %vm1143, %v1194, 0.0
    %v1212 = vsel %vm1144, %v1194, 0.0
    %v1213 = vsel %vm1145, %v1194, 0.0
    %v1214 = vsel %vm1146, %v1194, 0.0
    %v1215 = vsel %vm1147, %v1194, 0.0
    %v1216 = vsel %vm1148, %v1194, 0.0
    %v1217 = vsel %vm1149, %v1194, 0.0
    %v1218 = vsel %vm1150, %v1194, 0.0
    %v1219 = vsel %vm1151, %v1194, 0.0
    %v1220 = vsel %vm1152, %v1194, 0.0
    %v1221 = vsel %vm1153, %v1194, 0.0
    %v1222 = vsel %vm1154, %v1194, 0.0
    %v1223 = vsel %vm1155, %v1194, 0.0
    %v1224 = vsel %vm1156, %v1194, 0.0
    %v1225 = vsel %vm1157, %v1194, 0.0
    %v1226 = vsel %vm1158, %v1194, 0.0
    %v1227 = vsel %vm1159, %v1194, 0.0
    %v1228 = vsel %vm1160, %v1194, 0.0
    %v1229 = vsel %vm1161, %v1194, 0.0
    %v1230 = vsel %vm1162, %v1194, 0.0
    %v1231 = vsel %vm1163, %v1194, 0.0
    %v1232 = vsel %vm1164, %v1194, 0.0
    %v1233 = vsel %vm1165, %v1194, 0.0
    %v1234 = vsel %vm1166, %v1194, 0.0
    %v1235 = vsel %vm1167, %v1194, 0.0
    %v1236 = vsel %vm1168, %v1194, 0.0
    %v1237 = vsel %vm1169, %v1194, 0.0
    %v1238 = vsel %vm1170, %v1194, 0.0
    %v1239 = vsel %vm1171, %v1194, 0.0
    %v1240 = vsel %vm1172, %v1194, 0.0
    %v1241 = vsel %vm1173, %v1194, 0.0
    %v1242 = vsel %vm1174, %v1194, 0.0
    %v1243 = vsel %vm1175, %v1194, 0.0
    %v1244 = vsel %vm1176, %v1194, 0.0
    %v1245 = vsel %vm1177, %v1194, 0.0
    %v1246 = vsel %vm1178, %v1194, 0.0
    %v1247 = vsel %vm1179, %v1194, 0.0
    %v1248 = vsel %vm1180, %v1194, 0.0
    %v1249 = vsel %vm1181, %v1194, 0.0
    %v1250 = vsel %vm1182, %v1194, 0.0
    %v1251 = vsel %vm1183, %v1194, 0.0
    %v1252 = vsel %vm1184, %v1194, 0.0
    %v1253 = vsel %vm1185, %v1194, 0.0
    %v1254 = vsel %vm1186, %v1194, 0.0
    %v1255 = vsel %vm1187, %v1194, 0.0
    %v1256 = vsel %vm1188, %v1194, 0.0
    %v1257 = vsel %vm1189, %v1194, 0.0
    %v1258 = vsel %vm1190, %v1194, 0.0
    %vm1259 = vcmp.eq.s32.totalorder %v1061, 1
    %vm1260 = vcmp.eq.s32.totalorder %v1062, 1
    %vm1261 = vcmp.eq.s32.totalorder %v1063, 1
    %vm1262 = vcmp.eq.s32.totalorder %v1064, 1
    %vm1263 = vcmp.eq.s32.totalorder %v1065, 1
    %vm1264 = vcmp.eq.s32.totalorder %v1066, 1
    %vm1265 = vcmp.eq.s32.totalorder %v1067, 1
    %vm1266 = vcmp.eq.s32.totalorder %v1068, 1
    %vm1267 = vcmp.eq.s32.totalorder %v1069, 1
    %vm1268 = vcmp.eq.s32.totalorder %v1070, 1
    %vm1269 = vcmp.eq.s32.totalorder %v1071, 1
    %vm1270 = vcmp.eq.s32.totalorder %v1072, 1
    %vm1271 = vcmp.eq.s32.totalorder %v1073, 1
    %vm1272 = vcmp.eq.s32.totalorder %v1074, 1
    %vm1273 = vcmp.eq.s32.totalorder %v1075, 1
    %vm1274 = vcmp.eq.s32.totalorder %v1076, 1
    %vm1275 = vcmp.eq.s32.totalorder %v1077, 1
    %vm1276 = vcmp.eq.s32.totalorder %v1078, 1
    %vm1277 = vcmp.eq.s32.totalorder %v1079, 1
    %vm1278 = vcmp.eq.s32.totalorder %v1080, 1
    %vm1279 = vcmp.eq.s32.totalorder %v1081, 1
    %vm1280 = vcmp.eq.s32.totalorder %v1082, 1
    %vm1281 = vcmp.eq.s32.totalorder %v1083, 1
    %vm1282 = vcmp.eq.s32.totalorder %v1084, 1
    %vm1283 = vcmp.eq.s32.totalorder %v1085, 1
    %vm1284 = vcmp.eq.s32.totalorder %v1086, 1
    %vm1285 = vcmp.eq.s32.totalorder %v1087, 1
    %vm1286 = vcmp.eq.s32.totalorder %v1088, 1
    %vm1287 = vcmp.eq.s32.totalorder %v1089, 1
    %vm1288 = vcmp.eq.s32.totalorder %v1090, 1
    %vm1289 = vcmp.eq.s32.totalorder %v1091, 1
    %vm1290 = vcmp.eq.s32.totalorder %v1092, 1
    %vm1291 = vcmp.eq.s32.totalorder %v1093, 1
    %vm1292 = vcmp.eq.s32.totalorder %v1094, 1
    %vm1293 = vcmp.eq.s32.totalorder %v1095, 1
    %vm1294 = vcmp.eq.s32.totalorder %v1096, 1
    %vm1295 = vcmp.eq.s32.totalorder %v1097, 1
    %vm1296 = vcmp.eq.s32.totalorder %v1098, 1
    %vm1297 = vcmp.eq.s32.totalorder %v1099, 1
    %vm1298 = vcmp.eq.s32.totalorder %v1100, 1
    %vm1299 = vcmp.eq.s32.totalorder %v1101, 1
    %vm1300 = vcmp.eq.s32.totalorder %v1102, 1
    %vm1301 = vcmp.eq.s32.totalorder %v1103, 1
    %vm1302 = vcmp.eq.s32.totalorder %v1104, 1
    %vm1303 = vcmp.eq.s32.totalorder %v1105, 1
    %vm1304 = vcmp.eq.s32.totalorder %v1106, 1
    %vm1305 = vcmp.eq.s32.totalorder %v1107, 1
    %vm1306 = vcmp.eq.s32.totalorder %v1108, 1
    %vm1307 = vcmp.eq.s32.totalorder %v1109, 1
    %vm1308 = vcmp.eq.s32.totalorder %v1110, 1
    %vm1309 = vcmp.eq.s32.totalorder %v1111, 1
    %vm1310 = vcmp.eq.s32.totalorder %v1112, 1
    %vm1311 = vcmp.eq.s32.totalorder %v1113, 1
    %vm1312 = vcmp.eq.s32.totalorder %v1114, 1
    %vm1313 = vcmp.eq.s32.totalorder %v1115, 1
    %vm1314 = vcmp.eq.s32.totalorder %v1116, 1
    %vm1315 = vcmp.eq.s32.totalorder %v1117, 1
    %vm1316 = vcmp.eq.s32.totalorder %v1118, 1
    %vm1317 = vcmp.eq.s32.totalorder %v1119, 1
    %vm1318 = vcmp.eq.s32.totalorder %v1120, 1
    %vm1319 = vcmp.eq.s32.totalorder %v1121, 1
    %vm1320 = vcmp.eq.s32.totalorder %v1122, 1
    %vm1321 = vcmp.eq.s32.totalorder %v1123, 1
    %vm1322 = vcmp.eq.s32.totalorder %v1124, 1
    %v1323 = vlaneseq
    %v1324 = vshrl.u32 %v1323, 7
    %v1325 = vsub.s32 1, %v1324
    %v1326 = vrot.slane %v1126, %v1325
    %v1327 = vsel %vm1259, %v1326, %v1195
    %v1328 = vsel %vm1260, %v1326, %v1196
    %v1329 = vsel %vm1261, %v1326, %v1197
    %v1330 = vsel %vm1262, %v1326, %v1198
    %v1331 = vsel %vm1263, %v1326, %v1199
    %v1332 = vsel %vm1264, %v1326, %v1200
    %v1333 = vsel %vm1265, %v1326, %v1201
    %v1334 = vsel %vm1266, %v1326, %v1202
    %v1335 = vsel %vm1267, %v1326, %v1203
    %v1336 = vsel %vm1268, %v1326, %v1204
    %v1337 = vsel %vm1269, %v1326, %v1205
    %v1338 = vsel %vm1270, %v1326, %v1206
    %v1339 = vsel %vm1271, %v1326, %v1207
    %v1340 = vsel %vm1272, %v1326, %v1208
    %v1341 = vsel %vm1273, %v1326, %v1209
    %v1342 = vsel %vm1274, %v1326, %v1210
    %v1343 = vsel %vm1275, %v1326, %v1211
    %v1344 = vsel %vm1276, %v1326, %v1212
    %v1345 = vsel %vm1277, %v1326, %v1213
    %v1346 = vsel %vm1278, %v1326, %v1214
    %v1347 = vsel %vm1279, %v1326, %v1215
    %v1348 = vsel %vm1280, %v1326, %v1216
    %v1349 = vsel %vm1281, %v1326, %v1217
    %v1350 = vsel %vm1282, %v1326, %v1218
    %v1351 = vsel %vm1283, %v1326, %v1219
    %v1352 = vsel %vm1284, %v1326, %v1220
    %v1353 = vsel %vm1285, %v1326, %v1221
    %v1354 = vsel %vm1286, %v1326, %v1222
    %v1355 = vsel %vm1287, %v1326, %v1223
    %v1356 = vsel %vm1288, %v1326, %v1224
    %v1357 = vsel %vm1289, %v1326, %v1225
    %v1358 = vsel %vm1290, %v1326, %v1226
    %v1359 = vsel %vm1291, %v1326, %v1227
    %v1360 = vsel %vm1292, %v1326, %v1228
    %v1361 = vsel %vm1293, %v1326, %v1229
    %v1362 = vsel %vm1294, %v1326, %v1230
    %v1363 = vsel %vm1295, %v1326, %v1231
    %v1364 = vsel %vm1296, %v1326, %v1232
    %v1365 = vsel %vm1297, %v1326, %v1233
    %v1366 = vsel %vm1298, %v1326, %v1234
    %v1367 = vsel %vm1299, %v1326, %v1235
    %v1368 = vsel %vm1300, %v1326, %v1236
    %v1369 = vsel %vm1301, %v1326, %v1237
    %v1370 = vsel %vm1302, %v1326, %v1238
    %v1371 = vsel %vm1303, %v1326, %v1239
    %v1372 = vsel %vm1304, %v1326, %v1240
    %v1373 = vsel %vm1305, %v1326, %v1241
    %v1374 = vsel %vm1306, %v1326, %v1242
    %v1375 = vsel %vm1307, %v1326, %v1243
    %v1376 = vsel %vm1308, %v1326, %v1244
    %v1377 = vsel %vm1309, %v1326, %v1245
    %v1378 = vsel %vm1310, %v1326, %v1246
    %v1379 = vsel %vm1311, %v1326, %v1247
    %v1380 = vsel %vm1312, %v1326, %v1248
    %v1381 = vsel %vm1313, %v1326, %v1249
    %v1382 = vsel %vm1314, %v1326, %v1250
    %v1383 = vsel %vm1315, %v1326, %v1251
    %v1384 = vsel %vm1316, %v1326, %v1252
    %v1385 = vsel %vm1317, %v1326, %v1253
    %v1386 = vsel %vm1318, %v1326, %v1254
    %v1387 = vsel %vm1319, %v1326, %v1255
    %v1388 = vsel %vm1320, %v1326, %v1256
    %v1389 = vsel %vm1321, %v1326, %v1257
    %v1390 = vsel %vm1322, %v1326, %v1258
    %vm1391 = vcmp.eq.s32.totalorder %v1061, 2
    %vm1392 = vcmp.eq.s32.totalorder %v1062, 2
    %vm1393 = vcmp.eq.s32.totalorder %v1063, 2
    %vm1394 = vcmp.eq.s32.totalorder %v1064, 2
    %vm1395 = vcmp.eq.s32.totalorder %v1065, 2
    %vm1396 = vcmp.eq.s32.totalorder %v1066, 2
    %vm1397 = vcmp.eq.s32.totalorder %v1067, 2
    %vm1398 = vcmp.eq.s32.totalorder %v1068, 2
    %vm1399 = vcmp.eq.s32.totalorder %v1069, 2
    %vm1400 = vcmp.eq.s32.totalorder %v1070, 2
    %vm1401 = vcmp.eq.s32.totalorder %v1071, 2
    %vm1402 = vcmp.eq.s32.totalorder %v1072, 2
    %vm1403 = vcmp.eq.s32.totalorder %v1073, 2
    %vm1404 = vcmp.eq.s32.totalorder %v1074, 2
    %vm1405 = vcmp.eq.s32.totalorder %v1075, 2
    %vm1406 = vcmp.eq.s32.totalorder %v1076, 2
    %vm1407 = vcmp.eq.s32.totalorder %v1077, 2
    %vm1408 = vcmp.eq.s32.totalorder %v1078, 2
    %vm1409 = vcmp.eq.s32.totalorder %v1079, 2
    %vm1410 = vcmp.eq.s32.totalorder %v1080, 2
    %vm1411 = vcmp.eq.s32.totalorder %v1081, 2
    %vm1412 = vcmp.eq.s32.totalorder %v1082, 2
    %vm1413 = vcmp.eq.s32.totalorder %v1083, 2
    %vm1414 = vcmp.eq.s32.totalorder %v1084, 2
    %vm1415 = vcmp.eq.s32.totalorder %v1085, 2
    %vm1416 = vcmp.eq.s32.totalorder %v1086, 2
    %vm1417 = vcmp.eq.s32.totalorder %v1087, 2
    %vm1418 = vcmp.eq.s32.totalorder %v1088, 2
    %vm1419 = vcmp.eq.s32.totalorder %v1089, 2
    %vm1420 = vcmp.eq.s32.totalorder %v1090, 2
    %vm1421 = vcmp.eq.s32.totalorder %v1091, 2
    %vm1422 = vcmp.eq.s32.totalorder %v1092, 2
    %vm1423 = vcmp.eq.s32.totalorder %v1093, 2
    %vm1424 = vcmp.eq.s32.totalorder %v1094, 2
    %vm1425 = vcmp.eq.s32.totalorder %v1095, 2
    %vm1426 = vcmp.eq.s32.totalorder %v1096, 2
    %vm1427 = vcmp.eq.s32.totalorder %v1097, 2
    %vm1428 = vcmp.eq.s32.totalorder %v1098, 2
    %vm1429 = vcmp.eq.s32.totalorder %v1099, 2
    %vm1430 = vcmp.eq.s32.totalorder %v1100, 2
    %vm1431 = vcmp.eq.s32.totalorder %v1101, 2
    %vm1432 = vcmp.eq.s32.totalorder %v1102, 2
    %vm1433 = vcmp.eq.s32.totalorder %v1103, 2
    %vm1434 = vcmp.eq.s32.totalorder %v1104, 2
    %vm1435 = vcmp.eq.s32.totalorder %v1105, 2
    %vm1436 = vcmp.eq.s32.totalorder %v1106, 2
    %vm1437 = vcmp.eq.s32.totalorder %v1107, 2
    %vm1438 = vcmp.eq.s32.totalorder %v1108, 2
    %vm1439 = vcmp.eq.s32.totalorder %v1109, 2
    %vm1440 = vcmp.eq.s32.totalorder %v1110, 2
    %vm1441 = vcmp.eq.s32.totalorder %v1111, 2
    %vm1442 = vcmp.eq.s32.totalorder %v1112, 2
    %vm1443 = vcmp.eq.s32.totalorder %v1113, 2
    %vm1444 = vcmp.eq.s32.totalorder %v1114, 2
    %vm1445 = vcmp.eq.s32.totalorder %v1115, 2
    %vm1446 = vcmp.eq.s32.totalorder %v1116, 2
    %vm1447 = vcmp.eq.s32.totalorder %v1117, 2
    %vm1448 = vcmp.eq.s32.totalorder %v1118, 2
    %vm1449 = vcmp.eq.s32.totalorder %v1119, 2
    %vm1450 = vcmp.eq.s32.totalorder %v1120, 2
    %vm1451 = vcmp.eq.s32.totalorder %v1121, 2
    %vm1452 = vcmp.eq.s32.totalorder %v1122, 2
    %vm1453 = vcmp.eq.s32.totalorder %v1123, 2
    %vm1454 = vcmp.eq.s32.totalorder %v1124, 2
    %v1455 = vlaneseq
    %v1456 = vshrl.u32 %v1455, 7
    %v1457 = vsub.s32 2, %v1456
    %v1458 = vrot.slane %v1126, %v1457
    %v1459 = vsel %vm1391, %v1458, %v1327
    %v1460 = vsel %vm1392, %v1458, %v1328
    %v1461 = vsel %vm1393, %v1458, %v1329
    %v1462 = vsel %vm1394, %v1458, %v1330
    %v1463 = vsel %vm1395, %v1458, %v1331
    %v1464 = vsel %vm1396, %v1458, %v1332
    %v1465 = vsel %vm1397, %v1458, %v1333
    %v1466 = vsel %vm1398, %v1458, %v1334
    %v1467 = vsel %vm1399, %v1458, %v1335
    %v1468 = vsel %vm1400, %v1458, %v1336
    %v1469 = vsel %vm1401, %v1458, %v1337
    %v1470 = vsel %vm1402, %v1458, %v1338
    %v1471 = vsel %vm1403, %v1458, %v1339
    %v1472 = vsel %vm1404, %v1458, %v1340
    %v1473 = vsel %vm1405, %v1458, %v1341
    %v1474 = vsel %vm1406, %v1458, %v1342
    %v1475 = vsel %vm1407, %v1458, %v1343
    %v1476 = vsel %vm1408, %v1458, %v1344
    %v1477 = vsel %vm1409, %v1458, %v1345
    %v1478 = vsel %vm1410, %v1458, %v1346
    %v1479 = vsel %vm1411, %v1458, %v1347
    %v1480 = vsel %vm1412, %v1458, %v1348
    %v1481 = vsel %vm1413, %v1458, %v1349
    %v1482 = vsel %vm1414, %v1458, %v1350
    %v1483 = vsel %vm1415, %v1458, %v1351
    %v1484 = vsel %vm1416, %v1458, %v1352
    %v1485 = vsel %vm1417, %v1458, %v1353
    %v1486 = vsel %vm1418, %v1458, %v1354
    %v1487 = vsel %vm1419, %v1458, %v1355
    %v1488 = vsel %vm1420, %v1458, %v1356
    %v1489 = vsel %vm1421, %v1458, %v1357
    %v1490 = vsel %vm1422, %v1458, %v1358
    %v1491 = vsel %vm1423, %v1458, %v1359
    %v1492 = vsel %vm1424, %v1458, %v1360
    %v1493 = vsel %vm1425, %v1458, %v1361
    %v1494 = vsel %vm1426, %v1458, %v1362
    %v1495 = vsel %vm1427, %v1458, %v1363
    %v1496 = vsel %vm1428, %v1458, %v1364
    %v1497 = vsel %vm1429, %v1458, %v1365
    %v1498 = vsel %vm1430, %v1458, %v1366
    %v1499 = vsel %vm1431, %v1458, %v1367
    %v1500 = vsel %vm1432, %v1458, %v1368
    %v1501 = vsel %vm1433, %v1458, %v1369
    %v1502 = vsel %vm1434, %v1458, %v1370
    %v1503 = vsel %vm1435, %v1458, %v1371
    %v1504 = vsel %vm1436, %v1458, %v1372
    %v1505 = vsel %vm1437, %v1458, %v1373
    %v1506 = vsel %vm1438, %v1458, %v1374
    %v1507 = vsel %vm1439, %v1458, %v1375
    %v1508 = vsel %vm1440, %v1458, %v1376
    %v1509 = vsel %vm1441, %v1458, %v1377
    %v1510 = vsel %vm1442, %v1458, %v1378
    %v1511 = vsel %vm1443, %v1458, %v1379
    %v1512 = vsel %vm1444, %v1458, %v1380
    %v1513 = vsel %vm1445, %v1458, %v1381
    %v1514 = vsel %vm1446, %v1458, %v1382
    %v1515 = vsel %vm1447, %v1458, %v1383
    %v1516 = vsel %vm1448, %v1458, %v1384
    %v1517 = vsel %vm1449, %v1458, %v1385
    %v1518 = vsel %vm1450, %v1458, %v1386
    %v1519 = vsel %vm1451, %v1458, %v1387
    %v1520 = vsel %vm1452, %v1458, %v1388
    %v1521 = vsel %vm1453, %v1458, %v1389
    %v1522 = vsel %vm1454, %v1458, %v1390
    %vm1523 = vcmp.eq.s32.totalorder %v1061, 3
    %vm1524 = vcmp.eq.s32.totalorder %v1062, 3
    %vm1525 = vcmp.eq.s32.totalorder %v1063, 3
    %vm1526 = vcmp.eq.s32.totalorder %v1064, 3
    %vm1527 = vcmp.eq.s32.totalorder %v1065, 3
    %vm1528 = vcmp.eq.s32.totalorder %v1066, 3
    %vm1529 = vcmp.eq.s32.totalorder %v1067, 3
    %vm1530 = vcmp.eq.s32.totalorder %v1068, 3
    %vm1531 = vcmp.eq.s32.totalorder %v1069, 3
    %vm1532 = vcmp.eq.s32.totalorder %v1070, 3
    %vm1533 = vcmp.eq.s32.totalorder %v1071, 3
    %vm1534 = vcmp.eq.s32.totalorder %v1072, 3
    %vm1535 = vcmp.eq.s32.totalorder %v1073, 3
    %vm1536 = vcmp.eq.s32.totalorder %v1074, 3
    %vm1537 = vcmp.eq.s32.totalorder %v1075, 3
    %vm1538 = vcmp.eq.s32.totalorder %v1076, 3
    %vm1539 = vcmp.eq.s32.totalorder %v1077, 3
    %vm1540 = vcmp.eq.s32.totalorder %v1078, 3
    %vm1541 = vcmp.eq.s32.totalorder %v1079, 3
    %vm1542 = vcmp.eq.s32.totalorder %v1080, 3
    %vm1543 = vcmp.eq.s32.totalorder %v1081, 3
    %vm1544 = vcmp.eq.s32.totalorder %v1082, 3
    %vm1545 = vcmp.eq.s32.totalorder %v1083, 3
    %vm1546 = vcmp.eq.s32.totalorder %v1084, 3
    %vm1547 = vcmp.eq.s32.totalorder %v1085, 3
    %vm1548 = vcmp.eq.s32.totalorder %v1086, 3
    %vm1549 = vcmp.eq.s32.totalorder %v1087, 3
    %vm1550 = vcmp.eq.s32.totalorder %v1088, 3
    %vm1551 = vcmp.eq.s32.totalorder %v1089, 3
    %vm1552 = vcmp.eq.s32.totalorder %v1090, 3
    %vm1553 = vcmp.eq.s32.totalorder %v1091, 3
    %vm1554 = vcmp.eq.s32.totalorder %v1092, 3
    %vm1555 = vcmp.eq.s32.totalorder %v1093, 3
    %vm1556 = vcmp.eq.s32.totalorder %v1094, 3
    %vm1557 = vcmp.eq.s32.totalorder %v1095, 3
    %vm1558 = vcmp.eq.s32.totalorder %v1096, 3
    %vm1559 = vcmp.eq.s32.totalorder %v1097, 3
    %vm1560 = vcmp.eq.s32.totalorder %v1098, 3
    %vm1561 = vcmp.eq.s32.totalorder %v1099, 3
    %vm1562 = vcmp.eq.s32.totalorder %v1100, 3
    %vm1563 = vcmp.eq.s32.totalorder %v1101, 3
    %vm1564 = vcmp.eq.s32.totalorder %v1102, 3
    %vm1565 = vcmp.eq.s32.totalorder %v1103, 3
    %vm1566 = vcmp.eq.s32.totalorder %v1104, 3
    %vm1567 = vcmp.eq.s32.totalorder %v1105, 3
    %vm1568 = vcmp.eq.s32.totalorder %v1106, 3
    %vm1569 = vcmp.eq.s32.totalorder %v1107, 3
    %vm1570 = vcmp.eq.s32.totalorder %v1108, 3
    %vm1571 = vcmp.eq.s32.totalorder %v1109, 3
    %vm1572 = vcmp.eq.s32.totalorder %v1110, 3
    %vm1573 = vcmp.eq.s32.totalorder %v1111, 3
    %vm1574 = vcmp.eq.s32.totalorder %v1112, 3
    %vm1575 = vcmp.eq.s32.totalorder %v1113, 3
    %vm1576 = vcmp.eq.s32.totalorder %v1114, 3
    %vm1577 = vcmp.eq.s32.totalorder %v1115, 3
    %vm1578 = vcmp.eq.s32.totalorder %v1116, 3
    %vm1579 = vcmp.eq.s32.totalorder %v1117, 3
    %vm1580 = vcmp.eq.s32.totalorder %v1118, 3
    %vm1581 = vcmp.eq.s32.totalorder %v1119, 3
    %vm1582 = vcmp.eq.s32.totalorder %v1120, 3
    %vm1583 = vcmp.eq.s32.totalorder %v1121, 3
    %vm1584 = vcmp.eq.s32.totalorder %v1122, 3
    %vm1585 = vcmp.eq.s32.totalorder %v1123, 3
    %vm1586 = vcmp.eq.s32.totalorder %v1124, 3
    %v1587 = vlaneseq
    %v1588 = vshrl.u32 %v1587, 7
    %v1589 = vsub.s32 3, %v1588
    %v1590 = vrot.slane %v1126, %v1589
    %v1591 = vsel %vm1523, %v1590, %v1459
    %v1592 = vsel %vm1524, %v1590, %v1460
    %v1593 = vsel %vm1525, %v1590, %v1461
    %v1594 = vsel %vm1526, %v1590, %v1462
    %v1595 = vsel %vm1527, %v1590, %v1463
    %v1596 = vsel %vm1528, %v1590, %v1464
    %v1597 = vsel %vm1529, %v1590, %v1465
    %v1598 = vsel %vm1530, %v1590, %v1466
    %v1599 = vsel %vm1531, %v1590, %v1467
    %v1600 = vsel %vm1532, %v1590, %v1468
    %v1601 = vsel %vm1533, %v1590, %v1469
    %v1602 = vsel %vm1534, %v1590, %v1470
    %v1603 = vsel %vm1535, %v1590, %v1471
    %v1604 = vsel %vm1536, %v1590, %v1472
    %v1605 = vsel %vm1537, %v1590, %v1473
    %v1606 = vsel %vm1538, %v1590, %v1474
    %v1607 = vsel %vm1539, %v1590, %v1475
    %v1608 = vsel %vm1540, %v1590, %v1476
    %v1609 = vsel %vm1541, %v1590, %v1477
    %v1610 = vsel %vm1542, %v1590, %v1478
    %v1611 = vsel %vm1543, %v1590, %v1479
    %v1612 = vsel %vm1544, %v1590, %v1480
    %v1613 = vsel %vm1545, %v1590, %v1481
    %v1614 = vsel %vm1546, %v1590, %v1482
    %v1615 = vsel %vm1547, %v1590, %v1483
    %v1616 = vsel %vm1548, %v1590, %v1484
    %v1617 = vsel %vm1549, %v1590, %v1485
    %v1618 = vsel %vm1550, %v1590, %v1486
    %v1619 = vsel %vm1551, %v1590, %v1487
    %v1620 = vsel %vm1552, %v1590, %v1488
    %v1621 = vsel %vm1553, %v1590, %v1489
    %v1622 = vsel %vm1554, %v1590, %v1490
    %v1623 = vsel %vm1555, %v1590, %v1491
    %v1624 = vsel %vm1556, %v1590, %v1492
    %v1625 = vsel %vm1557, %v1590, %v1493
    %v1626 = vsel %vm1558, %v1590, %v1494
    %v1627 = vsel %vm1559, %v1590, %v1495
    %v1628 = vsel %vm1560, %v1590, %v1496
    %v1629 = vsel %vm1561, %v1590, %v1497
    %v1630 = vsel %vm1562, %v1590, %v1498
    %v1631 = vsel %vm1563, %v1590, %v1499
    %v1632 = vsel %vm1564, %v1590, %v1500
    %v1633 = vsel %vm1565, %v1590, %v1501
    %v1634 = vsel %vm1566, %v1590, %v1502
    %v1635 = vsel %vm1567, %v1590, %v1503
    %v1636 = vsel %vm1568, %v1590, %v1504
    %v1637 = vsel %vm1569, %v1590, %v1505
    %v1638 = vsel %vm1570, %v1590, %v1506
    %v1639 = vsel %vm1571, %v1590, %v1507
    %v1640 = vsel %vm1572, %v1590, %v1508
    %v1641 = vsel %vm1573, %v1590, %v1509
    %v1642 = vsel %vm1574, %v1590, %v1510
    %v1643 = vsel %vm1575, %v1590, %v1511
    %v1644 = vsel %vm1576, %v1590, %v1512
    %v1645 = vsel %vm1577, %v1590, %v1513
    %v1646 = vsel %vm1578, %v1590, %v1514
    %v1647 = vsel %vm1579, %v1590, %v1515
    %v1648 = vsel %vm1580, %v1590, %v1516
    %v1649 = vsel %vm1581, %v1590, %v1517
    %v1650 = vsel %vm1582, %v1590, %v1518
    %v1651 = vsel %vm1583, %v1590, %v1519
    %v1652 = vsel %vm1584, %v1590, %v1520
    %v1653 = vsel %vm1585, %v1590, %v1521
    %v1654 = vsel %vm1586, %v1590, %v1522
    %v1655 = vmul.u32 %v1061, 2
    %v1656 = vmul.u32 %v1062, 2
    %v1657 = vmul.u32 %v1063, 2
    %v1658 = vmul.u32 %v1064, 2
    %v1659 = vmul.u32 %v1065, 2
    %v1660 = vmul.u32 %v1066, 2
    %v1661 = vmul.u32 %v1067, 2
    %v1662 = vmul.u32 %v1068, 2
    %v1663 = vmul.u32 %v1069, 2
    %v1664 = vmul.u32 %v1070, 2
    %v1665 = vmul.u32 %v1071, 2
    %v1666 = vmul.u32 %v1072, 2
    %v1667 = vmul.u32 %v1073, 2
    %v1668 = vmul.u32 %v1074, 2
    %v1669 = vmul.u32 %v1075, 2
    %v1670 = vmul.u32 %v1076, 2
    %v1671 = vmul.u32 %v1077, 2
    %v1672 = vmul.u32 %v1078, 2
    %v1673 = vmul.u32 %v1079, 2
    %v1674 = vmul.u32 %v1080, 2
    %v1675 = vmul.u32 %v1081, 2
    %v1676 = vmul.u32 %v1082, 2
    %v1677 = vmul.u32 %v1083, 2
    %v1678 = vmul.u32 %v1084, 2
    %v1679 = vmul.u32 %v1085, 2
    %v1680 = vmul.u32 %v1086, 2
    %v1681 = vmul.u32 %v1087, 2
    %v1682 = vmul.u32 %v1088, 2
    %v1683 = vmul.u32 %v1089, 2
    %v1684 = vmul.u32 %v1090, 2
    %v1685 = vmul.u32 %v1091, 2
    %v1686 = vmul.u32 %v1092, 2
    %v1687 = vmul.u32 %v1093, 2
    %v1688 = vmul.u32 %v1094, 2
    %v1689 = vmul.u32 %v1095, 2
    %v1690 = vmul.u32 %v1096, 2
    %v1691 = vmul.u32 %v1097, 2
    %v1692 = vmul.u32 %v1098, 2
    %v1693 = vmul.u32 %v1099, 2
    %v1694 = vmul.u32 %v1100, 2
    %v1695 = vmul.u32 %v1101, 2
    %v1696 = vmul.u32 %v1102, 2
    %v1697 = vmul.u32 %v1103, 2
    %v1698 = vmul.u32 %v1104, 2
    %v1699 = vmul.u32 %v1105, 2
    %v1700 = vmul.u32 %v1106, 2
    %v1701 = vmul.u32 %v1107, 2
    %v1702 = vmul.u32 %v1108, 2
    %v1703 = vmul.u32 %v1109, 2
    %v1704 = vmul.u32 %v1110, 2
    %v1705 = vmul.u32 %v1111, 2
    %v1706 = vmul.u32 %v1112, 2
    %v1707 = vmul.u32 %v1113, 2
    %v1708 = vmul.u32 %v1114, 2
    %v1709 = vmul.u32 %v1115, 2
    %v1710 = vmul.u32 %v1116, 2
    %v1711 = vmul.u32 %v1117, 2
    %v1712 = vmul.u32 %v1118, 2
    %v1713 = vmul.u32 %v1119, 2
    %v1714 = vmul.u32 %v1120, 2
    %v1715 = vmul.u32 %v1121, 2
    %v1716 = vmul.u32 %v1122, 2
    %v1717 = vmul.u32 %v1123, 2
    %v1718 = vmul.u32 %v1124, 2
    %1783 = vrot.lane.b32.xlu0 %v1591, 16
    %v1784 = vpop.permute.xlu0 %1783
    %1785 = vrot.lane.b32.xlu0 %v1592, 16
    %v1786 = vpop.permute.xlu0 %1785
    %1787 = vrot.lane.b32.xlu0 %v1593, 16
    %v1788 = vpop.permute.xlu0 %1787
    %1789 = vrot.lane.b32.xlu0 %v1594, 16
    %v1790 = vpop.permute.xlu0 %1789
    %1791 = vrot.lane.b32.xlu0 %v1595, 16
    %v1792 = vpop.permute.xlu0 %1791
    %1793 = vrot.lane.b32.xlu0 %v1596, 16
    %v1794 = vpop.permute.xlu0 %1793
    %1795 = vrot.lane.b32.xlu0 %v1597, 16
    %v1796 = vpop.permute.xlu0 %1795
    %1797 = vrot.lane.b32.xlu0 %v1598, 16
    %v1798 = vpop.permute.xlu0 %1797
    %1799 = vrot.lane.b32.xlu0 %v1599, 16
    %v1800 = vpop.permute.xlu0 %1799
    %1801 = vrot.lane.b32.xlu0 %v1600, 16
    %v1802 = vpop.permute.xlu0 %1801
    %1803 = vrot.lane.b32.xlu0 %v1601, 16
    %v1804 = vpop.permute.xlu0 %1803
    %1805 = vrot.lane.b32.xlu0 %v1602, 16
    %v1806 = vpop.permute.xlu0 %1805
    %1807 = vrot.lane.b32.xlu0 %v1603, 16
    %v1808 = vpop.permute.xlu0 %1807
    %1809 = vrot.lane.b32.xlu0 %v1604, 16
    %v1810 = vpop.permute.xlu0 %1809
    %1811 = vrot.lane.b32.xlu0 %v1605, 16
    %v1812 = vpop.permute.xlu0 %1811
    %1813 = vrot.lane.b32.xlu0 %v1606, 16
    %v1814 = vpop.permute.xlu0 %1813
    %1815 = vrot.lane.b32.xlu0 %v1607, 16
    %v1816 = vpop.permute.xlu0 %1815
    %1817 = vrot.lane.b32.xlu0 %v1608, 16
    %v1818 = vpop.permute.xlu0 %1817
    %1819 = vrot.lane.b32.xlu0 %v1609, 16
    %v1820 = vpop.permute.xlu0 %1819
    %1821 = vrot.lane.b32.xlu0 %v1610, 16
    %v1822 = vpop.permute.xlu0 %1821
    %1823 = vrot.lane.b32.xlu0 %v1611, 16
    %v1824 = vpop.permute.xlu0 %1823
    %1825 = vrot.lane.b32.xlu0 %v1612, 16
    %v1826 = vpop.permute.xlu0 %1825
    %1827 = vrot.lane.b32.xlu0 %v1613, 16
    %v1828 = vpop.permute.xlu0 %1827
    %1829 = vrot.lane.b32.xlu0 %v1614, 16
    %v1830 = vpop.permute.xlu0 %1829
    %1831 = vrot.lane.b32.xlu0 %v1615, 16
    %v1832 = vpop.permute.xlu0 %1831
    %1833 = vrot.lane.b32.xlu0 %v1616, 16
    %v1834 = vpop.permute.xlu0 %1833
    %1835 = vrot.lane.b32.xlu0 %v1617, 16
    %v1836 = vpop.permute.xlu0 %1835
    %1837 = vrot.lane.b32.xlu0 %v1618, 16
    %v1838 = vpop.permute.xlu0 %1837
    %1839 = vrot.lane.b32.xlu0 %v1619, 16
    %v1840 = vpop.permute.xlu0 %1839
    %1841 = vrot.lane.b32.xlu0 %v1620, 16
    %v1842 = vpop.permute.xlu0 %1841
    %1843 = vrot.lane.b32.xlu0 %v1621, 16
    %v1844 = vpop.permute.xlu0 %1843
    %1845 = vrot.lane.b32.xlu0 %v1622, 16
    %v1846 = vpop.permute.xlu0 %1845
    %1847 = vrot.lane.b32.xlu0 %v1623, 16
    %v1848 = vpop.permute.xlu0 %1847
    %1849 = vrot.lane.b32.xlu0 %v1624, 16
    %v1850 = vpop.permute.xlu0 %1849
    %1851 = vrot.lane.b32.xlu0 %v1625, 16
    %v1852 = vpop.permute.xlu0 %1851
    %1853 = vrot.lane.b32.xlu0 %v1626, 16
    %v1854 = vpop.permute.xlu0 %1853
    %1855 = vrot.lane.b32.xlu0 %v1627, 16
    %v1856 = vpop.permute.xlu0 %1855
    %1857 = vrot.lane.b32.xlu0 %v1628, 16
    %v1858 = vpop.permute.xlu0 %1857
    %1859 = vrot.lane.b32.xlu0 %v1629, 16
    %v1860 = vpop.permute.xlu0 %1859
    %1861 = vrot.lane.b32.xlu0 %v1630, 16
    %v1862 = vpop.permute.xlu0 %1861
    %1863 = vrot.lane.b32.xlu0 %v1631, 16
    %v1864 = vpop.permute.xlu0 %1863
    %1865 = vrot.lane.b32.xlu0 %v1632, 16
    %v1866 = vpop.permute.xlu0 %1865
    %1867 = vrot.lane.b32.xlu0 %v1633, 16
    %v1868 = vpop.permute.xlu0 %1867
    %1869 = vrot.lane.b32.xlu0 %v1634, 16
    %v1870 = vpop.permute.xlu0 %1869
    %1871 = vrot.lane.b32.xlu0 %v1635, 16
    %v1872 = vpop.permute.xlu0 %1871
    %1873 = vrot.lane.b32.xlu0 %v1636, 16
    %v1874 = vpop.permute.xlu0 %1873
    %1875 = vrot.lane.b32.xlu0 %v1637, 16
    %v1876 = vpop.permute.xlu0 %1875
    %1877 = vrot.lane.b32.xlu0 %v1638, 16
    %v1878 = vpop.permute.xlu0 %1877
    %1879 = vrot.lane.b32.xlu0 %v1639, 16
    %v1880 = vpop.permute.xlu0 %1879
    %1881 = vrot.lane.b32.xlu0 %v1640, 16
    %v1882 = vpop.permute.xlu0 %1881
    %1883 = vrot.lane.b32.xlu0 %v1641, 16
    %v1884 = vpop.permute.xlu0 %1883
    %1885 = vrot.lane.b32.xlu0 %v1642, 16
    %v1886 = vpop.permute.xlu0 %1885
    %1887 = vrot.lane.b32.xlu0 %v1643, 16
    %v1888 = vpop.permute.xlu0 %1887
    %1889 = vrot.lane.b32.xlu0 %v1644, 16
    %v1890 = vpop.permute.xlu0 %1889
    %1891 = vrot.lane.b32.xlu0 %v1645, 16
    %v1892 = vpop.permute.xlu0 %1891
    %1893 = vrot.lane.b32.xlu0 %v1646, 16
    %v1894 = vpop.permute.xlu0 %1893
    %1895 = vrot.lane.b32.xlu0 %v1647, 16
    %v1896 = vpop.permute.xlu0 %1895
    %1897 = vrot.lane.b32.xlu0 %v1648, 16
    %v1898 = vpop.permute.xlu0 %1897
    %1899 = vrot.lane.b32.xlu0 %v1649, 16
    %v1900 = vpop.permute.xlu0 %1899
    %1901 = vrot.lane.b32.xlu0 %v1650, 16
    %v1902 = vpop.permute.xlu0 %1901
    %1903 = vrot.lane.b32.xlu0 %v1651, 16
    %v1904 = vpop.permute.xlu0 %1903
    %1905 = vrot.lane.b32.xlu0 %v1652, 16
    %v1906 = vpop.permute.xlu0 %1905
    %1907 = vrot.lane.b32.xlu0 %v1653, 16
    %v1908 = vpop.permute.xlu0 %1907
    %1909 = vrot.lane.b32.xlu0 %v1654, 16
    %v1910 = vpop.permute.xlu0 %1909
    %vm1975 = vcmp.gt.f32.partialorder %v22, %v1784
    %vm1976 = vcmp.gt.f32.partialorder %v23, %v1786
    %vm1977 = vcmp.gt.f32.partialorder %v24, %v1788
    %vm1978 = vcmp.gt.f32.partialorder %v25, %v1790
    %vm1979 = vcmp.gt.f32.partialorder %v26, %v1792
    %vm1980 = vcmp.gt.f32.partialorder %v27, %v1794
    %vm1981 = vcmp.gt.f32.partialorder %v28, %v1796
    %vm1982 = vcmp.gt.f32.partialorder %v29, %v1798
    %vm1983 = vcmp.gt.f32.partialorder %v30, %v1800
    %vm1984 = vcmp.gt.f32.partialorder %v31, %v1802
    %vm1985 = vcmp.gt.f32.partialorder %v32, %v1804
    %vm1986 = vcmp.gt.f32.partialorder %v33, %v1806
    %vm1987 = vcmp.gt.f32.partialorder %v34, %v1808
    %vm1988 = vcmp.gt.f32.partialorder %v35, %v1810
    %vm1989 = vcmp.gt.f32.partialorder %v36, %v1812
    %vm1990 = vcmp.gt.f32.partialorder %v37, %v1814
    %vm1991 = vcmp.gt.f32.partialorder %v38, %v1816
    %vm1992 = vcmp.gt.f32.partialorder %v39, %v1818
    %vm1993 = vcmp.gt.f32.partialorder %v40, %v1820
    %vm1994 = vcmp.gt.f32.partialorder %v41, %v1822
    %vm1995 = vcmp.gt.f32.partialorder %v42, %v1824
    %vm1996 = vcmp.gt.f32.partialorder %v43, %v1826
    %vm1997 = vcmp.gt.f32.partialorder %v44, %v1828
    %vm1998 = vcmp.gt.f32.partialorder %v45, %v1830
    %vm1999 = vcmp.gt.f32.partialorder %v46, %v1832
    %vm2000 = vcmp.gt.f32.partialorder %v47, %v1834
    %vm2001 = vcmp.gt.f32.partialorder %v48, %v1836
    %vm2002 = vcmp.gt.f32.partialorder %v49, %v1838
    %vm2003 = vcmp.gt.f32.partialorder %v50, %v1840
    %vm2004 = vcmp.gt.f32.partialorder %v51, %v1842
    %vm2005 = vcmp.gt.f32.partialorder %v52, %v1844
    %vm2006 = vcmp.gt.f32.partialorder %v53, %v1846
    %vm2007 = vcmp.gt.f32.partialorder %v54, %v1848
    %vm2008 = vcmp.gt.f32.partialorder %v55, %v1850
    %vm2009 = vcmp.gt.f32.partialorder %v56, %v1852
    %vm2010 = vcmp.gt.f32.partialorder %v57, %v1854
    %vm2011 = vcmp.gt.f32.partialorder %v58, %v1856
    %vm2012 = vcmp.gt.f32.partialorder %v59, %v1858
    %vm2013 = vcmp.gt.f32.partialorder %v60, %v1860
    %vm2014 = vcmp.gt.f32.partialorder %v61, %v1862
    %vm2015 = vcmp.gt.f32.partialorder %v62, %v1864
    %vm2016 = vcmp.gt.f32.partialorder %v63, %v1866
    %vm2017 = vcmp.gt.f32.partialorder %v64, %v1868
    %vm2018 = vcmp.gt.f32.partialorder %v65, %v1870
    %vm2019 = vcmp.gt.f32.partialorder %v66, %v1872
    %vm2020 = vcmp.gt.f32.partialorder %v67, %v1874
    %vm2021 = vcmp.gt.f32.partialorder %v68, %v1876
    %vm2022 = vcmp.gt.f32.partialorder %v69, %v1878
    %vm2023 = vcmp.gt.f32.partialorder %v70, %v1880
    %vm2024 = vcmp.gt.f32.partialorder %v71, %v1882
    %vm2025 = vcmp.gt.f32.partialorder %v72, %v1884
    %vm2026 = vcmp.gt.f32.partialorder %v73, %v1886
    %vm2027 = vcmp.gt.f32.partialorder %v74, %v1888
    %vm2028 = vcmp.gt.f32.partialorder %v75, %v1890
    %vm2029 = vcmp.gt.f32.partialorder %v76, %v1892
    %vm2030 = vcmp.gt.f32.partialorder %v77, %v1894
    %vm2031 = vcmp.gt.f32.partialorder %v78, %v1896
    %vm2032 = vcmp.gt.f32.partialorder %v79, %v1898
    %vm2033 = vcmp.gt.f32.partialorder %v80, %v1900
    %vm2034 = vcmp.gt.f32.partialorder %v81, %v1902
    %vm2035 = vcmp.gt.f32.partialorder %v82, %v1904
    %vm2036 = vcmp.gt.f32.partialorder %v83, %v1906
    %vm2037 = vcmp.gt.f32.partialorder %v84, %v1908
    %vm2038 = vcmp.gt.f32.partialorder %v85, %v1910
    %v2039 = vsel %vm1975, 1, 0
    %v2040 = vsel %vm1976, 1, 0
    %v2041 = vsel %vm1977, 1, 0
    %v2042 = vsel %vm1978, 1, 0
    %v2043 = vsel %vm1979, 1, 0
    %v2044 = vsel %vm1980, 1, 0
    %v2045 = vsel %vm1981, 1, 0
    %v2046 = vsel %vm1982, 1, 0
    %v2047 = vsel %vm1983, 1, 0
    %v2048 = vsel %vm1984, 1, 0
    %v2049 = vsel %vm1985, 1, 0
    %v2050 = vsel %vm1986, 1, 0
    %v2051 = vsel %vm1987, 1, 0
    %v2052 = vsel %vm1988, 1, 0
    %v2053 = vsel %vm1989, 1, 0
    %v2054 = vsel %vm1990, 1, 0
    %v2055 = vsel %vm1991, 1, 0
    %v2056 = vsel %vm1992, 1, 0
    %v2057 = vsel %vm1993, 1, 0
    %v2058 = vsel %vm1994, 1, 0
    %v2059 = vsel %vm1995, 1, 0
    %v2060 = vsel %vm1996, 1, 0
    %v2061 = vsel %vm1997, 1, 0
    %v2062 = vsel %vm1998, 1, 0
    %v2063 = vsel %vm1999, 1, 0
    %v2064 = vsel %vm2000, 1, 0
    %v2065 = vsel %vm2001, 1, 0
    %v2066 = vsel %vm2002, 1, 0
    %v2067 = vsel %vm2003, 1, 0
    %v2068 = vsel %vm2004, 1, 0
    %v2069 = vsel %vm2005, 1, 0
    %v2070 = vsel %vm2006, 1, 0
    %v2071 = vsel %vm2007, 1, 0
    %v2072 = vsel %vm2008, 1, 0
    %v2073 = vsel %vm2009, 1, 0
    %v2074 = vsel %vm2010, 1, 0
    %v2075 = vsel %vm2011, 1, 0
    %v2076 = vsel %vm2012, 1, 0
    %v2077 = vsel %vm2013, 1, 0
    %v2078 = vsel %vm2014, 1, 0
    %v2079 = vsel %vm2015, 1, 0
    %v2080 = vsel %vm2016, 1, 0
    %v2081 = vsel %vm2017, 1, 0
    %v2082 = vsel %vm2018, 1, 0
    %v2083 = vsel %vm2019, 1, 0
    %v2084 = vsel %vm2020, 1, 0
    %v2085 = vsel %vm2021, 1, 0
    %v2086 = vsel %vm2022, 1, 0
    %v2087 = vsel %vm2023, 1, 0
    %v2088 = vsel %vm2024, 1, 0
    %v2089 = vsel %vm2025, 1, 0
    %v2090 = vsel %vm2026, 1, 0
    %v2091 = vsel %vm2027, 1, 0
    %v2092 = vsel %vm2028, 1, 0
    %v2093 = vsel %vm2029, 1, 0
    %v2094 = vsel %vm2030, 1, 0
    %v2095 = vsel %vm2031, 1, 0
    %v2096 = vsel %vm2032, 1, 0
    %v2097 = vsel %vm2033, 1, 0
    %v2098 = vsel %vm2034, 1, 0
    %v2099 = vsel %vm2035, 1, 0
    %v2100 = vsel %vm2036, 1, 0
    %v2101 = vsel %vm2037, 1, 0
    %v2102 = vsel %vm2038, 1, 0
    %2103 = vrot.lane.b32.xlu0 %v2039, 112
    %v2104 = vpop.permute.xlu0 %2103
    %2105 = vrot.lane.b32.xlu0 %v2040, 112
    %v2106 = vpop.permute.xlu0 %2105
    %2107 = vrot.lane.b32.xlu0 %v2041, 112
    %v2108 = vpop.permute.xlu0 %2107
    %2109 = vrot.lane.b32.xlu0 %v2042, 112
    %v2110 = vpop.permute.xlu0 %2109
    %2111 = vrot.lane.b32.xlu0 %v2043, 112
    %v2112 = vpop.permute.xlu0 %2111
    %2113 = vrot.lane.b32.xlu0 %v2044, 112
    %v2114 = vpop.permute.xlu0 %2113
    %2115 = vrot.lane.b32.xlu0 %v2045, 112
    %v2116 = vpop.permute.xlu0 %2115
    %2117 = vrot.lane.b32.xlu0 %v2046, 112
    %v2118 = vpop.permute.xlu0 %2117
    %2119 = vrot.lane.b32.xlu0 %v2047, 112
    %v2120 = vpop.permute.xlu0 %2119
    %2121 = vrot.lane.b32.xlu0 %v2048, 112
    %v2122 = vpop.permute.xlu0 %2121
    %2123 = vrot.lane.b32.xlu0 %v2049, 112
    %v2124 = vpop.permute.xlu0 %2123
    %2125 = vrot.lane.b32.xlu0 %v2050, 112
    %v2126 = vpop.permute.xlu0 %2125
    %2127 = vrot.lane.b32.xlu0 %v2051, 112
    %v2128 = vpop.permute.xlu0 %2127
    %2129 = vrot.lane.b32.xlu0 %v2052, 112
    %v2130 = vpop.permute.xlu0 %2129
    %2131 = vrot.lane.b32.xlu0 %v2053, 112
    %v2132 = vpop.permute.xlu0 %2131
    %2133 = vrot.lane.b32.xlu0 %v2054, 112
    %v2134 = vpop.permute.xlu0 %2133
    %2135 = vrot.lane.b32.xlu0 %v2055, 112
    %v2136 = vpop.permute.xlu0 %2135
    %2137 = vrot.lane.b32.xlu0 %v2056, 112
    %v2138 = vpop.permute.xlu0 %2137
    %2139 = vrot.lane.b32.xlu0 %v2057, 112
    %v2140 = vpop.permute.xlu0 %2139
    %2141 = vrot.lane.b32.xlu0 %v2058, 112
    %v2142 = vpop.permute.xlu0 %2141
    %2143 = vrot.lane.b32.xlu0 %v2059, 112
    %v2144 = vpop.permute.xlu0 %2143
    %2145 = vrot.lane.b32.xlu0 %v2060, 112
    %v2146 = vpop.permute.xlu0 %2145
    %2147 = vrot.lane.b32.xlu0 %v2061, 112
    %v2148 = vpop.permute.xlu0 %2147
    %2149 = vrot.lane.b32.xlu0 %v2062, 112
    %v2150 = vpop.permute.xlu0 %2149
    %2151 = vrot.lane.b32.xlu0 %v2063, 112
    %v2152 = vpop.permute.xlu0 %2151
    %2153 = vrot.lane.b32.xlu0 %v2064, 112
    %v2154 = vpop.permute.xlu0 %2153
    %2155 = vrot.lane.b32.xlu0 %v2065, 112
    %v2156 = vpop.permute.xlu0 %2155
    %2157 = vrot.lane.b32.xlu0 %v2066, 112
    %v2158 = vpop.permute.xlu0 %2157
    %2159 = vrot.lane.b32.xlu0 %v2067, 112
    %v2160 = vpop.permute.xlu0 %2159
    %2161 = vrot.lane.b32.xlu0 %v2068, 112
    %v2162 = vpop.permute.xlu0 %2161
    %2163 = vrot.lane.b32.xlu0 %v2069, 112
    %v2164 = vpop.permute.xlu0 %2163
    %2165 = vrot.lane.b32.xlu0 %v2070, 112
    %v2166 = vpop.permute.xlu0 %2165
    %2167 = vrot.lane.b32.xlu0 %v2071, 112
    %v2168 = vpop.permute.xlu0 %2167
    %2169 = vrot.lane.b32.xlu0 %v2072, 112
    %v2170 = vpop.permute.xlu0 %2169
    %2171 = vrot.lane.b32.xlu0 %v2073, 112
    %v2172 = vpop.permute.xlu0 %2171
    %2173 = vrot.lane.b32.xlu0 %v2074, 112
    %v2174 = vpop.permute.xlu0 %2173
    %2175 = vrot.lane.b32.xlu0 %v2075, 112
    %v2176 = vpop.permute.xlu0 %2175
    %2177 = vrot.lane.b32.xlu0 %v2076, 112
    %v2178 = vpop.permute.xlu0 %2177
    %2179 = vrot.lane.b32.xlu0 %v2077, 112
    %v2180 = vpop.permute.xlu0 %2179
    %2181 = vrot.lane.b32.xlu0 %v2078, 112
    %v2182 = vpop.permute.xlu0 %2181
    %2183 = vrot.lane.b32.xlu0 %v2079, 112
    %v2184 = vpop.permute.xlu0 %2183
    %2185 = vrot.lane.b32.xlu0 %v2080, 112
    %v2186 = vpop.permute.xlu0 %2185
    %2187 = vrot.lane.b32.xlu0 %v2081, 112
    %v2188 = vpop.permute.xlu0 %2187
    %2189 = vrot.lane.b32.xlu0 %v2082, 112
    %v2190 = vpop.permute.xlu0 %2189
    %2191 = vrot.lane.b32.xlu0 %v2083, 112
    %v2192 = vpop.permute.xlu0 %2191
    %2193 = vrot.lane.b32.xlu0 %v2084, 112
    %v2194 = vpop.permute.xlu0 %2193
    %2195 = vrot.lane.b32.xlu0 %v2085, 112
    %v2196 = vpop.permute.xlu0 %2195
    %2197 = vrot.lane.b32.xlu0 %v2086, 112
    %v2198 = vpop.permute.xlu0 %2197
    %2199 = vrot.lane.b32.xlu0 %v2087, 112
    %v2200 = vpop.permute.xlu0 %2199
    %2201 = vrot.lane.b32.xlu0 %v2088, 112
    %v2202 = vpop.permute.xlu0 %2201
    %2203 = vrot.lane.b32.xlu0 %v2089, 112
    %v2204 = vpop.permute.xlu0 %2203
    %2205 = vrot.lane.b32.xlu0 %v2090, 112
    %v2206 = vpop.permute.xlu0 %2205
    %2207 = vrot.lane.b32.xlu0 %v2091, 112
    %v2208 = vpop.permute.xlu0 %2207
    %2209 = vrot.lane.b32.xlu0 %v2092, 112
    %v2210 = vpop.permute.xlu0 %2209
    %2211 = vrot.lane.b32.xlu0 %v2093, 112
    %v2212 = vpop.permute.xlu0 %2211
    %2213 = vrot.lane.b32.xlu0 %v2094, 112
    %v2214 = vpop.permute.xlu0 %2213
    %2215 = vrot.lane.b32.xlu0 %v2095, 112
    %v2216 = vpop.permute.xlu0 %2215
    %2217 = vrot.lane.b32.xlu0 %v2096, 112
    %v2218 = vpop.permute.xlu0 %2217
    %2219 = vrot.lane.b32.xlu0 %v2097, 112
    %v2220 = vpop.permute.xlu0 %2219
    %2221 = vrot.lane.b32.xlu0 %v2098, 112
    %v2222 = vpop.permute.xlu0 %2221
    %2223 = vrot.lane.b32.xlu0 %v2099, 112
    %v2224 = vpop.permute.xlu0 %2223
    %2225 = vrot.lane.b32.xlu0 %v2100, 112
    %v2226 = vpop.permute.xlu0 %2225
    %2227 = vrot.lane.b32.xlu0 %v2101, 112
    %v2228 = vpop.permute.xlu0 %2227
    %2229 = vrot.lane.b32.xlu0 %v2102, 112
    %v2230 = vpop.permute.xlu0 %2229
    %v2231 = vadd.s32 %v1655, %v2104
    %v2232 = vadd.s32 %v1656, %v2106
    %v2233 = vadd.s32 %v1657, %v2108
    %v2234 = vadd.s32 %v1658, %v2110
    %v2235 = vadd.s32 %v1659, %v2112
    %v2236 = vadd.s32 %v1660, %v2114
    %v2237 = vadd.s32 %v1661, %v2116
    %v2238 = vadd.s32 %v1662, %v2118
    %v2239 = vadd.s32 %v1663, %v2120
    %v2240 = vadd.s32 %v1664, %v2122
    %v2241 = vadd.s32 %v1665, %v2124
    %v2242 = vadd.s32 %v1666, %v2126
    %v2243 = vadd.s32 %v1667, %v2128
    %v2244 = vadd.s32 %v1668, %v2130
    %v2245 = vadd.s32 %v1669, %v2132
    %v2246 = vadd.s32 %v1670, %v2134
    %v2247 = vadd.s32 %v1671, %v2136
    %v2248 = vadd.s32 %v1672, %v2138
    %v2249 = vadd.s32 %v1673, %v2140
    %v2250 = vadd.s32 %v1674, %v2142
    %v2251 = vadd.s32 %v1675, %v2144
    %v2252 = vadd.s32 %v1676, %v2146
    %v2253 = vadd.s32 %v1677, %v2148
    %v2254 = vadd.s32 %v1678, %v2150
    %v2255 = vadd.s32 %v1679, %v2152
    %v2256 = vadd.s32 %v1680, %v2154
    %v2257 = vadd.s32 %v1681, %v2156
    %v2258 = vadd.s32 %v1682, %v2158
    %v2259 = vadd.s32 %v1683, %v2160
    %v2260 = vadd.s32 %v1684, %v2162
    %v2261 = vadd.s32 %v1685, %v2164
    %v2262 = vadd.s32 %v1686, %v2166
    %v2263 = vadd.s32 %v1687, %v2168
    %v2264 = vadd.s32 %v1688, %v2170
    %v2265 = vadd.s32 %v1689, %v2172
    %v2266 = vadd.s32 %v1690, %v2174
    %v2267 = vadd.s32 %v1691, %v2176
    %v2268 = vadd.s32 %v1692, %v2178
    %v2269 = vadd.s32 %v1693, %v2180
    %v2270 = vadd.s32 %v1694, %v2182
    %v2271 = vadd.s32 %v1695, %v2184
    %v2272 = vadd.s32 %v1696, %v2186
    %v2273 = vadd.s32 %v1697, %v2188
    %v2274 = vadd.s32 %v1698, %v2190
    %v2275 = vadd.s32 %v1699, %v2192
    %v2276 = vadd.s32 %v1700, %v2194
    %v2277 = vadd.s32 %v1701, %v2196
    %v2278 = vadd.s32 %v1702, %v2198
    %v2279 = vadd.s32 %v1703, %v2200
    %v2280 = vadd.s32 %v1704, %v2202
    %v2281 = vadd.s32 %v1705, %v2204
    %v2282 = vadd.s32 %v1706, %v2206
    %v2283 = vadd.s32 %v1707, %v2208
    %v2284 = vadd.s32 %v1708, %v2210
    %v2285 = vadd.s32 %v1709, %v2212
    %v2286 = vadd.s32 %v1710, %v2214
    %v2287 = vadd.s32 %v1711, %v2216
    %v2288 = vadd.s32 %v1712, %v2218
    %v2289 = vadd.s32 %v1713, %v2220
    %v2290 = vadd.s32 %v1714, %v2222
    %v2291 = vadd.s32 %v1715, %v2224
    %v2292 = vadd.s32 %v1716, %v2226
    %v2293 = vadd.s32 %v1717, %v2228
    %v2294 = vadd.s32 %v1718, %v2230
    %s2295 = scalar_lea.vmem %s1, 24
    %v2296 = vld [vmem:[%s2295] sm:$0xff]
    %vm2297 = vcmp.eq.s32.totalorder %v2231, 0
    %vm2298 = vcmp.eq.s32.totalorder %v2232, 0
    %vm2299 = vcmp.eq.s32.totalorder %v2233, 0
    %vm2300 = vcmp.eq.s32.totalorder %v2234, 0
    %vm2301 = vcmp.eq.s32.totalorder %v2235, 0
    %vm2302 = vcmp.eq.s32.totalorder %v2236, 0
    %vm2303 = vcmp.eq.s32.totalorder %v2237, 0
    %vm2304 = vcmp.eq.s32.totalorder %v2238, 0
    %vm2305 = vcmp.eq.s32.totalorder %v2239, 0
    %vm2306 = vcmp.eq.s32.totalorder %v2240, 0
    %vm2307 = vcmp.eq.s32.totalorder %v2241, 0
    %vm2308 = vcmp.eq.s32.totalorder %v2242, 0
    %vm2309 = vcmp.eq.s32.totalorder %v2243, 0
    %vm2310 = vcmp.eq.s32.totalorder %v2244, 0
    %vm2311 = vcmp.eq.s32.totalorder %v2245, 0
    %vm2312 = vcmp.eq.s32.totalorder %v2246, 0
    %vm2313 = vcmp.eq.s32.totalorder %v2247, 0
    %vm2314 = vcmp.eq.s32.totalorder %v2248, 0
    %vm2315 = vcmp.eq.s32.totalorder %v2249, 0
    %vm2316 = vcmp.eq.s32.totalorder %v2250, 0
    %vm2317 = vcmp.eq.s32.totalorder %v2251, 0
    %vm2318 = vcmp.eq.s32.totalorder %v2252, 0
    %vm2319 = vcmp.eq.s32.totalorder %v2253, 0
    %vm2320 = vcmp.eq.s32.totalorder %v2254, 0
    %vm2321 = vcmp.eq.s32.totalorder %v2255, 0
    %vm2322 = vcmp.eq.s32.totalorder %v2256, 0
    %vm2323 = vcmp.eq.s32.totalorder %v2257, 0
    %vm2324 = vcmp.eq.s32.totalorder %v2258, 0
    %vm2325 = vcmp.eq.s32.totalorder %v2259, 0
    %vm2326 = vcmp.eq.s32.totalorder %v2260, 0
    %vm2327 = vcmp.eq.s32.totalorder %v2261, 0
    %vm2328 = vcmp.eq.s32.totalorder %v2262, 0
    %vm2329 = vcmp.eq.s32.totalorder %v2263, 0
    %vm2330 = vcmp.eq.s32.totalorder %v2264, 0
    %vm2331 = vcmp.eq.s32.totalorder %v2265, 0
    %vm2332 = vcmp.eq.s32.totalorder %v2266, 0
    %vm2333 = vcmp.eq.s32.totalorder %v2267, 0
    %vm2334 = vcmp.eq.s32.totalorder %v2268, 0
    %vm2335 = vcmp.eq.s32.totalorder %v2269, 0
    %vm2336 = vcmp.eq.s32.totalorder %v2270, 0
    %vm2337 = vcmp.eq.s32.totalorder %v2271, 0
    %vm2338 = vcmp.eq.s32.totalorder %v2272, 0
    %vm2339 = vcmp.eq.s32.totalorder %v2273, 0
    %vm2340 = vcmp.eq.s32.totalorder %v2274, 0
    %vm2341 = vcmp.eq.s32.totalorder %v2275, 0
    %vm2342 = vcmp.eq.s32.totalorder %v2276, 0
    %vm2343 = vcmp.eq.s32.totalorder %v2277, 0
    %vm2344 = vcmp.eq.s32.totalorder %v2278, 0
    %vm2345 = vcmp.eq.s32.totalorder %v2279, 0
    %vm2346 = vcmp.eq.s32.totalorder %v2280, 0
    %vm2347 = vcmp.eq.s32.totalorder %v2281, 0
    %vm2348 = vcmp.eq.s32.totalorder %v2282, 0
    %vm2349 = vcmp.eq.s32.totalorder %v2283, 0
    %vm2350 = vcmp.eq.s32.totalorder %v2284, 0
    %vm2351 = vcmp.eq.s32.totalorder %v2285, 0
    %vm2352 = vcmp.eq.s32.totalorder %v2286, 0
    %vm2353 = vcmp.eq.s32.totalorder %v2287, 0
    %vm2354 = vcmp.eq.s32.totalorder %v2288, 0
    %vm2355 = vcmp.eq.s32.totalorder %v2289, 0
    %vm2356 = vcmp.eq.s32.totalorder %v2290, 0
    %vm2357 = vcmp.eq.s32.totalorder %v2291, 0
    %vm2358 = vcmp.eq.s32.totalorder %v2292, 0
    %vm2359 = vcmp.eq.s32.totalorder %v2293, 0
    %vm2360 = vcmp.eq.s32.totalorder %v2294, 0
    %v2361 = vlaneseq
    %v2362 = vshrl.u32 %v2361, 7
    %v2363 = vsub.s32 0, %v2362
    %v2364 = vrot.slane %v2296, %v2363
    %v2365 = vsel %vm2297, %v2364, 0.0
    %v2366 = vsel %vm2298, %v2364, 0.0
    %v2367 = vsel %vm2299, %v2364, 0.0
    %v2368 = vsel %vm2300, %v2364, 0.0
    %v2369 = vsel %vm2301, %v2364, 0.0
    %v2370 = vsel %vm2302, %v2364, 0.0
    %v2371 = vsel %vm2303, %v2364, 0.0
    %v2372 = vsel %vm2304, %v2364, 0.0
    %v2373 = vsel %vm2305, %v2364, 0.0
    %v2374 = vsel %vm2306, %v2364, 0.0
    %v2375 = vsel %vm2307, %v2364, 0.0
    %v2376 = vsel %vm2308, %v2364, 0.0
    %v2377 = vsel %vm2309, %v2364, 0.0
    %v2378 = vsel %vm2310, %v2364, 0.0
    %v2379 = vsel %vm2311, %v2364, 0.0
    %v2380 = vsel %vm2312, %v2364, 0.0
    %v2381 = vsel %vm2313, %v2364, 0.0
    %v2382 = vsel %vm2314, %v2364, 0.0
    %v2383 = vsel %vm2315, %v2364, 0.0
    %v2384 = vsel %vm2316, %v2364, 0.0
    %v2385 = vsel %vm2317, %v2364, 0.0
    %v2386 = vsel %vm2318, %v2364, 0.0
    %v2387 = vsel %vm2319, %v2364, 0.0
    %v2388 = vsel %vm2320, %v2364, 0.0
    %v2389 = vsel %vm2321, %v2364, 0.0
    %v2390 = vsel %vm2322, %v2364, 0.0
    %v2391 = vsel %vm2323, %v2364, 0.0
    %v2392 = vsel %vm2324, %v2364, 0.0
    %v2393 = vsel %vm2325, %v2364, 0.0
    %v2394 = vsel %vm2326, %v2364, 0.0
    %v2395 = vsel %vm2327, %v2364, 0.0
    %v2396 = vsel %vm2328, %v2364, 0.0
    %v2397 = vsel %vm2329, %v2364, 0.0
    %v2398 = vsel %vm2330, %v2364, 0.0
    %v2399 = vsel %vm2331, %v2364, 0.0
    %v2400 = vsel %vm2332, %v2364, 0.0
    %v2401 = vsel %vm2333, %v2364, 0.0
    %v2402 = vsel %vm2334, %v2364, 0.0
    %v2403 = vsel %vm2335, %v2364, 0.0
    %v2404 = vsel %vm2336, %v2364, 0.0
    %v2405 = vsel %vm2337, %v2364, 0.0
    %v2406 = vsel %vm2338, %v2364, 0.0
    %v2407 = vsel %vm2339, %v2364, 0.0
    %v2408 = vsel %vm2340, %v2364, 0.0
    %v2409 = vsel %vm2341, %v2364, 0.0
    %v2410 = vsel %vm2342, %v2364, 0.0
    %v2411 = vsel %vm2343, %v2364, 0.0
    %v2412 = vsel %vm2344, %v2364, 0.0
    %v2413 = vsel %vm2345, %v2364, 0.0
    %v2414 = vsel %vm2346, %v2364, 0.0
    %v2415 = vsel %vm2347, %v2364, 0.0
    %v2416 = vsel %vm2348, %v2364, 0.0
    %v2417 = vsel %vm2349, %v2364, 0.0
    %v2418 = vsel %vm2350, %v2364, 0.0
    %v2419 = vsel %vm2351, %v2364, 0.0
    %v2420 = vsel %vm2352, %v2364, 0.0
    %v2421 = vsel %vm2353, %v2364, 0.0
    %v2422 = vsel %vm2354, %v2364, 0.0
    %v2423 = vsel %vm2355, %v2364, 0.0
    %v2424 = vsel %vm2356, %v2364, 0.0
    %v2425 = vsel %vm2357, %v2364, 0.0
    %v2426 = vsel %vm2358, %v2364, 0.0
    %v2427 = vsel %vm2359, %v2364, 0.0
    %v2428 = vsel %vm2360, %v2364, 0.0
    %vm2429 = vcmp.eq.s32.totalorder %v2231, 1
    %vm2430 = vcmp.eq.s32.totalorder %v2232, 1
    %vm2431 = vcmp.eq.s32.totalorder %v2233, 1
    %vm2432 = vcmp.eq.s32.totalorder %v2234, 1
    %vm2433 = vcmp.eq.s32.totalorder %v2235, 1
    %vm2434 = vcmp.eq.s32.totalorder %v2236, 1
    %vm2435 = vcmp.eq.s32.totalorder %v2237, 1
    %vm2436 = vcmp.eq.s32.totalorder %v2238, 1
    %vm2437 = vcmp.eq.s32.totalorder %v2239, 1
    %vm2438 = vcmp.eq.s32.totalorder %v2240, 1
    %vm2439 = vcmp.eq.s32.totalorder %v2241, 1
    %vm2440 = vcmp.eq.s32.totalorder %v2242, 1
    %vm2441 = vcmp.eq.s32.totalorder %v2243, 1
    %vm2442 = vcmp.eq.s32.totalorder %v2244, 1
    %vm2443 = vcmp.eq.s32.totalorder %v2245, 1
    %vm2444 = vcmp.eq.s32.totalorder %v2246, 1
    %vm2445 = vcmp.eq.s32.totalorder %v2247, 1
    %vm2446 = vcmp.eq.s32.totalorder %v2248, 1
    %vm2447 = vcmp.eq.s32.totalorder %v2249, 1
    %vm2448 = vcmp.eq.s32.totalorder %v2250, 1
    %vm2449 = vcmp.eq.s32.totalorder %v2251, 1
    %vm2450 = vcmp.eq.s32.totalorder %v2252, 1
    %vm2451 = vcmp.eq.s32.totalorder %v2253, 1
    %vm2452 = vcmp.eq.s32.totalorder %v2254, 1
    %vm2453 = vcmp.eq.s32.totalorder %v2255, 1
    %vm2454 = vcmp.eq.s32.totalorder %v2256, 1
    %vm2455 = vcmp.eq.s32.totalorder %v2257, 1
    %vm2456 = vcmp.eq.s32.totalorder %v2258, 1
    %vm2457 = vcmp.eq.s32.totalorder %v2259, 1
    %vm2458 = vcmp.eq.s32.totalorder %v2260, 1
    %vm2459 = vcmp.eq.s32.totalorder %v2261, 1
    %vm2460 = vcmp.eq.s32.totalorder %v2262, 1
    %vm2461 = vcmp.eq.s32.totalorder %v2263, 1
    %vm2462 = vcmp.eq.s32.totalorder %v2264, 1
    %vm2463 = vcmp.eq.s32.totalorder %v2265, 1
    %vm2464 = vcmp.eq.s32.totalorder %v2266, 1
    %vm2465 = vcmp.eq.s32.totalorder %v2267, 1
    %vm2466 = vcmp.eq.s32.totalorder %v2268, 1
    %vm2467 = vcmp.eq.s32.totalorder %v2269, 1
    %vm2468 = vcmp.eq.s32.totalorder %v2270, 1
    %vm2469 = vcmp.eq.s32.totalorder %v2271, 1
    %vm2470 = vcmp.eq.s32.totalorder %v2272, 1
    %vm2471 = vcmp.eq.s32.totalorder %v2273, 1
    %vm2472 = vcmp.eq.s32.totalorder %v2274, 1
    %vm2473 = vcmp.eq.s32.totalorder %v2275, 1
    %vm2474 = vcmp.eq.s32.totalorder %v2276, 1
    %vm2475 = vcmp.eq.s32.totalorder %v2277, 1
    %vm2476 = vcmp.eq.s32.totalorder %v2278, 1
    %vm2477 = vcmp.eq.s32.totalorder %v2279, 1
    %vm2478 = vcmp.eq.s32.totalorder %v2280, 1
    %vm2479 = vcmp.eq.s32.totalorder %v2281, 1
    %vm2480 = vcmp.eq.s32.totalorder %v2282, 1
    %vm2481 = vcmp.eq.s32.totalorder %v2283, 1
    %vm2482 = vcmp.eq.s32.totalorder %v2284, 1
    %vm2483 = vcmp.eq.s32.totalorder %v2285, 1
    %vm2484 = vcmp.eq.s32.totalorder %v2286, 1
    %vm2485 = vcmp.eq.s32.totalorder %v2287, 1
    %vm2486 = vcmp.eq.s32.totalorder %v2288, 1
    %vm2487 = vcmp.eq.s32.totalorder %v2289, 1
    %vm2488 = vcmp.eq.s32.totalorder %v2290, 1
    %vm2489 = vcmp.eq.s32.totalorder %v2291, 1
    %vm2490 = vcmp.eq.s32.totalorder %v2292, 1
    %vm2491 = vcmp.eq.s32.totalorder %v2293, 1
    %vm2492 = vcmp.eq.s32.totalorder %v2294, 1
    %v2493 = vlaneseq
    %v2494 = vshrl.u32 %v2493, 7
    %v2495 = vsub.s32 1, %v2494
    %v2496 = vrot.slane %v2296, %v2495
    %v2497 = vsel %vm2429, %v2496, %v2365
    %v2498 = vsel %vm2430, %v2496, %v2366
    %v2499 = vsel %vm2431, %v2496, %v2367
    %v2500 = vsel %vm2432, %v2496, %v2368
    %v2501 = vsel %vm2433, %v2496, %v2369
    %v2502 = vsel %vm2434, %v2496, %v2370
    %v2503 = vsel %vm2435, %v2496, %v2371
    %v2504 = vsel %vm2436, %v2496, %v2372
    %v2505 = vsel %vm2437, %v2496, %v2373
    %v2506 = vsel %vm2438, %v2496, %v2374
    %v2507 = vsel %vm2439, %v2496, %v2375
    %v2508 = vsel %vm2440, %v2496, %v2376
    %v2509 = vsel %vm2441, %v2496, %v2377
    %v2510 = vsel %vm2442, %v2496, %v2378
    %v2511 = vsel %vm2443, %v2496, %v2379
    %v2512 = vsel %vm2444, %v2496, %v2380
    %v2513 = vsel %vm2445, %v2496, %v2381
    %v2514 = vsel %vm2446, %v2496, %v2382
    %v2515 = vsel %vm2447, %v2496, %v2383
    %v2516 = vsel %vm2448, %v2496, %v2384
    %v2517 = vsel %vm2449, %v2496, %v2385
    %v2518 = vsel %vm2450, %v2496, %v2386
    %v2519 = vsel %vm2451, %v2496, %v2387
    %v2520 = vsel %vm2452, %v2496, %v2388
    %v2521 = vsel %vm2453, %v2496, %v2389
    %v2522 = vsel %vm2454, %v2496, %v2390
    %v2523 = vsel %vm2455, %v2496, %v2391
    %v2524 = vsel %vm2456, %v2496, %v2392
    %v2525 = vsel %vm2457, %v2496, %v2393
    %v2526 = vsel %vm2458, %v2496, %v2394
    %v2527 = vsel %vm2459, %v2496, %v2395
    %v2528 = vsel %vm2460, %v2496, %v2396
    %v2529 = vsel %vm2461, %v2496, %v2397
    %v2530 = vsel %vm2462, %v2496, %v2398
    %v2531 = vsel %vm2463, %v2496, %v2399
    %v2532 = vsel %vm2464, %v2496, %v2400
    %v2533 = vsel %vm2465, %v2496, %v2401
    %v2534 = vsel %vm2466, %v2496, %v2402
    %v2535 = vsel %vm2467, %v2496, %v2403
    %v2536 = vsel %vm2468, %v2496, %v2404
    %v2537 = vsel %vm2469, %v2496, %v2405
    %v2538 = vsel %vm2470, %v2496, %v2406
    %v2539 = vsel %vm2471, %v2496, %v2407
    %v2540 = vsel %vm2472, %v2496, %v2408
    %v2541 = vsel %vm2473, %v2496, %v2409
    %v2542 = vsel %vm2474, %v2496, %v2410
    %v2543 = vsel %vm2475, %v2496, %v2411
    %v2544 = vsel %vm2476, %v2496, %v2412
    %v2545 = vsel %vm2477, %v2496, %v2413
    %v2546 = vsel %vm2478, %v2496, %v2414
    %v2547 = vsel %vm2479, %v2496, %v2415
    %v2548 = vsel %vm2480, %v2496, %v2416
    %v2549 = vsel %vm2481, %v2496, %v2417
    %v2550 = vsel %vm2482, %v2496, %v2418
    %v2551 = vsel %vm2483, %v2496, %v2419
    %v2552 = vsel %vm2484, %v2496, %v2420
    %v2553 = vsel %vm2485, %v2496, %v2421
    %v2554 = vsel %vm2486, %v2496, %v2422
    %v2555 = vsel %vm2487, %v2496, %v2423
    %v2556 = vsel %vm2488, %v2496, %v2424
    %v2557 = vsel %vm2489, %v2496, %v2425
    %v2558 = vsel %vm2490, %v2496, %v2426
    %v2559 = vsel %vm2491, %v2496, %v2427
    %v2560 = vsel %vm2492, %v2496, %v2428
    %vm2561 = vcmp.eq.s32.totalorder %v2231, 2
    %vm2562 = vcmp.eq.s32.totalorder %v2232, 2
    %vm2563 = vcmp.eq.s32.totalorder %v2233, 2
    %vm2564 = vcmp.eq.s32.totalorder %v2234, 2
    %vm2565 = vcmp.eq.s32.totalorder %v2235, 2
    %vm2566 = vcmp.eq.s32.totalorder %v2236, 2
    %vm2567 = vcmp.eq.s32.totalorder %v2237, 2
    %vm2568 = vcmp.eq.s32.totalorder %v2238, 2
    %vm2569 = vcmp.eq.s32.totalorder %v2239, 2
    %vm2570 = vcmp.eq.s32.totalorder %v2240, 2
    %vm2571 = vcmp.eq.s32.totalorder %v2241, 2
    %vm2572 = vcmp.eq.s32.totalorder %v2242, 2
    %vm2573 = vcmp.eq.s32.totalorder %v2243, 2
    %vm2574 = vcmp.eq.s32.totalorder %v2244, 2
    %vm2575 = vcmp.eq.s32.totalorder %v2245, 2
    %vm2576 = vcmp.eq.s32.totalorder %v2246, 2
    %vm2577 = vcmp.eq.s32.totalorder %v2247, 2
    %vm2578 = vcmp.eq.s32.totalorder %v2248, 2
    %vm2579 = vcmp.eq.s32.totalorder %v2249, 2
    %vm2580 = vcmp.eq.s32.totalorder %v2250, 2
    %vm2581 = vcmp.eq.s32.totalorder %v2251, 2
    %vm2582 = vcmp.eq.s32.totalorder %v2252, 2
    %vm2583 = vcmp.eq.s32.totalorder %v2253, 2
    %vm2584 = vcmp.eq.s32.totalorder %v2254, 2
    %vm2585 = vcmp.eq.s32.totalorder %v2255, 2
    %vm2586 = vcmp.eq.s32.totalorder %v2256, 2
    %vm2587 = vcmp.eq.s32.totalorder %v2257, 2
    %vm2588 = vcmp.eq.s32.totalorder %v2258, 2
    %vm2589 = vcmp.eq.s32.totalorder %v2259, 2
    %vm2590 = vcmp.eq.s32.totalorder %v2260, 2
    %vm2591 = vcmp.eq.s32.totalorder %v2261, 2
    %vm2592 = vcmp.eq.s32.totalorder %v2262, 2
    %vm2593 = vcmp.eq.s32.totalorder %v2263, 2
    %vm2594 = vcmp.eq.s32.totalorder %v2264, 2
    %vm2595 = vcmp.eq.s32.totalorder %v2265, 2
    %vm2596 = vcmp.eq.s32.totalorder %v2266, 2
    %vm2597 = vcmp.eq.s32.totalorder %v2267, 2
    %vm2598 = vcmp.eq.s32.totalorder %v2268, 2
    %vm2599 = vcmp.eq.s32.totalorder %v2269, 2
    %vm2600 = vcmp.eq.s32.totalorder %v2270, 2
    %vm2601 = vcmp.eq.s32.totalorder %v2271, 2
    %vm2602 = vcmp.eq.s32.totalorder %v2272, 2
    %vm2603 = vcmp.eq.s32.totalorder %v2273, 2
    %vm2604 = vcmp.eq.s32.totalorder %v2274, 2
    %vm2605 = vcmp.eq.s32.totalorder %v2275, 2
    %vm2606 = vcmp.eq.s32.totalorder %v2276, 2
    %vm2607 = vcmp.eq.s32.totalorder %v2277, 2
    %vm2608 = vcmp.eq.s32.totalorder %v2278, 2
    %vm2609 = vcmp.eq.s32.totalorder %v2279, 2
    %vm2610 = vcmp.eq.s32.totalorder %v2280, 2
    %vm2611 = vcmp.eq.s32.totalorder %v2281, 2
    %vm2612 = vcmp.eq.s32.totalorder %v2282, 2
    %vm2613 = vcmp.eq.s32.totalorder %v2283, 2
    %vm2614 = vcmp.eq.s32.totalorder %v2284, 2
    %vm2615 = vcmp.eq.s32.totalorder %v2285, 2
    %vm2616 = vcmp.eq.s32.totalorder %v2286, 2
    %vm2617 = vcmp.eq.s32.totalorder %v2287, 2
    %vm2618 = vcmp.eq.s32.totalorder %v2288, 2
    %vm2619 = vcmp.eq.s32.totalorder %v2289, 2
    %vm2620 = vcmp.eq.s32.totalorder %v2290, 2
    %vm2621 = vcmp.eq.s32.totalorder %v2291, 2
    %vm2622 = vcmp.eq.s32.totalorder %v2292, 2
    %vm2623 = vcmp.eq.s32.totalorder %v2293, 2
    %vm2624 = vcmp.eq.s32.totalorder %v2294, 2
    %v2625 = vlaneseq
    %v2626 = vshrl.u32 %v2625, 7
    %v2627 = vsub.s32 2, %v2626
    %v2628 = vrot.slane %v2296, %v2627
    %v2629 = vsel %vm2561, %v2628, %v2497
    %v2630 = vsel %vm2562, %v2628, %v2498
    %v2631 = vsel %vm2563, %v2628, %v2499
    %v2632 = vsel %vm2564, %v2628, %v2500
    %v2633 = vsel %vm2565, %v2628, %v2501
    %v2634 = vsel %vm2566, %v2628, %v2502
    %v2635 = vsel %vm2567, %v2628, %v2503
    %v2636 = vsel %vm2568, %v2628, %v2504
    %v2637 = vsel %vm2569, %v2628, %v2505
    %v2638 = vsel %vm2570, %v2628, %v2506
    %v2639 = vsel %vm2571, %v2628, %v2507
    %v2640 = vsel %vm2572, %v2628, %v2508
    %v2641 = vsel %vm2573, %v2628, %v2509
    %v2642 = vsel %vm2574, %v2628, %v2510
    %v2643 = vsel %vm2575, %v2628, %v2511
    %v2644 = vsel %vm2576, %v2628, %v2512
    %v2645 = vsel %vm2577, %v2628, %v2513
    %v2646 = vsel %vm2578, %v2628, %v2514
    %v2647 = vsel %vm2579, %v2628, %v2515
    %v2648 = vsel %vm2580, %v2628, %v2516
    %v2649 = vsel %vm2581, %v2628, %v2517
    %v2650 = vsel %vm2582, %v2628, %v2518
    %v2651 = vsel %vm2583, %v2628, %v2519
    %v2652 = vsel %vm2584, %v2628, %v2520
    %v2653 = vsel %vm2585, %v2628, %v2521
    %v2654 = vsel %vm2586, %v2628, %v2522
    %v2655 = vsel %vm2587, %v2628, %v2523
    %v2656 = vsel %vm2588, %v2628, %v2524
    %v2657 = vsel %vm2589, %v2628, %v2525
    %v2658 = vsel %vm2590, %v2628, %v2526
    %v2659 = vsel %vm2591, %v2628, %v2527
    %v2660 = vsel %vm2592, %v2628, %v2528
    %v2661 = vsel %vm2593, %v2628, %v2529
    %v2662 = vsel %vm2594, %v2628, %v2530
    %v2663 = vsel %vm2595, %v2628, %v2531
    %v2664 = vsel %vm2596, %v2628, %v2532
    %v2665 = vsel %vm2597, %v2628, %v2533
    %v2666 = vsel %vm2598, %v2628, %v2534
    %v2667 = vsel %vm2599, %v2628, %v2535
    %v2668 = vsel %vm2600, %v2628, %v2536
    %v2669 = vsel %vm2601, %v2628, %v2537
    %v2670 = vsel %vm2602, %v2628, %v2538
    %v2671 = vsel %vm2603, %v2628, %v2539
    %v2672 = vsel %vm2604, %v2628, %v2540
    %v2673 = vsel %vm2605, %v2628, %v2541
    %v2674 = vsel %vm2606, %v2628, %v2542
    %v2675 = vsel %vm2607, %v2628, %v2543
    %v2676 = vsel %vm2608, %v2628, %v2544
    %v2677 = vsel %vm2609, %v2628, %v2545
    %v2678 = vsel %vm2610, %v2628, %v2546
    %v2679 = vsel %vm2611, %v2628, %v2547
    %v2680 = vsel %vm2612, %v2628, %v2548
    %v2681 = vsel %vm2613, %v2628, %v2549
    %v2682 = vsel %vm2614, %v2628, %v2550
    %v2683 = vsel %vm2615, %v2628, %v2551
    %v2684 = vsel %vm2616, %v2628, %v2552
    %v2685 = vsel %vm2617, %v2628, %v2553
    %v2686 = vsel %vm2618, %v2628, %v2554
    %v2687 = vsel %vm2619, %v2628, %v2555
    %v2688 = vsel %vm2620, %v2628, %v2556
    %v2689 = vsel %vm2621, %v2628, %v2557
    %v2690 = vsel %vm2622, %v2628, %v2558
    %v2691 = vsel %vm2623, %v2628, %v2559
    %v2692 = vsel %vm2624, %v2628, %v2560
    %vm2693 = vcmp.eq.s32.totalorder %v2231, 3
    %vm2694 = vcmp.eq.s32.totalorder %v2232, 3
    %vm2695 = vcmp.eq.s32.totalorder %v2233, 3
    %vm2696 = vcmp.eq.s32.totalorder %v2234, 3
    %vm2697 = vcmp.eq.s32.totalorder %v2235, 3
    %vm2698 = vcmp.eq.s32.totalorder %v2236, 3
    %vm2699 = vcmp.eq.s32.totalorder %v2237, 3
    %vm2700 = vcmp.eq.s32.totalorder %v2238, 3
    %vm2701 = vcmp.eq.s32.totalorder %v2239, 3
    %vm2702 = vcmp.eq.s32.totalorder %v2240, 3
    %vm2703 = vcmp.eq.s32.totalorder %v2241, 3
    %vm2704 = vcmp.eq.s32.totalorder %v2242, 3
    %vm2705 = vcmp.eq.s32.totalorder %v2243, 3
    %vm2706 = vcmp.eq.s32.totalorder %v2244, 3
    %vm2707 = vcmp.eq.s32.totalorder %v2245, 3
    %vm2708 = vcmp.eq.s32.totalorder %v2246, 3
    %vm2709 = vcmp.eq.s32.totalorder %v2247, 3
    %vm2710 = vcmp.eq.s32.totalorder %v2248, 3
    %vm2711 = vcmp.eq.s32.totalorder %v2249, 3
    %vm2712 = vcmp.eq.s32.totalorder %v2250, 3
    %vm2713 = vcmp.eq.s32.totalorder %v2251, 3
    %vm2714 = vcmp.eq.s32.totalorder %v2252, 3
    %vm2715 = vcmp.eq.s32.totalorder %v2253, 3
    %vm2716 = vcmp.eq.s32.totalorder %v2254, 3
    %vm2717 = vcmp.eq.s32.totalorder %v2255, 3
    %vm2718 = vcmp.eq.s32.totalorder %v2256, 3
    %vm2719 = vcmp.eq.s32.totalorder %v2257, 3
    %vm2720 = vcmp.eq.s32.totalorder %v2258, 3
    %vm2721 = vcmp.eq.s32.totalorder %v2259, 3
    %vm2722 = vcmp.eq.s32.totalorder %v2260, 3
    %vm2723 = vcmp.eq.s32.totalorder %v2261, 3
    %vm2724 = vcmp.eq.s32.totalorder %v2262, 3
    %vm2725 = vcmp.eq.s32.totalorder %v2263, 3
    %vm2726 = vcmp.eq.s32.totalorder %v2264, 3
    %vm2727 = vcmp.eq.s32.totalorder %v2265, 3
    %vm2728 = vcmp.eq.s32.totalorder %v2266, 3
    %vm2729 = vcmp.eq.s32.totalorder %v2267, 3
    %vm2730 = vcmp.eq.s32.totalorder %v2268, 3
    %vm2731 = vcmp.eq.s32.totalorder %v2269, 3
    %vm2732 = vcmp.eq.s32.totalorder %v2270, 3
    %vm2733 = vcmp.eq.s32.totalorder %v2271, 3
    %vm2734 = vcmp.eq.s32.totalorder %v2272, 3
    %vm2735 = vcmp.eq.s32.totalorder %v2273, 3
    %vm2736 = vcmp.eq.s32.totalorder %v2274, 3
    %vm2737 = vcmp.eq.s32.totalorder %v2275, 3
    %vm2738 = vcmp.eq.s32.totalorder %v2276, 3
    %vm2739 = vcmp.eq.s32.totalorder %v2277, 3
    %vm2740 = vcmp.eq.s32.totalorder %v2278, 3
    %vm2741 = vcmp.eq.s32.totalorder %v2279, 3
    %vm2742 = vcmp.eq.s32.totalorder %v2280, 3
    %vm2743 = vcmp.eq.s32.totalorder %v2281, 3
    %vm2744 = vcmp.eq.s32.totalorder %v2282, 3
    %vm2745 = vcmp.eq.s32.totalorder %v2283, 3
    %vm2746 = vcmp.eq.s32.totalorder %v2284, 3
    %vm2747 = vcmp.eq.s32.totalorder %v2285, 3
    %vm2748 = vcmp.eq.s32.totalorder %v2286, 3
    %vm2749 = vcmp.eq.s32.totalorder %v2287, 3
    %vm2750 = vcmp.eq.s32.totalorder %v2288, 3
    %vm2751 = vcmp.eq.s32.totalorder %v2289, 3
    %vm2752 = vcmp.eq.s32.totalorder %v2290, 3
    %vm2753 = vcmp.eq.s32.totalorder %v2291, 3
    %vm2754 = vcmp.eq.s32.totalorder %v2292, 3
    %vm2755 = vcmp.eq.s32.totalorder %v2293, 3
    %vm2756 = vcmp.eq.s32.totalorder %v2294, 3
    %v2757 = vlaneseq
    %v2758 = vshrl.u32 %v2757, 7
    %v2759 = vsub.s32 3, %v2758
    %v2760 = vrot.slane %v2296, %v2759
    %v2761 = vsel %vm2693, %v2760, %v2629
    %v2762 = vsel %vm2694, %v2760, %v2630
    %v2763 = vsel %vm2695, %v2760, %v2631
    %v2764 = vsel %vm2696, %v2760, %v2632
    %v2765 = vsel %vm2697, %v2760, %v2633
    %v2766 = vsel %vm2698, %v2760, %v2634
    %v2767 = vsel %vm2699, %v2760, %v2635
    %v2768 = vsel %vm2700, %v2760, %v2636
    %v2769 = vsel %vm2701, %v2760, %v2637
    %v2770 = vsel %vm2702, %v2760, %v2638
    %v2771 = vsel %vm2703, %v2760, %v2639
    %v2772 = vsel %vm2704, %v2760, %v2640
    %v2773 = vsel %vm2705, %v2760, %v2641
    %v2774 = vsel %vm2706, %v2760, %v2642
    %v2775 = vsel %vm2707, %v2760, %v2643
    %v2776 = vsel %vm2708, %v2760, %v2644
    %v2777 = vsel %vm2709, %v2760, %v2645
    %v2778 = vsel %vm2710, %v2760, %v2646
    %v2779 = vsel %vm2711, %v2760, %v2647
    %v2780 = vsel %vm2712, %v2760, %v2648
    %v2781 = vsel %vm2713, %v2760, %v2649
    %v2782 = vsel %vm2714, %v2760, %v2650
    %v2783 = vsel %vm2715, %v2760, %v2651
    %v2784 = vsel %vm2716, %v2760, %v2652
    %v2785 = vsel %vm2717, %v2760, %v2653
    %v2786 = vsel %vm2718, %v2760, %v2654
    %v2787 = vsel %vm2719, %v2760, %v2655
    %v2788 = vsel %vm2720, %v2760, %v2656
    %v2789 = vsel %vm2721, %v2760, %v2657
    %v2790 = vsel %vm2722, %v2760, %v2658
    %v2791 = vsel %vm2723, %v2760, %v2659
    %v2792 = vsel %vm2724, %v2760, %v2660
    %v2793 = vsel %vm2725, %v2760, %v2661
    %v2794 = vsel %vm2726, %v2760, %v2662
    %v2795 = vsel %vm2727, %v2760, %v2663
    %v2796 = vsel %vm2728, %v2760, %v2664
    %v2797 = vsel %vm2729, %v2760, %v2665
    %v2798 = vsel %vm2730, %v2760, %v2666
    %v2799 = vsel %vm2731, %v2760, %v2667
    %v2800 = vsel %vm2732, %v2760, %v2668
    %v2801 = vsel %vm2733, %v2760, %v2669
    %v2802 = vsel %vm2734, %v2760, %v2670
    %v2803 = vsel %vm2735, %v2760, %v2671
    %v2804 = vsel %vm2736, %v2760, %v2672
    %v2805 = vsel %vm2737, %v2760, %v2673
    %v2806 = vsel %vm2738, %v2760, %v2674
    %v2807 = vsel %vm2739, %v2760, %v2675
    %v2808 = vsel %vm2740, %v2760, %v2676
    %v2809 = vsel %vm2741, %v2760, %v2677
    %v2810 = vsel %vm2742, %v2760, %v2678
    %v2811 = vsel %vm2743, %v2760, %v2679
    %v2812 = vsel %vm2744, %v2760, %v2680
    %v2813 = vsel %vm2745, %v2760, %v2681
    %v2814 = vsel %vm2746, %v2760, %v2682
    %v2815 = vsel %vm2747, %v2760, %v2683
    %v2816 = vsel %vm2748, %v2760, %v2684
    %v2817 = vsel %vm2749, %v2760, %v2685
    %v2818 = vsel %vm2750, %v2760, %v2686
    %v2819 = vsel %vm2751, %v2760, %v2687
    %v2820 = vsel %vm2752, %v2760, %v2688
    %v2821 = vsel %vm2753, %v2760, %v2689
    %v2822 = vsel %vm2754, %v2760, %v2690
    %v2823 = vsel %vm2755, %v2760, %v2691
    %v2824 = vsel %vm2756, %v2760, %v2692
    %vm2825 = vcmp.eq.s32.totalorder %v2231, 4
    %vm2826 = vcmp.eq.s32.totalorder %v2232, 4
    %vm2827 = vcmp.eq.s32.totalorder %v2233, 4
    %vm2828 = vcmp.eq.s32.totalorder %v2234, 4
    %vm2829 = vcmp.eq.s32.totalorder %v2235, 4
    %vm2830 = vcmp.eq.s32.totalorder %v2236, 4
    %vm2831 = vcmp.eq.s32.totalorder %v2237, 4
    %vm2832 = vcmp.eq.s32.totalorder %v2238, 4
    %vm2833 = vcmp.eq.s32.totalorder %v2239, 4
    %vm2834 = vcmp.eq.s32.totalorder %v2240, 4
    %vm2835 = vcmp.eq.s32.totalorder %v2241, 4
    %vm2836 = vcmp.eq.s32.totalorder %v2242, 4
    %vm2837 = vcmp.eq.s32.totalorder %v2243, 4
    %vm2838 = vcmp.eq.s32.totalorder %v2244, 4
    %vm2839 = vcmp.eq.s32.totalorder %v2245, 4
    %vm2840 = vcmp.eq.s32.totalorder %v2246, 4
    %vm2841 = vcmp.eq.s32.totalorder %v2247, 4
    %vm2842 = vcmp.eq.s32.totalorder %v2248, 4
    %vm2843 = vcmp.eq.s32.totalorder %v2249, 4
    %vm2844 = vcmp.eq.s32.totalorder %v2250, 4
    %vm2845 = vcmp.eq.s32.totalorder %v2251, 4
    %vm2846 = vcmp.eq.s32.totalorder %v2252, 4
    %vm2847 = vcmp.eq.s32.totalorder %v2253, 4
    %vm2848 = vcmp.eq.s32.totalorder %v2254, 4
    %vm2849 = vcmp.eq.s32.totalorder %v2255, 4
    %vm2850 = vcmp.eq.s32.totalorder %v2256, 4
    %vm2851 = vcmp.eq.s32.totalorder %v2257, 4
    %vm2852 = vcmp.eq.s32.totalorder %v2258, 4
    %vm2853 = vcmp.eq.s32.totalorder %v2259, 4
    %vm2854 = vcmp.eq.s32.totalorder %v2260, 4
    %vm2855 = vcmp.eq.s32.totalorder %v2261, 4
    %vm2856 = vcmp.eq.s32.totalorder %v2262, 4
    %vm2857 = vcmp.eq.s32.totalorder %v2263, 4
    %vm2858 = vcmp.eq.s32.totalorder %v2264, 4
    %vm2859 = vcmp.eq.s32.totalorder %v2265, 4
    %vm2860 = vcmp.eq.s32.totalorder %v2266, 4
    %vm2861 = vcmp.eq.s32.totalorder %v2267, 4
    %vm2862 = vcmp.eq.s32.totalorder %v2268, 4
    %vm2863 = vcmp.eq.s32.totalorder %v2269, 4
    %vm2864 = vcmp.eq.s32.totalorder %v2270, 4
    %vm2865 = vcmp.eq.s32.totalorder %v2271, 4
    %vm2866 = vcmp.eq.s32.totalorder %v2272, 4
    %vm2867 = vcmp.eq.s32.totalorder %v2273, 4
    %vm2868 = vcmp.eq.s32.totalorder %v2274, 4
    %vm2869 = vcmp.eq.s32.totalorder %v2275, 4
    %vm2870 = vcmp.eq.s32.totalorder %v2276, 4
    %vm2871 = vcmp.eq.s32.totalorder %v2277, 4
    %vm2872 = vcmp.eq.s32.totalorder %v2278, 4
    %vm2873 = vcmp.eq.s32.totalorder %v2279, 4
    %vm2874 = vcmp.eq.s32.totalorder %v2280, 4
    %vm2875 = vcmp.eq.s32.totalorder %v2281, 4
    %vm2876 = vcmp.eq.s32.totalorder %v2282, 4
    %vm2877 = vcmp.eq.s32.totalorder %v2283, 4
    %vm2878 = vcmp.eq.s32.totalorder %v2284, 4
    %vm2879 = vcmp.eq.s32.totalorder %v2285, 4
    %vm2880 = vcmp.eq.s32.totalorder %v2286, 4
    %vm2881 = vcmp.eq.s32.totalorder %v2287, 4
    %vm2882 = vcmp.eq.s32.totalorder %v2288, 4
    %vm2883 = vcmp.eq.s32.totalorder %v2289, 4
    %vm2884 = vcmp.eq.s32.totalorder %v2290, 4
    %vm2885 = vcmp.eq.s32.totalorder %v2291, 4
    %vm2886 = vcmp.eq.s32.totalorder %v2292, 4
    %vm2887 = vcmp.eq.s32.totalorder %v2293, 4
    %vm2888 = vcmp.eq.s32.totalorder %v2294, 4
    %v2889 = vlaneseq
    %v2890 = vshrl.u32 %v2889, 7
    %v2891 = vsub.s32 4, %v2890
    %v2892 = vrot.slane %v2296, %v2891
    %v2893 = vsel %vm2825, %v2892, %v2761
    %v2894 = vsel %vm2826, %v2892, %v2762
    %v2895 = vsel %vm2827, %v2892, %v2763
    %v2896 = vsel %vm2828, %v2892, %v2764
    %v2897 = vsel %vm2829, %v2892, %v2765
    %v2898 = vsel %vm2830, %v2892, %v2766
    %v2899 = vsel %vm2831, %v2892, %v2767
    %v2900 = vsel %vm2832, %v2892, %v2768
    %v2901 = vsel %vm2833, %v2892, %v2769
    %v2902 = vsel %vm2834, %v2892, %v2770
    %v2903 = vsel %vm2835, %v2892, %v2771
    %v2904 = vsel %vm2836, %v2892, %v2772
    %v2905 = vsel %vm2837, %v2892, %v2773
    %v2906 = vsel %vm2838, %v2892, %v2774
    %v2907 = vsel %vm2839, %v2892, %v2775
    %v2908 = vsel %vm2840, %v2892, %v2776
    %v2909 = vsel %vm2841, %v2892, %v2777
    %v2910 = vsel %vm2842, %v2892, %v2778
    %v2911 = vsel %vm2843, %v2892, %v2779
    %v2912 = vsel %vm2844, %v2892, %v2780
    %v2913 = vsel %vm2845, %v2892, %v2781
    %v2914 = vsel %vm2846, %v2892, %v2782
    %v2915 = vsel %vm2847, %v2892, %v2783
    %v2916 = vsel %vm2848, %v2892, %v2784
    %v2917 = vsel %vm2849, %v2892, %v2785
    %v2918 = vsel %vm2850, %v2892, %v2786
    %v2919 = vsel %vm2851, %v2892, %v2787
    %v2920 = vsel %vm2852, %v2892, %v2788
    %v2921 = vsel %vm2853, %v2892, %v2789
    %v2922 = vsel %vm2854, %v2892, %v2790
    %v2923 = vsel %vm2855, %v2892, %v2791
    %v2924 = vsel %vm2856, %v2892, %v2792
    %v2925 = vsel %vm2857, %v2892, %v2793
    %v2926 = vsel %vm2858, %v2892, %v2794
    %v2927 = vsel %vm2859, %v2892, %v2795
    %v2928 = vsel %vm2860, %v2892, %v2796
    %v2929 = vsel %vm2861, %v2892, %v2797
    %v2930 = vsel %vm2862, %v2892, %v2798
    %v2931 = vsel %vm2863, %v2892, %v2799
    %v2932 = vsel %vm2864, %v2892, %v2800
    %v2933 = vsel %vm2865, %v2892, %v2801
    %v2934 = vsel %vm2866, %v2892, %v2802
    %v2935 = vsel %vm2867, %v2892, %v2803
    %v2936 = vsel %vm2868, %v2892, %v2804
    %v2937 = vsel %vm2869, %v2892, %v2805
    %v2938 = vsel %vm2870, %v2892, %v2806
    %v2939 = vsel %vm2871, %v2892, %v2807
    %v2940 = vsel %vm2872, %v2892, %v2808
    %v2941 = vsel %vm2873, %v2892, %v2809
    %v2942 = vsel %vm2874, %v2892, %v2810
    %v2943 = vsel %vm2875, %v2892, %v2811
    %v2944 = vsel %vm2876, %v2892, %v2812
    %v2945 = vsel %vm2877, %v2892, %v2813
    %v2946 = vsel %vm2878, %v2892, %v2814
    %v2947 = vsel %vm2879, %v2892, %v2815
    %v2948 = vsel %vm2880, %v2892, %v2816
    %v2949 = vsel %vm2881, %v2892, %v2817
    %v2950 = vsel %vm2882, %v2892, %v2818
    %v2951 = vsel %vm2883, %v2892, %v2819
    %v2952 = vsel %vm2884, %v2892, %v2820
    %v2953 = vsel %vm2885, %v2892, %v2821
    %v2954 = vsel %vm2886, %v2892, %v2822
    %v2955 = vsel %vm2887, %v2892, %v2823
    %v2956 = vsel %vm2888, %v2892, %v2824
    %vm2957 = vcmp.eq.s32.totalorder %v2231, 5
    %vm2958 = vcmp.eq.s32.totalorder %v2232, 5
    %vm2959 = vcmp.eq.s32.totalorder %v2233, 5
    %vm2960 = vcmp.eq.s32.totalorder %v2234, 5
    %vm2961 = vcmp.eq.s32.totalorder %v2235, 5
    %vm2962 = vcmp.eq.s32.totalorder %v2236, 5
    %vm2963 = vcmp.eq.s32.totalorder %v2237, 5
    %vm2964 = vcmp.eq.s32.totalorder %v2238, 5
    %vm2965 = vcmp.eq.s32.totalorder %v2239, 5
    %vm2966 = vcmp.eq.s32.totalorder %v2240, 5
    %vm2967 = vcmp.eq.s32.totalorder %v2241, 5
    %vm2968 = vcmp.eq.s32.totalorder %v2242, 5
    %vm2969 = vcmp.eq.s32.totalorder %v2243, 5
    %vm2970 = vcmp.eq.s32.totalorder %v2244, 5
    %vm2971 = vcmp.eq.s32.totalorder %v2245, 5
    %vm2972 = vcmp.eq.s32.totalorder %v2246, 5
    %vm2973 = vcmp.eq.s32.totalorder %v2247, 5
    %vm2974 = vcmp.eq.s32.totalorder %v2248, 5
    %vm2975 = vcmp.eq.s32.totalorder %v2249, 5
    %vm2976 = vcmp.eq.s32.totalorder %v2250, 5
    %vm2977 = vcmp.eq.s32.totalorder %v2251, 5
    %vm2978 = vcmp.eq.s32.totalorder %v2252, 5
    %vm2979 = vcmp.eq.s32.totalorder %v2253, 5
    %vm2980 = vcmp.eq.s32.totalorder %v2254, 5
    %vm2981 = vcmp.eq.s32.totalorder %v2255, 5
    %vm2982 = vcmp.eq.s32.totalorder %v2256, 5
    %vm2983 = vcmp.eq.s32.totalorder %v2257, 5
    %vm2984 = vcmp.eq.s32.totalorder %v2258, 5
    %vm2985 = vcmp.eq.s32.totalorder %v2259, 5
    %vm2986 = vcmp.eq.s32.totalorder %v2260, 5
    %vm2987 = vcmp.eq.s32.totalorder %v2261, 5
    %vm2988 = vcmp.eq.s32.totalorder %v2262, 5
    %vm2989 = vcmp.eq.s32.totalorder %v2263, 5
    %vm2990 = vcmp.eq.s32.totalorder %v2264, 5
    %vm2991 = vcmp.eq.s32.totalorder %v2265, 5
    %vm2992 = vcmp.eq.s32.totalorder %v2266, 5
    %vm2993 = vcmp.eq.s32.totalorder %v2267, 5
    %vm2994 = vcmp.eq.s32.totalorder %v2268, 5
    %vm2995 = vcmp.eq.s32.totalorder %v2269, 5
    %vm2996 = vcmp.eq.s32.totalorder %v2270, 5
    %vm2997 = vcmp.eq.s32.totalorder %v2271, 5
    %vm2998 = vcmp.eq.s32.totalorder %v2272, 5
    %vm2999 = vcmp.eq.s32.totalorder %v2273, 5
    %vm3000 = vcmp.eq.s32.totalorder %v2274, 5
    %vm3001 = vcmp.eq.s32.totalorder %v2275, 5
    %vm3002 = vcmp.eq.s32.totalorder %v2276, 5
    %vm3003 = vcmp.eq.s32.totalorder %v2277, 5
    %vm3004 = vcmp.eq.s32.totalorder %v2278, 5
    %vm3005 = vcmp.eq.s32.totalorder %v2279, 5
    %vm3006 = vcmp.eq.s32.totalorder %v2280, 5
    %vm3007 = vcmp.eq.s32.totalorder %v2281, 5
    %vm3008 = vcmp.eq.s32.totalorder %v2282, 5
    %vm3009 = vcmp.eq.s32.totalorder %v2283, 5
    %vm3010 = vcmp.eq.s32.totalorder %v2284, 5
    %vm3011 = vcmp.eq.s32.totalorder %v2285, 5
    %vm3012 = vcmp.eq.s32.totalorder %v2286, 5
    %vm3013 = vcmp.eq.s32.totalorder %v2287, 5
    %vm3014 = vcmp.eq.s32.totalorder %v2288, 5
    %vm3015 = vcmp.eq.s32.totalorder %v2289, 5
    %vm3016 = vcmp.eq.s32.totalorder %v2290, 5
    %vm3017 = vcmp.eq.s32.totalorder %v2291, 5
    %vm3018 = vcmp.eq.s32.totalorder %v2292, 5
    %vm3019 = vcmp.eq.s32.totalorder %v2293, 5
    %vm3020 = vcmp.eq.s32.totalorder %v2294, 5
    %v3021 = vlaneseq
    %v3022 = vshrl.u32 %v3021, 7
    %v3023 = vsub.s32 5, %v3022
    %v3024 = vrot.slane %v2296, %v3023
    %v3025 = vsel %vm2957, %v3024, %v2893
    %v3026 = vsel %vm2958, %v3024, %v2894
    %v3027 = vsel %vm2959, %v3024, %v2895
    %v3028 = vsel %vm2960, %v3024, %v2896
    %v3029 = vsel %vm2961, %v3024, %v2897
    %v3030 = vsel %vm2962, %v3024, %v2898
    %v3031 = vsel %vm2963, %v3024, %v2899
    %v3032 = vsel %vm2964, %v3024, %v2900
    %v3033 = vsel %vm2965, %v3024, %v2901
    %v3034 = vsel %vm2966, %v3024, %v2902
    %v3035 = vsel %vm2967, %v3024, %v2903
    %v3036 = vsel %vm2968, %v3024, %v2904
    %v3037 = vsel %vm2969, %v3024, %v2905
    %v3038 = vsel %vm2970, %v3024, %v2906
    %v3039 = vsel %vm2971, %v3024, %v2907
    %v3040 = vsel %vm2972, %v3024, %v2908
    %v3041 = vsel %vm2973, %v3024, %v2909
    %v3042 = vsel %vm2974, %v3024, %v2910
    %v3043 = vsel %vm2975, %v3024, %v2911
    %v3044 = vsel %vm2976, %v3024, %v2912
    %v3045 = vsel %vm2977, %v3024, %v2913
    %v3046 = vsel %vm2978, %v3024, %v2914
    %v3047 = vsel %vm2979, %v3024, %v2915
    %v3048 = vsel %vm2980, %v3024, %v2916
    %v3049 = vsel %vm2981, %v3024, %v2917
    %v3050 = vsel %vm2982, %v3024, %v2918
    %v3051 = vsel %vm2983, %v3024, %v2919
    %v3052 = vsel %vm2984, %v3024, %v2920
    %v3053 = vsel %vm2985, %v3024, %v2921
    %v3054 = vsel %vm2986, %v3024, %v2922
    %v3055 = vsel %vm2987, %v3024, %v2923
    %v3056 = vsel %vm2988, %v3024, %v2924
    %v3057 = vsel %vm2989, %v3024, %v2925
    %v3058 = vsel %vm2990, %v3024, %v2926
    %v3059 = vsel %vm2991, %v3024, %v2927
    %v3060 = vsel %vm2992, %v3024, %v2928
    %v3061 = vsel %vm2993, %v3024, %v2929
    %v3062 = vsel %vm2994, %v3024, %v2930
    %v3063 = vsel %vm2995, %v3024, %v2931
    %v3064 = vsel %vm2996, %v3024, %v2932
    %v3065 = vsel %vm2997, %v3024, %v2933
    %v3066 = vsel %vm2998, %v3024, %v2934
    %v3067 = vsel %vm2999, %v3024, %v2935
    %v3068 = vsel %vm3000, %v3024, %v2936
    %v3069 = vsel %vm3001, %v3024, %v2937
    %v3070 = vsel %vm3002, %v3024, %v2938
    %v3071 = vsel %vm3003, %v3024, %v2939
    %v3072 = vsel %vm3004, %v3024, %v2940
    %v3073 = vsel %vm3005, %v3024, %v2941
    %v3074 = vsel %vm3006, %v3024, %v2942
    %v3075 = vsel %vm3007, %v3024, %v2943
    %v3076 = vsel %vm3008, %v3024, %v2944
    %v3077 = vsel %vm3009, %v3024, %v2945
    %v3078 = vsel %vm3010, %v3024, %v2946
    %v3079 = vsel %vm3011, %v3024, %v2947
    %v3080 = vsel %vm3012, %v3024, %v2948
    %v3081 = vsel %vm3013, %v3024, %v2949
    %v3082 = vsel %vm3014, %v3024, %v2950
    %v3083 = vsel %vm3015, %v3024, %v2951
    %v3084 = vsel %vm3016, %v3024, %v2952
    %v3085 = vsel %vm3017, %v3024, %v2953
    %v3086 = vsel %vm3018, %v3024, %v2954
    %v3087 = vsel %vm3019, %v3024, %v2955
    %v3088 = vsel %vm3020, %v3024, %v2956
    %vm3089 = vcmp.eq.s32.totalorder %v2231, 6
    %vm3090 = vcmp.eq.s32.totalorder %v2232, 6
    %vm3091 = vcmp.eq.s32.totalorder %v2233, 6
    %vm3092 = vcmp.eq.s32.totalorder %v2234, 6
    %vm3093 = vcmp.eq.s32.totalorder %v2235, 6
    %vm3094 = vcmp.eq.s32.totalorder %v2236, 6
    %vm3095 = vcmp.eq.s32.totalorder %v2237, 6
    %vm3096 = vcmp.eq.s32.totalorder %v2238, 6
    %vm3097 = vcmp.eq.s32.totalorder %v2239, 6
    %vm3098 = vcmp.eq.s32.totalorder %v2240, 6
    %vm3099 = vcmp.eq.s32.totalorder %v2241, 6
    %vm3100 = vcmp.eq.s32.totalorder %v2242, 6
    %vm3101 = vcmp.eq.s32.totalorder %v2243, 6
    %vm3102 = vcmp.eq.s32.totalorder %v2244, 6
    %vm3103 = vcmp.eq.s32.totalorder %v2245, 6
    %vm3104 = vcmp.eq.s32.totalorder %v2246, 6
    %vm3105 = vcmp.eq.s32.totalorder %v2247, 6
    %vm3106 = vcmp.eq.s32.totalorder %v2248, 6
    %vm3107 = vcmp.eq.s32.totalorder %v2249, 6
    %vm3108 = vcmp.eq.s32.totalorder %v2250, 6
    %vm3109 = vcmp.eq.s32.totalorder %v2251, 6
    %vm3110 = vcmp.eq.s32.totalorder %v2252, 6
    %vm3111 = vcmp.eq.s32.totalorder %v2253, 6
    %vm3112 = vcmp.eq.s32.totalorder %v2254, 6
    %vm3113 = vcmp.eq.s32.totalorder %v2255, 6
    %vm3114 = vcmp.eq.s32.totalorder %v2256, 6
    %vm3115 = vcmp.eq.s32.totalorder %v2257, 6
    %vm3116 = vcmp.eq.s32.totalorder %v2258, 6
    %vm3117 = vcmp.eq.s32.totalorder %v2259, 6
    %vm3118 = vcmp.eq.s32.totalorder %v2260, 6
    %vm3119 = vcmp.eq.s32.totalorder %v2261, 6
    %vm3120 = vcmp.eq.s32.totalorder %v2262, 6
    %vm3121 = vcmp.eq.s32.totalorder %v2263, 6
    %vm3122 = vcmp.eq.s32.totalorder %v2264, 6
    %vm3123 = vcmp.eq.s32.totalorder %v2265, 6
    %vm3124 = vcmp.eq.s32.totalorder %v2266, 6
    %vm3125 = vcmp.eq.s32.totalorder %v2267, 6
    %vm3126 = vcmp.eq.s32.totalorder %v2268, 6
    %vm3127 = vcmp.eq.s32.totalorder %v2269, 6
    %vm3128 = vcmp.eq.s32.totalorder %v2270, 6
    %vm3129 = vcmp.eq.s32.totalorder %v2271, 6
    %vm3130 = vcmp.eq.s32.totalorder %v2272, 6
    %vm3131 = vcmp.eq.s32.totalorder %v2273, 6
    %vm3132 = vcmp.eq.s32.totalorder %v2274, 6
    %vm3133 = vcmp.eq.s32.totalorder %v2275, 6
    %vm3134 = vcmp.eq.s32.totalorder %v2276, 6
    %vm3135 = vcmp.eq.s32.totalorder %v2277, 6
    %vm3136 = vcmp.eq.s32.totalorder %v2278, 6
    %vm3137 = vcmp.eq.s32.totalorder %v2279, 6
    %vm3138 = vcmp.eq.s32.totalorder %v2280, 6
    %vm3139 = vcmp.eq.s32.totalorder %v2281, 6
    %vm3140 = vcmp.eq.s32.totalorder %v2282, 6
    %vm3141 = vcmp.eq.s32.totalorder %v2283, 6
    %vm3142 = vcmp.eq.s32.totalorder %v2284, 6
    %vm3143 = vcmp.eq.s32.totalorder %v2285, 6
    %vm3144 = vcmp.eq.s32.totalorder %v2286, 6
    %vm3145 = vcmp.eq.s32.totalorder %v2287, 6
    %vm3146 = vcmp.eq.s32.totalorder %v2288, 6
    %vm3147 = vcmp.eq.s32.totalorder %v2289, 6
    %vm3148 = vcmp.eq.s32.totalorder %v2290, 6
    %vm3149 = vcmp.eq.s32.totalorder %v2291, 6
    %vm3150 = vcmp.eq.s32.totalorder %v2292, 6
    %vm3151 = vcmp.eq.s32.totalorder %v2293, 6
    %vm3152 = vcmp.eq.s32.totalorder %v2294, 6
    %v3153 = vlaneseq
    %v3154 = vshrl.u32 %v3153, 7
    %v3155 = vsub.s32 6, %v3154
    %v3156 = vrot.slane %v2296, %v3155
    %v3157 = vsel %vm3089, %v3156, %v3025
    %v3158 = vsel %vm3090, %v3156, %v3026
    %v3159 = vsel %vm3091, %v3156, %v3027
    %v3160 = vsel %vm3092, %v3156, %v3028
    %v3161 = vsel %vm3093, %v3156, %v3029
    %v3162 = vsel %vm3094, %v3156, %v3030
    %v3163 = vsel %vm3095, %v3156, %v3031
    %v3164 = vsel %vm3096, %v3156, %v3032
    %v3165 = vsel %vm3097, %v3156, %v3033
    %v3166 = vsel %vm3098, %v3156, %v3034
    %v3167 = vsel %vm3099, %v3156, %v3035
    %v3168 = vsel %vm3100, %v3156, %v3036
    %v3169 = vsel %vm3101, %v3156, %v3037
    %v3170 = vsel %vm3102, %v3156, %v3038
    %v3171 = vsel %vm3103, %v3156, %v3039
    %v3172 = vsel %vm3104, %v3156, %v3040
    %v3173 = vsel %vm3105, %v3156, %v3041
    %v3174 = vsel %vm3106, %v3156, %v3042
    %v3175 = vsel %vm3107, %v3156, %v3043
    %v3176 = vsel %vm3108, %v3156, %v3044
    %v3177 = vsel %vm3109, %v3156, %v3045
    %v3178 = vsel %vm3110, %v3156, %v3046
    %v3179 = vsel %vm3111, %v3156, %v3047
    %v3180 = vsel %vm3112, %v3156, %v3048
    %v3181 = vsel %vm3113, %v3156, %v3049
    %v3182 = vsel %vm3114, %v3156, %v3050
    %v3183 = vsel %vm3115, %v3156, %v3051
    %v3184 = vsel %vm3116, %v3156, %v3052
    %v3185 = vsel %vm3117, %v3156, %v3053
    %v3186 = vsel %vm3118, %v3156, %v3054
    %v3187 = vsel %vm3119, %v3156, %v3055
    %v3188 = vsel %vm3120, %v3156, %v3056
    %v3189 = vsel %vm3121, %v3156, %v3057
    %v3190 = vsel %vm3122, %v3156, %v3058
    %v3191 = vsel %vm3123, %v3156, %v3059
    %v3192 = vsel %vm3124, %v3156, %v3060
    %v3193 = vsel %vm3125, %v3156, %v3061
    %v3194 = vsel %vm3126, %v3156, %v3062
    %v3195 = vsel %vm3127, %v3156, %v3063
    %v3196 = vsel %vm3128, %v3156, %v3064
    %v3197 = vsel %vm3129, %v3156, %v3065
    %v3198 = vsel %vm3130, %v3156, %v3066
    %v3199 = vsel %vm3131, %v3156, %v3067
    %v3200 = vsel %vm3132, %v3156, %v3068
    %v3201 = vsel %vm3133, %v3156, %v3069
    %v3202 = vsel %vm3134, %v3156, %v3070
    %v3203 = vsel %vm3135, %v3156, %v3071
    %v3204 = vsel %vm3136, %v3156, %v3072
    %v3205 = vsel %vm3137, %v3156, %v3073
    %v3206 = vsel %vm3138, %v3156, %v3074
    %v3207 = vsel %vm3139, %v3156, %v3075
    %v3208 = vsel %vm3140, %v3156, %v3076
    %v3209 = vsel %vm3141, %v3156, %v3077
    %v3210 = vsel %vm3142, %v3156, %v3078
    %v3211 = vsel %vm3143, %v3156, %v3079
    %v3212 = vsel %vm3144, %v3156, %v3080
    %v3213 = vsel %vm3145, %v3156, %v3081
    %v3214 = vsel %vm3146, %v3156, %v3082
    %v3215 = vsel %vm3147, %v3156, %v3083
    %v3216 = vsel %vm3148, %v3156, %v3084
    %v3217 = vsel %vm3149, %v3156, %v3085
    %v3218 = vsel %vm3150, %v3156, %v3086
    %v3219 = vsel %vm3151, %v3156, %v3087
    %v3220 = vsel %vm3152, %v3156, %v3088
    %vm3221 = vcmp.eq.s32.totalorder %v2231, 7
    %vm3222 = vcmp.eq.s32.totalorder %v2232, 7
    %vm3223 = vcmp.eq.s32.totalorder %v2233, 7
    %vm3224 = vcmp.eq.s32.totalorder %v2234, 7
    %vm3225 = vcmp.eq.s32.totalorder %v2235, 7
    %vm3226 = vcmp.eq.s32.totalorder %v2236, 7
    %vm3227 = vcmp.eq.s32.totalorder %v2237, 7
    %vm3228 = vcmp.eq.s32.totalorder %v2238, 7
    %vm3229 = vcmp.eq.s32.totalorder %v2239, 7
    %vm3230 = vcmp.eq.s32.totalorder %v2240, 7
    %vm3231 = vcmp.eq.s32.totalorder %v2241, 7
    %vm3232 = vcmp.eq.s32.totalorder %v2242, 7
    %vm3233 = vcmp.eq.s32.totalorder %v2243, 7
    %vm3234 = vcmp.eq.s32.totalorder %v2244, 7
    %vm3235 = vcmp.eq.s32.totalorder %v2245, 7
    %vm3236 = vcmp.eq.s32.totalorder %v2246, 7
    %vm3237 = vcmp.eq.s32.totalorder %v2247, 7
    %vm3238 = vcmp.eq.s32.totalorder %v2248, 7
    %vm3239 = vcmp.eq.s32.totalorder %v2249, 7
    %vm3240 = vcmp.eq.s32.totalorder %v2250, 7
    %vm3241 = vcmp.eq.s32.totalorder %v2251, 7
    %vm3242 = vcmp.eq.s32.totalorder %v2252, 7
    %vm3243 = vcmp.eq.s32.totalorder %v2253, 7
    %vm3244 = vcmp.eq.s32.totalorder %v2254, 7
    %vm3245 = vcmp.eq.s32.totalorder %v2255, 7
    %vm3246 = vcmp.eq.s32.totalorder %v2256, 7
    %vm3247 = vcmp.eq.s32.totalorder %v2257, 7
    %vm3248 = vcmp.eq.s32.totalorder %v2258, 7
    %vm3249 = vcmp.eq.s32.totalorder %v2259, 7
    %vm3250 = vcmp.eq.s32.totalorder %v2260, 7
    %vm3251 = vcmp.eq.s32.totalorder %v2261, 7
    %vm3252 = vcmp.eq.s32.totalorder %v2262, 7
    %vm3253 = vcmp.eq.s32.totalorder %v2263, 7
    %vm3254 = vcmp.eq.s32.totalorder %v2264, 7
    %vm3255 = vcmp.eq.s32.totalorder %v2265, 7
    %vm3256 = vcmp.eq.s32.totalorder %v2266, 7
    %vm3257 = vcmp.eq.s32.totalorder %v2267, 7
    %vm3258 = vcmp.eq.s32.totalorder %v2268, 7
    %vm3259 = vcmp.eq.s32.totalorder %v2269, 7
    %vm3260 = vcmp.eq.s32.totalorder %v2270, 7
    %vm3261 = vcmp.eq.s32.totalorder %v2271, 7
    %vm3262 = vcmp.eq.s32.totalorder %v2272, 7
    %vm3263 = vcmp.eq.s32.totalorder %v2273, 7
    %vm3264 = vcmp.eq.s32.totalorder %v2274, 7
    %vm3265 = vcmp.eq.s32.totalorder %v2275, 7
    %vm3266 = vcmp.eq.s32.totalorder %v2276, 7
    %vm3267 = vcmp.eq.s32.totalorder %v2277, 7
    %vm3268 = vcmp.eq.s32.totalorder %v2278, 7
    %vm3269 = vcmp.eq.s32.totalorder %v2279, 7
    %vm3270 = vcmp.eq.s32.totalorder %v2280, 7
    %vm3271 = vcmp.eq.s32.totalorder %v2281, 7
    %vm3272 = vcmp.eq.s32.totalorder %v2282, 7
    %vm3273 = vcmp.eq.s32.totalorder %v2283, 7
    %vm3274 = vcmp.eq.s32.totalorder %v2284, 7
    %vm3275 = vcmp.eq.s32.totalorder %v2285, 7
    %vm3276 = vcmp.eq.s32.totalorder %v2286, 7
    %vm3277 = vcmp.eq.s32.totalorder %v2287, 7
    %vm3278 = vcmp.eq.s32.totalorder %v2288, 7
    %vm3279 = vcmp.eq.s32.totalorder %v2289, 7
    %vm3280 = vcmp.eq.s32.totalorder %v2290, 7
    %vm3281 = vcmp.eq.s32.totalorder %v2291, 7
    %vm3282 = vcmp.eq.s32.totalorder %v2292, 7
    %vm3283 = vcmp.eq.s32.totalorder %v2293, 7
    %vm3284 = vcmp.eq.s32.totalorder %v2294, 7
    %v3285 = vlaneseq
    %v3286 = vshrl.u32 %v3285, 7
    %v3287 = vsub.s32 7, %v3286
    %v3288 = vrot.slane %v2296, %v3287
    %v3289 = vsel %vm3221, %v3288, %v3157
    %v3290 = vsel %vm3222, %v3288, %v3158
    %v3291 = vsel %vm3223, %v3288, %v3159
    %v3292 = vsel %vm3224, %v3288, %v3160
    %v3293 = vsel %vm3225, %v3288, %v3161
    %v3294 = vsel %vm3226, %v3288, %v3162
    %v3295 = vsel %vm3227, %v3288, %v3163
    %v3296 = vsel %vm3228, %v3288, %v3164
    %v3297 = vsel %vm3229, %v3288, %v3165
    %v3298 = vsel %vm3230, %v3288, %v3166
    %v3299 = vsel %vm3231, %v3288, %v3167
    %v3300 = vsel %vm3232, %v3288, %v3168
    %v3301 = vsel %vm3233, %v3288, %v3169
    %v3302 = vsel %vm3234, %v3288, %v3170
    %v3303 = vsel %vm3235, %v3288, %v3171
    %v3304 = vsel %vm3236, %v3288, %v3172
    %v3305 = vsel %vm3237, %v3288, %v3173
    %v3306 = vsel %vm3238, %v3288, %v3174
    %v3307 = vsel %vm3239, %v3288, %v3175
    %v3308 = vsel %vm3240, %v3288, %v3176
    %v3309 = vsel %vm3241, %v3288, %v3177
    %v3310 = vsel %vm3242, %v3288, %v3178
    %v3311 = vsel %vm3243, %v3288, %v3179
    %v3312 = vsel %vm3244, %v3288, %v3180
    %v3313 = vsel %vm3245, %v3288, %v3181
    %v3314 = vsel %vm3246, %v3288, %v3182
    %v3315 = vsel %vm3247, %v3288, %v3183
    %v3316 = vsel %vm3248, %v3288, %v3184
    %v3317 = vsel %vm3249, %v3288, %v3185
    %v3318 = vsel %vm3250, %v3288, %v3186
    %v3319 = vsel %vm3251, %v3288, %v3187
    %v3320 = vsel %vm3252, %v3288, %v3188
    %v3321 = vsel %vm3253, %v3288, %v3189
    %v3322 = vsel %vm3254, %v3288, %v3190
    %v3323 = vsel %vm3255, %v3288, %v3191
    %v3324 = vsel %vm3256, %v3288, %v3192
    %v3325 = vsel %vm3257, %v3288, %v3193
    %v3326 = vsel %vm3258, %v3288, %v3194
    %v3327 = vsel %vm3259, %v3288, %v3195
    %v3328 = vsel %vm3260, %v3288, %v3196
    %v3329 = vsel %vm3261, %v3288, %v3197
    %v3330 = vsel %vm3262, %v3288, %v3198
    %v3331 = vsel %vm3263, %v3288, %v3199
    %v3332 = vsel %vm3264, %v3288, %v3200
    %v3333 = vsel %vm3265, %v3288, %v3201
    %v3334 = vsel %vm3266, %v3288, %v3202
    %v3335 = vsel %vm3267, %v3288, %v3203
    %v3336 = vsel %vm3268, %v3288, %v3204
    %v3337 = vsel %vm3269, %v3288, %v3205
    %v3338 = vsel %vm3270, %v3288, %v3206
    %v3339 = vsel %vm3271, %v3288, %v3207
    %v3340 = vsel %vm3272, %v3288, %v3208
    %v3341 = vsel %vm3273, %v3288, %v3209
    %v3342 = vsel %vm3274, %v3288, %v3210
    %v3343 = vsel %vm3275, %v3288, %v3211
    %v3344 = vsel %vm3276, %v3288, %v3212
    %v3345 = vsel %vm3277, %v3288, %v3213
    %v3346 = vsel %vm3278, %v3288, %v3214
    %v3347 = vsel %vm3279, %v3288, %v3215
    %v3348 = vsel %vm3280, %v3288, %v3216
    %v3349 = vsel %vm3281, %v3288, %v3217
    %v3350 = vsel %vm3282, %v3288, %v3218
    %v3351 = vsel %vm3283, %v3288, %v3219
    %v3352 = vsel %vm3284, %v3288, %v3220
    %v3353 = vmul.u32 %v2231, 2
    %v3354 = vmul.u32 %v2232, 2
    %v3355 = vmul.u32 %v2233, 2
    %v3356 = vmul.u32 %v2234, 2
    %v3357 = vmul.u32 %v2235, 2
    %v3358 = vmul.u32 %v2236, 2
    %v3359 = vmul.u32 %v2237, 2
    %v3360 = vmul.u32 %v2238, 2
    %v3361 = vmul.u32 %v2239, 2
    %v3362 = vmul.u32 %v2240, 2
    %v3363 = vmul.u32 %v2241, 2
    %v3364 = vmul.u32 %v2242, 2
    %v3365 = vmul.u32 %v2243, 2
    %v3366 = vmul.u32 %v2244, 2
    %v3367 = vmul.u32 %v2245, 2
    %v3368 = vmul.u32 %v2246, 2
    %v3369 = vmul.u32 %v2247, 2
    %v3370 = vmul.u32 %v2248, 2
    %v3371 = vmul.u32 %v2249, 2
    %v3372 = vmul.u32 %v2250, 2
    %v3373 = vmul.u32 %v2251, 2
    %v3374 = vmul.u32 %v2252, 2
    %v3375 = vmul.u32 %v2253, 2
    %v3376 = vmul.u32 %v2254, 2
    %v3377 = vmul.u32 %v2255, 2
    %v3378 = vmul.u32 %v2256, 2
    %v3379 = vmul.u32 %v2257, 2
    %v3380 = vmul.u32 %v2258, 2
    %v3381 = vmul.u32 %v2259, 2
    %v3382 = vmul.u32 %v2260, 2
    %v3383 = vmul.u32 %v2261, 2
    %v3384 = vmul.u32 %v2262, 2
    %v3385 = vmul.u32 %v2263, 2
    %v3386 = vmul.u32 %v2264, 2
    %v3387 = vmul.u32 %v2265, 2
    %v3388 = vmul.u32 %v2266, 2
    %v3389 = vmul.u32 %v2267, 2
    %v3390 = vmul.u32 %v2268, 2
    %v3391 = vmul.u32 %v2269, 2
    %v3392 = vmul.u32 %v2270, 2
    %v3393 = vmul.u32 %v2271, 2
    %v3394 = vmul.u32 %v2272, 2
    %v3395 = vmul.u32 %v2273, 2
    %v3396 = vmul.u32 %v2274, 2
    %v3397 = vmul.u32 %v2275, 2
    %v3398 = vmul.u32 %v2276, 2
    %v3399 = vmul.u32 %v2277, 2
    %v3400 = vmul.u32 %v2278, 2
    %v3401 = vmul.u32 %v2279, 2
    %v3402 = vmul.u32 %v2280, 2
    %v3403 = vmul.u32 %v2281, 2
    %v3404 = vmul.u32 %v2282, 2
    %v3405 = vmul.u32 %v2283, 2
    %v3406 = vmul.u32 %v2284, 2
    %v3407 = vmul.u32 %v2285, 2
    %v3408 = vmul.u32 %v2286, 2
    %v3409 = vmul.u32 %v2287, 2
    %v3410 = vmul.u32 %v2288, 2
    %v3411 = vmul.u32 %v2289, 2
    %v3412 = vmul.u32 %v2290, 2
    %v3413 = vmul.u32 %v2291, 2
    %v3414 = vmul.u32 %v2292, 2
    %v3415 = vmul.u32 %v2293, 2
    %v3416 = vmul.u32 %v2294, 2
    %3481 = vrot.lane.b32.xlu0 %v3289, 24
    %v3482 = vpop.permute.xlu0 %3481
    %3483 = vrot.lane.b32.xlu0 %v3290, 24
    %v3484 = vpop.permute.xlu0 %3483
    %3485 = vrot.lane.b32.xlu0 %v3291, 24
    %v3486 = vpop.permute.xlu0 %3485
    %3487 = vrot.lane.b32.xlu0 %v3292, 24
    %v3488 = vpop.permute.xlu0 %3487
    %3489 = vrot.lane.b32.xlu0 %v3293, 24
    %v3490 = vpop.permute.xlu0 %3489
    %3491 = vrot.lane.b32.xlu0 %v3294, 24
    %v3492 = vpop.permute.xlu0 %3491
    %3493 = vrot.lane.b32.xlu0 %v3295, 24
    %v3494 = vpop.permute.xlu0 %3493
    %3495 = vrot.lane.b32.xlu0 %v3296, 24
    %v3496 = vpop.permute.xlu0 %3495
    %3497 = vrot.lane.b32.xlu0 %v3297, 24
    %v3498 = vpop.permute.xlu0 %3497
    %3499 = vrot.lane.b32.xlu0 %v3298, 24
    %v3500 = vpop.permute.xlu0 %3499
    %3501 = vrot.lane.b32.xlu0 %v3299, 24
    %v3502 = vpop.permute.xlu0 %3501
    %3503 = vrot.lane.b32.xlu0 %v3300, 24
    %v3504 = vpop.permute.xlu0 %3503
    %3505 = vrot.lane.b32.xlu0 %v3301, 24
    %v3506 = vpop.permute.xlu0 %3505
    %3507 = vrot.lane.b32.xlu0 %v3302, 24
    %v3508 = vpop.permute.xlu0 %3507
    %3509 = vrot.lane.b32.xlu0 %v3303, 24
    %v3510 = vpop.permute.xlu0 %3509
    %3511 = vrot.lane.b32.xlu0 %v3304, 24
    %v3512 = vpop.permute.xlu0 %3511
    %3513 = vrot.lane.b32.xlu0 %v3305, 24
    %v3514 = vpop.permute.xlu0 %3513
    %3515 = vrot.lane.b32.xlu0 %v3306, 24
    %v3516 = vpop.permute.xlu0 %3515
    %3517 = vrot.lane.b32.xlu0 %v3307, 24
    %v3518 = vpop.permute.xlu0 %3517
    %3519 = vrot.lane.b32.xlu0 %v3308, 24
    %v3520 = vpop.permute.xlu0 %3519
    %3521 = vrot.lane.b32.xlu0 %v3309, 24
    %v3522 = vpop.permute.xlu0 %3521
    %3523 = vrot.lane.b32.xlu0 %v3310, 24
    %v3524 = vpop.permute.xlu0 %3523
    %3525 = vrot.lane.b32.xlu0 %v3311, 24
    %v3526 = vpop.permute.xlu0 %3525
    %3527 = vrot.lane.b32.xlu0 %v3312, 24
    %v3528 = vpop.permute.xlu0 %3527
    %3529 = vrot.lane.b32.xlu0 %v3313, 24
    %v3530 = vpop.permute.xlu0 %3529
    %3531 = vrot.lane.b32.xlu0 %v3314, 24
    %v3532 = vpop.permute.xlu0 %3531
    %3533 = vrot.lane.b32.xlu0 %v3315, 24
    %v3534 = vpop.permute.xlu0 %3533
    %3535 = vrot.lane.b32.xlu0 %v3316, 24
    %v3536 = vpop.permute.xlu0 %3535
    %3537 = vrot.lane.b32.xlu0 %v3317, 24
    %v3538 = vpop.permute.xlu0 %3537
    %3539 = vrot.lane.b32.xlu0 %v3318, 24
    %v3540 = vpop.permute.xlu0 %3539
    %3541 = vrot.lane.b32.xlu0 %v3319, 24
    %v3542 = vpop.permute.xlu0 %3541
    %3543 = vrot.lane.b32.xlu0 %v3320, 24
    %v3544 = vpop.permute.xlu0 %3543
    %3545 = vrot.lane.b32.xlu0 %v3321, 24
    %v3546 = vpop.permute.xlu0 %3545
    %3547 = vrot.lane.b32.xlu0 %v3322, 24
    %v3548 = vpop.permute.xlu0 %3547
    %3549 = vrot.lane.b32.xlu0 %v3323, 24
    %v3550 = vpop.permute.xlu0 %3549
    %3551 = vrot.lane.b32.xlu0 %v3324, 24
    %v3552 = vpop.permute.xlu0 %3551
    %3553 = vrot.lane.b32.xlu0 %v3325, 24
    %v3554 = vpop.permute.xlu0 %3553
    %3555 = vrot.lane.b32.xlu0 %v3326, 24
    %v3556 = vpop.permute.xlu0 %3555
    %3557 = vrot.lane.b32.xlu0 %v3327, 24
    %v3558 = vpop.permute.xlu0 %3557
    %3559 = vrot.lane.b32.xlu0 %v3328, 24
    %v3560 = vpop.permute.xlu0 %3559
    %3561 = vrot.lane.b32.xlu0 %v3329, 24
    %v3562 = vpop.permute.xlu0 %3561
    %3563 = vrot.lane.b32.xlu0 %v3330, 24
    %v3564 = vpop.permute.xlu0 %3563
    %3565 = vrot.lane.b32.xlu0 %v3331, 24
    %v3566 = vpop.permute.xlu0 %3565
    %3567 = vrot.lane.b32.xlu0 %v3332, 24
    %v3568 = vpop.permute.xlu0 %3567
    %3569 = vrot.lane.b32.xlu0 %v3333, 24
    %v3570 = vpop.permute.xlu0 %3569
    %3571 = vrot.lane.b32.xlu0 %v3334, 24
    %v3572 = vpop.permute.xlu0 %3571
    %3573 = vrot.lane.b32.xlu0 %v3335, 24
    %v3574 = vpop.permute.xlu0 %3573
    %3575 = vrot.lane.b32.xlu0 %v3336, 24
    %v3576 = vpop.permute.xlu0 %3575
    %3577 = vrot.lane.b32.xlu0 %v3337, 24
    %v3578 = vpop.permute.xlu0 %3577
    %3579 = vrot.lane.b32.xlu0 %v3338, 24
    %v3580 = vpop.permute.xlu0 %3579
    %3581 = vrot.lane.b32.xlu0 %v3339, 24
    %v3582 = vpop.permute.xlu0 %3581
    %3583 = vrot.lane.b32.xlu0 %v3340, 24
    %v3584 = vpop.permute.xlu0 %3583
    %3585 = vrot.lane.b32.xlu0 %v3341, 24
    %v3586 = vpop.permute.xlu0 %3585
    %3587 = vrot.lane.b32.xlu0 %v3342, 24
    %v3588 = vpop.permute.xlu0 %3587
    %3589 = vrot.lane.b32.xlu0 %v3343, 24
    %v3590 = vpop.permute.xlu0 %3589
    %3591 = vrot.lane.b32.xlu0 %v3344, 24
    %v3592 = vpop.permute.xlu0 %3591
    %3593 = vrot.lane.b32.xlu0 %v3345, 24
    %v3594 = vpop.permute.xlu0 %3593
    %3595 = vrot.lane.b32.xlu0 %v3346, 24
    %v3596 = vpop.permute.xlu0 %3595
    %3597 = vrot.lane.b32.xlu0 %v3347, 24
    %v3598 = vpop.permute.xlu0 %3597
    %3599 = vrot.lane.b32.xlu0 %v3348, 24
    %v3600 = vpop.permute.xlu0 %3599
    %3601 = vrot.lane.b32.xlu0 %v3349, 24
    %v3602 = vpop.permute.xlu0 %3601
    %3603 = vrot.lane.b32.xlu0 %v3350, 24
    %v3604 = vpop.permute.xlu0 %3603
    %3605 = vrot.lane.b32.xlu0 %v3351, 24
    %v3606 = vpop.permute.xlu0 %3605
    %3607 = vrot.lane.b32.xlu0 %v3352, 24
    %v3608 = vpop.permute.xlu0 %3607
    %vm3673 = vcmp.gt.f32.partialorder %v22, %v3482
    %vm3674 = vcmp.gt.f32.partialorder %v23, %v3484
    %vm3675 = vcmp.gt.f32.partialorder %v24, %v3486
    %vm3676 = vcmp.gt.f32.partialorder %v25, %v3488
    %vm3677 = vcmp.gt.f32.partialorder %v26, %v3490
    %vm3678 = vcmp.gt.f32.partialorder %v27, %v3492
    %vm3679 = vcmp.gt.f32.partialorder %v28, %v3494
    %vm3680 = vcmp.gt.f32.partialorder %v29, %v3496
    %vm3681 = vcmp.gt.f32.partialorder %v30, %v3498
    %vm3682 = vcmp.gt.f32.partialorder %v31, %v3500
    %vm3683 = vcmp.gt.f32.partialorder %v32, %v3502
    %vm3684 = vcmp.gt.f32.partialorder %v33, %v3504
    %vm3685 = vcmp.gt.f32.partialorder %v34, %v3506
    %vm3686 = vcmp.gt.f32.partialorder %v35, %v3508
    %vm3687 = vcmp.gt.f32.partialorder %v36, %v3510
    %vm3688 = vcmp.gt.f32.partialorder %v37, %v3512
    %vm3689 = vcmp.gt.f32.partialorder %v38, %v3514
    %vm3690 = vcmp.gt.f32.partialorder %v39, %v3516
    %vm3691 = vcmp.gt.f32.partialorder %v40, %v3518
    %vm3692 = vcmp.gt.f32.partialorder %v41, %v3520
    %vm3693 = vcmp.gt.f32.partialorder %v42, %v3522
    %vm3694 = vcmp.gt.f32.partialorder %v43, %v3524
    %vm3695 = vcmp.gt.f32.partialorder %v44, %v3526
    %vm3696 = vcmp.gt.f32.partialorder %v45, %v3528
    %vm3697 = vcmp.gt.f32.partialorder %v46, %v3530
    %vm3698 = vcmp.gt.f32.partialorder %v47, %v3532
    %vm3699 = vcmp.gt.f32.partialorder %v48, %v3534
    %vm3700 = vcmp.gt.f32.partialorder %v49, %v3536
    %vm3701 = vcmp.gt.f32.partialorder %v50, %v3538
    %vm3702 = vcmp.gt.f32.partialorder %v51, %v3540
    %vm3703 = vcmp.gt.f32.partialorder %v52, %v3542
    %vm3704 = vcmp.gt.f32.partialorder %v53, %v3544
    %vm3705 = vcmp.gt.f32.partialorder %v54, %v3546
    %vm3706 = vcmp.gt.f32.partialorder %v55, %v3548
    %vm3707 = vcmp.gt.f32.partialorder %v56, %v3550
    %vm3708 = vcmp.gt.f32.partialorder %v57, %v3552
    %vm3709 = vcmp.gt.f32.partialorder %v58, %v3554
    %vm3710 = vcmp.gt.f32.partialorder %v59, %v3556
    %vm3711 = vcmp.gt.f32.partialorder %v60, %v3558
    %vm3712 = vcmp.gt.f32.partialorder %v61, %v3560
    %vm3713 = vcmp.gt.f32.partialorder %v62, %v3562
    %vm3714 = vcmp.gt.f32.partialorder %v63, %v3564
    %vm3715 = vcmp.gt.f32.partialorder %v64, %v3566
    %vm3716 = vcmp.gt.f32.partialorder %v65, %v3568
    %vm3717 = vcmp.gt.f32.partialorder %v66, %v3570
    %vm3718 = vcmp.gt.f32.partialorder %v67, %v3572
    %vm3719 = vcmp.gt.f32.partialorder %v68, %v3574
    %vm3720 = vcmp.gt.f32.partialorder %v69, %v3576
    %vm3721 = vcmp.gt.f32.partialorder %v70, %v3578
    %vm3722 = vcmp.gt.f32.partialorder %v71, %v3580
    %vm3723 = vcmp.gt.f32.partialorder %v72, %v3582
    %vm3724 = vcmp.gt.f32.partialorder %v73, %v3584
    %vm3725 = vcmp.gt.f32.partialorder %v74, %v3586
    %vm3726 = vcmp.gt.f32.partialorder %v75, %v3588
    %vm3727 = vcmp.gt.f32.partialorder %v76, %v3590
    %vm3728 = vcmp.gt.f32.partialorder %v77, %v3592
    %vm3729 = vcmp.gt.f32.partialorder %v78, %v3594
    %vm3730 = vcmp.gt.f32.partialorder %v79, %v3596
    %vm3731 = vcmp.gt.f32.partialorder %v80, %v3598
    %vm3732 = vcmp.gt.f32.partialorder %v81, %v3600
    %vm3733 = vcmp.gt.f32.partialorder %v82, %v3602
    %vm3734 = vcmp.gt.f32.partialorder %v83, %v3604
    %vm3735 = vcmp.gt.f32.partialorder %v84, %v3606
    %vm3736 = vcmp.gt.f32.partialorder %v85, %v3608
    %v3737 = vsel %vm3673, 1, 0
    %v3738 = vsel %vm3674, 1, 0
    %v3739 = vsel %vm3675, 1, 0
    %v3740 = vsel %vm3676, 1, 0
    %v3741 = vsel %vm3677, 1, 0
    %v3742 = vsel %vm3678, 1, 0
    %v3743 = vsel %vm3679, 1, 0
    %v3744 = vsel %vm3680, 1, 0
    %v3745 = vsel %vm3681, 1, 0
    %v3746 = vsel %vm3682, 1, 0
    %v3747 = vsel %vm3683, 1, 0
    %v3748 = vsel %vm3684, 1, 0
    %v3749 = vsel %vm3685, 1, 0
    %v3750 = vsel %vm3686, 1, 0
    %v3751 = vsel %vm3687, 1, 0
    %v3752 = vsel %vm3688, 1, 0
    %v3753 = vsel %vm3689, 1, 0
    %v3754 = vsel %vm3690, 1, 0
    %v3755 = vsel %vm3691, 1, 0
    %v3756 = vsel %vm3692, 1, 0
    %v3757 = vsel %vm3693, 1, 0
    %v3758 = vsel %vm3694, 1, 0
    %v3759 = vsel %vm3695, 1, 0
    %v3760 = vsel %vm3696, 1, 0
    %v3761 = vsel %vm3697, 1, 0
    %v3762 = vsel %vm3698, 1, 0
    %v3763 = vsel %vm3699, 1, 0
    %v3764 = vsel %vm3700, 1, 0
    %v3765 = vsel %vm3701, 1, 0
    %v3766 = vsel %vm3702, 1, 0
    %v3767 = vsel %vm3703, 1, 0
    %v3768 = vsel %vm3704, 1, 0
    %v3769 = vsel %vm3705, 1, 0
    %v3770 = vsel %vm3706, 1, 0
    %v3771 = vsel %vm3707, 1, 0
    %v3772 = vsel %vm3708, 1, 0
    %v3773 = vsel %vm3709, 1, 0
    %v3774 = vsel %vm3710, 1, 0
    %v3775 = vsel %vm3711, 1, 0
    %v3776 = vsel %vm3712, 1, 0
    %v3777 = vsel %vm3713, 1, 0
    %v3778 = vsel %vm3714, 1, 0
    %v3779 = vsel %vm3715, 1, 0
    %v3780 = vsel %vm3716, 1, 0
    %v3781 = vsel %vm3717, 1, 0
    %v3782 = vsel %vm3718, 1, 0
    %v3783 = vsel %vm3719, 1, 0
    %v3784 = vsel %vm3720, 1, 0
    %v3785 = vsel %vm3721, 1, 0
    %v3786 = vsel %vm3722, 1, 0
    %v3787 = vsel %vm3723, 1, 0
    %v3788 = vsel %vm3724, 1, 0
    %v3789 = vsel %vm3725, 1, 0
    %v3790 = vsel %vm3726, 1, 0
    %v3791 = vsel %vm3727, 1, 0
    %v3792 = vsel %vm3728, 1, 0
    %v3793 = vsel %vm3729, 1, 0
    %v3794 = vsel %vm3730, 1, 0
    %v3795 = vsel %vm3731, 1, 0
    %v3796 = vsel %vm3732, 1, 0
    %v3797 = vsel %vm3733, 1, 0
    %v3798 = vsel %vm3734, 1, 0
    %v3799 = vsel %vm3735, 1, 0
    %v3800 = vsel %vm3736, 1, 0
    %3801 = vrot.lane.b32.xlu0 %v3737, 104
    %v3802 = vpop.permute.xlu0 %3801
    %3803 = vrot.lane.b32.xlu0 %v3738, 104
    %v3804 = vpop.permute.xlu0 %3803
    %3805 = vrot.lane.b32.xlu0 %v3739, 104
    %v3806 = vpop.permute.xlu0 %3805
    %3807 = vrot.lane.b32.xlu0 %v3740, 104
    %v3808 = vpop.permute.xlu0 %3807
    %3809 = vrot.lane.b32.xlu0 %v3741, 104
    %v3810 = vpop.permute.xlu0 %3809
    %3811 = vrot.lane.b32.xlu0 %v3742, 104
    %v3812 = vpop.permute.xlu0 %3811
    %3813 = vrot.lane.b32.xlu0 %v3743, 104
    %v3814 = vpop.permute.xlu0 %3813
    %3815 = vrot.lane.b32.xlu0 %v3744, 104
    %v3816 = vpop.permute.xlu0 %3815
    %3817 = vrot.lane.b32.xlu0 %v3745, 104
    %v3818 = vpop.permute.xlu0 %3817
    %3819 = vrot.lane.b32.xlu0 %v3746, 104
    %v3820 = vpop.permute.xlu0 %3819
    %3821 = vrot.lane.b32.xlu0 %v3747, 104
    %v3822 = vpop.permute.xlu0 %3821
    %3823 = vrot.lane.b32.xlu0 %v3748, 104
    %v3824 = vpop.permute.xlu0 %3823
    %3825 = vrot.lane.b32.xlu0 %v3749, 104
    %v3826 = vpop.permute.xlu0 %3825
    %3827 = vrot.lane.b32.xlu0 %v3750, 104
    %v3828 = vpop.permute.xlu0 %3827
    %3829 = vrot.lane.b32.xlu0 %v3751, 104
    %v3830 = vpop.permute.xlu0 %3829
    %3831 = vrot.lane.b32.xlu0 %v3752, 104
    %v3832 = vpop.permute.xlu0 %3831
    %3833 = vrot.lane.b32.xlu0 %v3753, 104
    %v3834 = vpop.permute.xlu0 %3833
    %3835 = vrot.lane.b32.xlu0 %v3754, 104
    %v3836 = vpop.permute.xlu0 %3835
    %3837 = vrot.lane.b32.xlu0 %v3755, 104
    %v3838 = vpop.permute.xlu0 %3837
    %3839 = vrot.lane.b32.xlu0 %v3756, 104
    %v3840 = vpop.permute.xlu0 %3839
    %3841 = vrot.lane.b32.xlu0 %v3757, 104
    %v3842 = vpop.permute.xlu0 %3841
    %3843 = vrot.lane.b32.xlu0 %v3758, 104
    %v3844 = vpop.permute.xlu0 %3843
    %3845 = vrot.lane.b32.xlu0 %v3759, 104
    %v3846 = vpop.permute.xlu0 %3845
    %3847 = vrot.lane.b32.xlu0 %v3760, 104
    %v3848 = vpop.permute.xlu0 %3847
    %3849 = vrot.lane.b32.xlu0 %v3761, 104
    %v3850 = vpop.permute.xlu0 %3849
    %3851 = vrot.lane.b32.xlu0 %v3762, 104
    %v3852 = vpop.permute.xlu0 %3851
    %3853 = vrot.lane.b32.xlu0 %v3763, 104
    %v3854 = vpop.permute.xlu0 %3853
    %3855 = vrot.lane.b32.xlu0 %v3764, 104
    %v3856 = vpop.permute.xlu0 %3855
    %3857 = vrot.lane.b32.xlu0 %v3765, 104
    %v3858 = vpop.permute.xlu0 %3857
    %3859 = vrot.lane.b32.xlu0 %v3766, 104
    %v3860 = vpop.permute.xlu0 %3859
    %3861 = vrot.lane.b32.xlu0 %v3767, 104
    %v3862 = vpop.permute.xlu0 %3861
    %3863 = vrot.lane.b32.xlu0 %v3768, 104
    %v3864 = vpop.permute.xlu0 %3863
    %3865 = vrot.lane.b32.xlu0 %v3769, 104
    %v3866 = vpop.permute.xlu0 %3865
    %3867 = vrot.lane.b32.xlu0 %v3770, 104
    %v3868 = vpop.permute.xlu0 %3867
    %3869 = vrot.lane.b32.xlu0 %v3771, 104
    %v3870 = vpop.permute.xlu0 %3869
    %3871 = vrot.lane.b32.xlu0 %v3772, 104
    %v3872 = vpop.permute.xlu0 %3871
    %3873 = vrot.lane.b32.xlu0 %v3773, 104
    %v3874 = vpop.permute.xlu0 %3873
    %3875 = vrot.lane.b32.xlu0 %v3774, 104
    %v3876 = vpop.permute.xlu0 %3875
    %3877 = vrot.lane.b32.xlu0 %v3775, 104
    %v3878 = vpop.permute.xlu0 %3877
    %3879 = vrot.lane.b32.xlu0 %v3776, 104
    %v3880 = vpop.permute.xlu0 %3879
    %3881 = vrot.lane.b32.xlu0 %v3777, 104
    %v3882 = vpop.permute.xlu0 %3881
    %3883 = vrot.lane.b32.xlu0 %v3778, 104
    %v3884 = vpop.permute.xlu0 %3883
    %3885 = vrot.lane.b32.xlu0 %v3779, 104
    %v3886 = vpop.permute.xlu0 %3885
    %3887 = vrot.lane.b32.xlu0 %v3780, 104
    %v3888 = vpop.permute.xlu0 %3887
    %3889 = vrot.lane.b32.xlu0 %v3781, 104
    %v3890 = vpop.permute.xlu0 %3889
    %3891 = vrot.lane.b32.xlu0 %v3782, 104
    %v3892 = vpop.permute.xlu0 %3891
    %3893 = vrot.lane.b32.xlu0 %v3783, 104
    %v3894 = vpop.permute.xlu0 %3893
    %3895 = vrot.lane.b32.xlu0 %v3784, 104
    %v3896 = vpop.permute.xlu0 %3895
    %3897 = vrot.lane.b32.xlu0 %v3785, 104
    %v3898 = vpop.permute.xlu0 %3897
    %3899 = vrot.lane.b32.xlu0 %v3786, 104
    %v3900 = vpop.permute.xlu0 %3899
    %3901 = vrot.lane.b32.xlu0 %v3787, 104
    %v3902 = vpop.permute.xlu0 %3901
    %3903 = vrot.lane.b32.xlu0 %v3788, 104
    %v3904 = vpop.permute.xlu0 %3903
    %3905 = vrot.lane.b32.xlu0 %v3789, 104
    %v3906 = vpop.permute.xlu0 %3905
    %3907 = vrot.lane.b32.xlu0 %v3790, 104
    %v3908 = vpop.permute.xlu0 %3907
    %3909 = vrot.lane.b32.xlu0 %v3791, 104
    %v3910 = vpop.permute.xlu0 %3909
    %3911 = vrot.lane.b32.xlu0 %v3792, 104
    %v3912 = vpop.permute.xlu0 %3911
    %3913 = vrot.lane.b32.xlu0 %v3793, 104
    %v3914 = vpop.permute.xlu0 %3913
    %3915 = vrot.lane.b32.xlu0 %v3794, 104
    %v3916 = vpop.permute.xlu0 %3915
    %3917 = vrot.lane.b32.xlu0 %v3795, 104
    %v3918 = vpop.permute.xlu0 %3917
    %3919 = vrot.lane.b32.xlu0 %v3796, 104
    %v3920 = vpop.permute.xlu0 %3919
    %3921 = vrot.lane.b32.xlu0 %v3797, 104
    %v3922 = vpop.permute.xlu0 %3921
    %3923 = vrot.lane.b32.xlu0 %v3798, 104
    %v3924 = vpop.permute.xlu0 %3923
    %3925 = vrot.lane.b32.xlu0 %v3799, 104
    %v3926 = vpop.permute.xlu0 %3925
    %3927 = vrot.lane.b32.xlu0 %v3800, 104
    %v3928 = vpop.permute.xlu0 %3927
    %v3929 = vadd.s32 %v3353, %v3802
    %v3930 = vadd.s32 %v3354, %v3804
    %v3931 = vadd.s32 %v3355, %v3806
    %v3932 = vadd.s32 %v3356, %v3808
    %v3933 = vadd.s32 %v3357, %v3810
    %v3934 = vadd.s32 %v3358, %v3812
    %v3935 = vadd.s32 %v3359, %v3814
    %v3936 = vadd.s32 %v3360, %v3816
    %v3937 = vadd.s32 %v3361, %v3818
    %v3938 = vadd.s32 %v3362, %v3820
    %v3939 = vadd.s32 %v3363, %v3822
    %v3940 = vadd.s32 %v3364, %v3824
    %v3941 = vadd.s32 %v3365, %v3826
    %v3942 = vadd.s32 %v3366, %v3828
    %v3943 = vadd.s32 %v3367, %v3830
    %v3944 = vadd.s32 %v3368, %v3832
    %v3945 = vadd.s32 %v3369, %v3834
    %v3946 = vadd.s32 %v3370, %v3836
    %v3947 = vadd.s32 %v3371, %v3838
    %v3948 = vadd.s32 %v3372, %v3840
    %v3949 = vadd.s32 %v3373, %v3842
    %v3950 = vadd.s32 %v3374, %v3844
    %v3951 = vadd.s32 %v3375, %v3846
    %v3952 = vadd.s32 %v3376, %v3848
    %v3953 = vadd.s32 %v3377, %v3850
    %v3954 = vadd.s32 %v3378, %v3852
    %v3955 = vadd.s32 %v3379, %v3854
    %v3956 = vadd.s32 %v3380, %v3856
    %v3957 = vadd.s32 %v3381, %v3858
    %v3958 = vadd.s32 %v3382, %v3860
    %v3959 = vadd.s32 %v3383, %v3862
    %v3960 = vadd.s32 %v3384, %v3864
    %v3961 = vadd.s32 %v3385, %v3866
    %v3962 = vadd.s32 %v3386, %v3868
    %v3963 = vadd.s32 %v3387, %v3870
    %v3964 = vadd.s32 %v3388, %v3872
    %v3965 = vadd.s32 %v3389, %v3874
    %v3966 = vadd.s32 %v3390, %v3876
    %v3967 = vadd.s32 %v3391, %v3878
    %v3968 = vadd.s32 %v3392, %v3880
    %v3969 = vadd.s32 %v3393, %v3882
    %v3970 = vadd.s32 %v3394, %v3884
    %v3971 = vadd.s32 %v3395, %v3886
    %v3972 = vadd.s32 %v3396, %v3888
    %v3973 = vadd.s32 %v3397, %v3890
    %v3974 = vadd.s32 %v3398, %v3892
    %v3975 = vadd.s32 %v3399, %v3894
    %v3976 = vadd.s32 %v3400, %v3896
    %v3977 = vadd.s32 %v3401, %v3898
    %v3978 = vadd.s32 %v3402, %v3900
    %v3979 = vadd.s32 %v3403, %v3902
    %v3980 = vadd.s32 %v3404, %v3904
    %v3981 = vadd.s32 %v3405, %v3906
    %v3982 = vadd.s32 %v3406, %v3908
    %v3983 = vadd.s32 %v3407, %v3910
    %v3984 = vadd.s32 %v3408, %v3912
    %v3985 = vadd.s32 %v3409, %v3914
    %v3986 = vadd.s32 %v3410, %v3916
    %v3987 = vadd.s32 %v3411, %v3918
    %v3988 = vadd.s32 %v3412, %v3920
    %v3989 = vadd.s32 %v3413, %v3922
    %v3990 = vadd.s32 %v3414, %v3924
    %v3991 = vadd.s32 %v3415, %v3926
    %v3992 = vadd.s32 %v3416, %v3928
    %v3993 = vcvt.s32.f32 %v3929
    %v3994 = vcvt.s32.f32 %v3930
    %v3995 = vcvt.s32.f32 %v3931
    %v3996 = vcvt.s32.f32 %v3932
    %v3997 = vcvt.s32.f32 %v3933
    %v3998 = vcvt.s32.f32 %v3934
    %v3999 = vcvt.s32.f32 %v3935
    %v4000 = vcvt.s32.f32 %v3936
    %v4001 = vcvt.s32.f32 %v3937
    %v4002 = vcvt.s32.f32 %v3938
    %v4003 = vcvt.s32.f32 %v3939
    %v4004 = vcvt.s32.f32 %v3940
    %v4005 = vcvt.s32.f32 %v3941
    %v4006 = vcvt.s32.f32 %v3942
    %v4007 = vcvt.s32.f32 %v3943
    %v4008 = vcvt.s32.f32 %v3944
    %v4009 = vcvt.s32.f32 %v3945
    %v4010 = vcvt.s32.f32 %v3946
    %v4011 = vcvt.s32.f32 %v3947
    %v4012 = vcvt.s32.f32 %v3948
    %v4013 = vcvt.s32.f32 %v3949
    %v4014 = vcvt.s32.f32 %v3950
    %v4015 = vcvt.s32.f32 %v3951
    %v4016 = vcvt.s32.f32 %v3952
    %v4017 = vcvt.s32.f32 %v3953
    %v4018 = vcvt.s32.f32 %v3954
    %v4019 = vcvt.s32.f32 %v3955
    %v4020 = vcvt.s32.f32 %v3956
    %v4021 = vcvt.s32.f32 %v3957
    %v4022 = vcvt.s32.f32 %v3958
    %v4023 = vcvt.s32.f32 %v3959
    %v4024 = vcvt.s32.f32 %v3960
    %v4025 = vcvt.s32.f32 %v3961
    %v4026 = vcvt.s32.f32 %v3962
    %v4027 = vcvt.s32.f32 %v3963
    %v4028 = vcvt.s32.f32 %v3964
    %v4029 = vcvt.s32.f32 %v3965
    %v4030 = vcvt.s32.f32 %v3966
    %v4031 = vcvt.s32.f32 %v3967
    %v4032 = vcvt.s32.f32 %v3968
    %v4033 = vcvt.s32.f32 %v3969
    %v4034 = vcvt.s32.f32 %v3970
    %v4035 = vcvt.s32.f32 %v3971
    %v4036 = vcvt.s32.f32 %v3972
    %v4037 = vcvt.s32.f32 %v3973
    %v4038 = vcvt.s32.f32 %v3974
    %v4039 = vcvt.s32.f32 %v3975
    %v4040 = vcvt.s32.f32 %v3976
    %v4041 = vcvt.s32.f32 %v3977
    %v4042 = vcvt.s32.f32 %v3978
    %v4043 = vcvt.s32.f32 %v3979
    %v4044 = vcvt.s32.f32 %v3980
    %v4045 = vcvt.s32.f32 %v3981
    %v4046 = vcvt.s32.f32 %v3982
    %v4047 = vcvt.s32.f32 %v3983
    %v4048 = vcvt.s32.f32 %v3984
    %v4049 = vcvt.s32.f32 %v3985
    %v4050 = vcvt.s32.f32 %v3986
    %v4051 = vcvt.s32.f32 %v3987
    %v4052 = vcvt.s32.f32 %v3988
    %v4053 = vcvt.s32.f32 %v3989
    %v4054 = vcvt.s32.f32 %v3990
    %v4055 = vcvt.s32.f32 %v3991
    %v4056 = vcvt.s32.f32 %v3992
    %v4057 = vld [vmem:[%s2] sm:$0xff]
    %vm4058 = vcmask 64512
    %v4060 = vsel %vm4058, %v3993, 0
    %v4063 = vsel %vm4058, %v3994, 0
    %v4066 = vsel %vm4058, %v3995, 0
    %v4069 = vsel %vm4058, %v3996, 0
    %v4072 = vsel %vm4058, %v3997, 0
    %v4075 = vsel %vm4058, %v3998, 0
    %v4078 = vsel %vm4058, %v3999, 0
    %v4081 = vsel %vm4058, %v4000, 0
    %v4084 = vsel %vm4058, %v4001, 0
    %v4087 = vsel %vm4058, %v4002, 0
    %v4090 = vsel %vm4058, %v4003, 0
    %v4093 = vsel %vm4058, %v4004, 0
    %v4096 = vsel %vm4058, %v4005, 0
    %v4099 = vsel %vm4058, %v4006, 0
    %v4102 = vsel %vm4058, %v4007, 0
    %v4105 = vsel %vm4058, %v4008, 0
    %v4108 = vsel %vm4058, %v4009, 0
    %v4111 = vsel %vm4058, %v4010, 0
    %v4114 = vsel %vm4058, %v4011, 0
    %v4117 = vsel %vm4058, %v4012, 0
    %v4120 = vsel %vm4058, %v4013, 0
    %v4123 = vsel %vm4058, %v4014, 0
    %v4126 = vsel %vm4058, %v4015, 0
    %v4129 = vsel %vm4058, %v4016, 0
    %v4132 = vsel %vm4058, %v4017, 0
    %v4135 = vsel %vm4058, %v4018, 0
    %v4138 = vsel %vm4058, %v4019, 0
    %v4141 = vsel %vm4058, %v4020, 0
    %v4144 = vsel %vm4058, %v4021, 0
    %v4147 = vsel %vm4058, %v4022, 0
    %v4150 = vsel %vm4058, %v4023, 0
    %v4153 = vsel %vm4058, %v4024, 0
    %v4156 = vsel %vm4058, %v4025, 0
    %v4159 = vsel %vm4058, %v4026, 0
    %v4162 = vsel %vm4058, %v4027, 0
    %v4165 = vsel %vm4058, %v4028, 0
    %v4168 = vsel %vm4058, %v4029, 0
    %v4171 = vsel %vm4058, %v4030, 0
    %v4174 = vsel %vm4058, %v4031, 0
    %v4177 = vsel %vm4058, %v4032, 0
    %v4180 = vsel %vm4058, %v4033, 0
    %v4183 = vsel %vm4058, %v4034, 0
    %v4186 = vsel %vm4058, %v4035, 0
    %v4189 = vsel %vm4058, %v4036, 0
    %v4192 = vsel %vm4058, %v4037, 0
    %v4195 = vsel %vm4058, %v4038, 0
    %v4198 = vsel %vm4058, %v4039, 0
    %v4201 = vsel %vm4058, %v4040, 0
    %v4204 = vsel %vm4058, %v4041, 0
    %v4207 = vsel %vm4058, %v4042, 0
    %v4210 = vsel %vm4058, %v4043, 0
    %v4213 = vsel %vm4058, %v4044, 0
    %v4216 = vsel %vm4058, %v4045, 0
    %v4219 = vsel %vm4058, %v4046, 0
    %v4222 = vsel %vm4058, %v4047, 0
    %v4225 = vsel %vm4058, %v4048, 0
    %v4228 = vsel %vm4058, %v4049, 0
    %v4231 = vsel %vm4058, %v4050, 0
    %v4234 = vsel %vm4058, %v4051, 0
    %v4237 = vsel %vm4058, %v4052, 0
    %v4240 = vsel %vm4058, %v4053, 0
    %v4243 = vsel %vm4058, %v4054, 0
    %v4246 = vsel %vm4058, %v4055, 0
    %v4249 = vsel %vm4058, %v4056, 0
    %4251 = vmatprep.subr.mxu0 0.0
    %4252 = vmatpush1.msra.mxu0 %v4057
    %4253 = vmatprep.subr.mxu0 0.0
    %4254 = vmatpush1.msra.mxu0 0.0
    %4255 = vmatprep.subr.mxu0 0.0
    %4256 = vmatpush1.msra.mxu0 0.0
    %4257 = vmatprep.subr.mxu0 0.0
    %4258 = vmatpush1.msra.mxu0 0.0
    %4259 = vmatprep.subr.mxu0 0.0
    %4260 = vmatpush1.msra.mxu0 0.0
    %4261 = vmatprep.subr.mxu0 0.0
    %4262 = vmatpush1.msra.mxu0 0.0
    %4263 = vmatprep.subr.mxu0 0.0
    %4264 = vmatpush1.msra.mxu0 0.0
    %4265 = vmatprep.subr.mxu0 0.0
    %4266 = vmatpush1.msra.mxu0 0.0
    %4267 = vmatprep.subr.mxu0 0.0
    %4268 = vmatpush1.msra.mxu0 0.0
    %4269 = vmatprep.subr.mxu0 0.0
    %4270 = vmatpush1.msra.mxu0 0.0
    %4271 = vmatprep.subr.mxu0 0.0
    %4272 = vmatpush1.msra.mxu0 0.0
    %4273 = vmatprep.subr.mxu0 0.0
    %4274 = vmatpush1.msra.mxu0 0.0
    %4275 = vmatprep.subr.mxu0 0.0
    %4276 = vmatpush1.msra.mxu0 0.0
    %4277 = vmatprep.subr.mxu0 0.0
    %4278 = vmatpush1.msra.mxu0 0.0
    %4279 = vmatprep.subr.mxu0 0.0
    %4280 = vmatpush1.msra.mxu0 0.0
    %4281 = vmatprep.subr.mxu0 0.0
    %4282 = vmatpush1.msra.mxu0 0.0
    %4283 = vmatprep.subr.mxu0 0.0
    %4284 = vmatpush1.msra.mxu0 0.0
    %4285 = vmatprep.subr.mxu0 0.0
    %4286 = vmatpush1.msra.mxu0 0.0
    %4287 = vmatprep.subr.mxu0 0.0
    %4288 = vmatpush1.msra.mxu0 0.0
    %4289 = vmatprep.subr.mxu0 0.0
    %4290 = vmatpush1.msra.mxu0 0.0
    %4291 = vmatprep.subr.mxu0 0.0
    %4292 = vmatpush1.msra.mxu0 0.0
    %4293 = vmatprep.subr.mxu0 0.0
    %4294 = vmatpush1.msra.mxu0 0.0
    %4295 = vmatprep.subr.mxu0 0.0
    %4296 = vmatpush1.msra.mxu0 0.0
    %4297 = vmatprep.subr.mxu0 0.0
    %4298 = vmatpush1.msra.mxu0 0.0
    %4299 = vmatprep.subr.mxu0 0.0
    %4300 = vmatpush1.msra.mxu0 0.0
    %4301 = vmatprep.subr.mxu0 0.0
    %4302 = vmatpush1.msra.mxu0 0.0
    %4303 = vmatprep.subr.mxu0 0.0
    %4304 = vmatpush1.msra.mxu0 0.0
    %4305 = vmatprep.subr.mxu0 0.0
    %4306 = vmatpush1.msra.mxu0 0.0
    %4307 = vmatprep.subr.mxu0 0.0
    %4308 = vmatpush1.msra.mxu0 0.0
    %4309 = vmatprep.subr.mxu0 0.0
    %4310 = vmatpush1.msra.mxu0 0.0
    %4311 = vmatprep.subr.mxu0 0.0
    %4312 = vmatpush1.msra.mxu0 0.0
    %4313 = vmatprep.subr.mxu0 0.0
    %4314 = vmatpush1.msra.mxu0 0.0
    %4315 = vmatprep.mubr.f32.mxu0 0.0
    %4316 = vmatmul.mubr.f32.gmra.mrb[0].mxu0 %v4060
    %v4317 = vpop.f32.mrb[0].mxu0
    %v4318 = vadd.f32 0.0, %v4317
    %v4319 = vpop.f32.mrb[0].mxu0
    %4320 = vmatprep.mubr.f32.mxu0 0.0
    %4321 = vmatmul.mubr.f32.gmra.mrb[0].mxu0 %v4063
    %v4322 = vpop.f32.mrb[0].mxu0
    %v4323 = vadd.f32 0.0, %v4322
    %v4324 = vpop.f32.mrb[0].mxu0
    %4325 = vmatprep.mubr.f32.mxu0 0.0
    %4326 = vmatmul.mubr.f32.gmra.mrb[0].mxu0 %v4066
    %v4327 = vpop.f32.mrb[0].mxu0
    %v4328 = vadd.f32 0.0, %v4327
    %v4329 = vpop.f32.mrb[0].mxu0
    %4330 = vmatprep.mubr.f32.mxu0 0.0
    %4331 = vmatmul.mubr.f32.gmra.mrb[0].mxu0 %v4069
    %v4332 = vpop.f32.mrb[0].mxu0
    %v4333 = vadd.f32 0.0, %v4332
    %v4334 = vpop.f32.mrb[0].mxu0
    %4335 = vmatprep.mubr.f32.mxu0 0.0
    %4336 = vmatmul.mubr.f32.gmra.mrb[0].mxu0 %v4072
    %v4337 = vpop.f32.mrb[0].mxu0
    %v4338 = vadd.f32 0.0, %v4337
    %v4339 = vpop.f32.mrb[0].mxu0
    %4340 = vmatprep.mubr.f32.mxu0 0.0
    %4341 = vmatmul.mubr.f32.gmra.mrb[0].mxu0 %v4075
    %v4342 = vpop.f32.mrb[0].mxu0
    %v4343 = vadd.f32 0.0, %v4342
    %v4344 = vpop.f32.mrb[0].mxu0
    %4345 = vmatprep.mubr.f32.mxu0 0.0
    %4346 = vmatmul.mubr.f32.gmra.mrb[0].mxu0 %v4078
    %v4347 = vpop.f32.mrb[0].mxu0
    %v4348 = vadd.f32 0.0, %v4347
    %v4349 = vpop.f32.mrb[0].mxu0
    %4350 = vmatprep.mubr.f32.mxu0 0.0
    %4351 = vmatmul.mubr.f32.gmra.mrb[0].mxu0 %v4081
    %v4352 = vpop.f32.mrb[0].mxu0
    %v4353 = vadd.f32 0.0, %v4352
    %v4354 = vpop.f32.mrb[0].mxu0
    %4355 = vmatprep.mubr.f32.mxu0 0.0
    %4356 = vmatmul.mubr.f32.gmra.mrb[0].mxu0 %v4084
    %v4357 = vpop.f32.mrb[0].mxu0
    %v4358 = vadd.f32 0.0, %v4357
    %v4359 = vpop.f32.mrb[0].mxu0
    %4360 = vmatprep.mubr.f32.mxu0 0.0
    %4361 = vmatmul.mubr.f32.gmra.mrb[0].mxu0 %v4087
    %v4362 = vpop.f32.mrb[0].mxu0
    %v4363 = vadd.f32 0.0, %v4362
    %v4364 = vpop.f32.mrb[0].mxu0
    %4365 = vmatprep.mubr.f32.mxu0 0.0
    %4366 = vmatmul.mubr.f32.gmra.mrb[0].mxu0 %v4090
    %v4367 = vpop.f32.mrb[0].mxu0
    %v4368 = vadd.f32 0.0, %v4367
    %v4369 = vpop.f32.mrb[0].mxu0
    %4370 = vmatprep.mubr.f32.mxu0 0.0
    %4371 = vmatmul.mubr.f32.gmra.mrb[0].mxu0 %v4093
    %v4372 = vpop.f32.mrb[0].mxu0
    %v4373 = vadd.f32 0.0, %v4372
    %v4374 = vpop.f32.mrb[0].mxu0
    %4375 = vmatprep.mubr.f32.mxu0 0.0
    %4376 = vmatmul.mubr.f32.gmra.mrb[0].mxu0 %v4096
    %v4377 = vpop.f32.mrb[0].mxu0
    %v4378 = vadd.f32 0.0, %v4377
    %v4379 = vpop.f32.mrb[0].mxu0
    %4380 = vmatprep.mubr.f32.mxu0 0.0
    %4381 = vmatmul.mubr.f32.gmra.mrb[0].mxu0 %v4099
    %v4382 = vpop.f32.mrb[0].mxu0
    %v4383 = vadd.f32 0.0, %v4382
    %v4384 = vpop.f32.mrb[0].mxu0
    %4385 = vmatprep.mubr.f32.mxu0 0.0
    %4386 = vmatmul.mubr.f32.gmra.mrb[0].mxu0 %v4102
    %v4387 = vpop.f32.mrb[0].mxu0
    %v4388 = vadd.f32 0.0, %v4387
    %v4389 = vpop.f32.mrb[0].mxu0
    %4390 = vmatprep.mubr.f32.mxu0 0.0
    %4391 = vmatmul.mubr.f32.gmra.mrb[0].mxu0 %v4105
    %v4392 = vpop.f32.mrb[0].mxu0
    %v4393 = vadd.f32 0.0, %v4392
    %v4394 = vpop.f32.mrb[0].mxu0
    %4395 = vmatprep.mubr.f32.mxu0 0.0
    %4396 = vmatmul.mubr.f32.gmra.mrb[0].mxu0 %v4108
    %v4397 = vpop.f32.mrb[0].mxu0
    %v4398 = vadd.f32 0.0, %v4397
    %v4399 = vpop.f32.mrb[0].mxu0
    %4400 = vmatprep.mubr.f32.mxu0 0.0
    %4401 = vmatmul.mubr.f32.gmra.mrb[0].mxu0 %v4111
    %v4402 = vpop.f32.mrb[0].mxu0
    %v4403 = vadd.f32 0.0, %v4402
    %v4404 = vpop.f32.mrb[0].mxu0
    %4405 = vmatprep.mubr.f32.mxu0 0.0
    %4406 = vmatmul.mubr.f32.gmra.mrb[0].mxu0 %v4114
    %v4407 = vpop.f32.mrb[0].mxu0
    %v4408 = vadd.f32 0.0, %v4407
    %v4409 = vpop.f32.mrb[0].mxu0
    %4410 = vmatprep.mubr.f32.mxu0 0.0
    %4411 = vmatmul.mubr.f32.gmra.mrb[0].mxu0 %v4117
    %v4412 = vpop.f32.mrb[0].mxu0
    %v4413 = vadd.f32 0.0, %v4412
    %v4414 = vpop.f32.mrb[0].mxu0
    %4415 = vmatprep.mubr.f32.mxu0 0.0
    %4416 = vmatmul.mubr.f32.gmra.mrb[0].mxu0 %v4120
    %v4417 = vpop.f32.mrb[0].mxu0
    %v4418 = vadd.f32 0.0, %v4417
    %v4419 = vpop.f32.mrb[0].mxu0
    %4420 = vmatprep.mubr.f32.mxu0 0.0
    %4421 = vmatmul.mubr.f32.gmra.mrb[0].mxu0 %v4123
    %v4422 = vpop.f32.mrb[0].mxu0
    %v4423 = vadd.f32 0.0, %v4422
    %v4424 = vpop.f32.mrb[0].mxu0
    %4425 = vmatprep.mubr.f32.mxu0 0.0
    %4426 = vmatmul.mubr.f32.gmra.mrb[0].mxu0 %v4126
    %v4427 = vpop.f32.mrb[0].mxu0
    %v4428 = vadd.f32 0.0, %v4427
    %v4429 = vpop.f32.mrb[0].mxu0
    %4430 = vmatprep.mubr.f32.mxu0 0.0
    %4431 = vmatmul.mubr.f32.gmra.mrb[0].mxu0 %v4129
    %v4432 = vpop.f32.mrb[0].mxu0
    %v4433 = vadd.f32 0.0, %v4432
    %v4434 = vpop.f32.mrb[0].mxu0
    %4435 = vmatprep.mubr.f32.mxu0 0.0
    %4436 = vmatmul.mubr.f32.gmra.mrb[0].mxu0 %v4132
    %v4437 = vpop.f32.mrb[0].mxu0
    %v4438 = vadd.f32 0.0, %v4437
    %v4439 = vpop.f32.mrb[0].mxu0
    %4440 = vmatprep.mubr.f32.mxu0 0.0
    %4441 = vmatmul.mubr.f32.gmra.mrb[0].mxu0 %v4135
    %v4442 = vpop.f32.mrb[0].mxu0
    %v4443 = vadd.f32 0.0, %v4442
    %v4444 = vpop.f32.mrb[0].mxu0
    %4445 = vmatprep.mubr.f32.mxu0 0.0
    %4446 = vmatmul.mubr.f32.gmra.mrb[0].mxu0 %v4138
    %v4447 = vpop.f32.mrb[0].mxu0
    %v4448 = vadd.f32 0.0, %v4447
    %v4449 = vpop.f32.mrb[0].mxu0
    %4450 = vmatprep.mubr.f32.mxu0 0.0
    %4451 = vmatmul.mubr.f32.gmra.mrb[0].mxu0 %v4141
    %v4452 = vpop.f32.mrb[0].mxu0
    %v4453 = vadd.f32 0.0, %v4452
    %v4454 = vpop.f32.mrb[0].mxu0
    %4455 = vmatprep.mubr.f32.mxu0 0.0
    %4456 = vmatmul.mubr.f32.gmra.mrb[0].mxu0 %v4144
    %v4457 = vpop.f32.mrb[0].mxu0
    %v4458 = vadd.f32 0.0, %v4457
    %v4459 = vpop.f32.mrb[0].mxu0
    %4460 = vmatprep.mubr.f32.mxu0 0.0
    %4461 = vmatmul.mubr.f32.gmra.mrb[0].mxu0 %v4147
    %v4462 = vpop.f32.mrb[0].mxu0
    %v4463 = vadd.f32 0.0, %v4462
    %v4464 = vpop.f32.mrb[0].mxu0
    %4465 = vmatprep.mubr.f32.mxu0 0.0
    %4466 = vmatmul.mubr.f32.gmra.mrb[0].mxu0 %v4150
    %v4467 = vpop.f32.mrb[0].mxu0
    %v4468 = vadd.f32 0.0, %v4467
    %v4469 = vpop.f32.mrb[0].mxu0
    %4470 = vmatprep.mubr.f32.mxu0 0.0
    %4471 = vmatmul.mubr.f32.gmra.mrb[0].mxu0 %v4153
    %v4472 = vpop.f32.mrb[0].mxu0
    %v4473 = vadd.f32 0.0, %v4472
    %v4474 = vpop.f32.mrb[0].mxu0
    %4475 = vmatprep.mubr.f32.mxu0 0.0
    %4476 = vmatmul.mubr.f32.gmra.mrb[0].mxu0 %v4156
    %v4477 = vpop.f32.mrb[0].mxu0
    %v4478 = vadd.f32 0.0, %v4477
    %v4479 = vpop.f32.mrb[0].mxu0
    %4480 = vmatprep.mubr.f32.mxu0 0.0
    %4481 = vmatmul.mubr.f32.gmra.mrb[0].mxu0 %v4159
    %v4482 = vpop.f32.mrb[0].mxu0
    %v4483 = vadd.f32 0.0, %v4482
    %v4484 = vpop.f32.mrb[0].mxu0
    %4485 = vmatprep.mubr.f32.mxu0 0.0
    %4486 = vmatmul.mubr.f32.gmra.mrb[0].mxu0 %v4162
    %v4487 = vpop.f32.mrb[0].mxu0
    %v4488 = vadd.f32 0.0, %v4487
    %v4489 = vpop.f32.mrb[0].mxu0
    %4490 = vmatprep.mubr.f32.mxu0 0.0
    %4491 = vmatmul.mubr.f32.gmra.mrb[0].mxu0 %v4165
    %v4492 = vpop.f32.mrb[0].mxu0
    %v4493 = vadd.f32 0.0, %v4492
    %v4494 = vpop.f32.mrb[0].mxu0
    %4495 = vmatprep.mubr.f32.mxu0 0.0
    %4496 = vmatmul.mubr.f32.gmra.mrb[0].mxu0 %v4168
    %v4497 = vpop.f32.mrb[0].mxu0
    %v4498 = vadd.f32 0.0, %v4497
    %v4499 = vpop.f32.mrb[0].mxu0
    %4500 = vmatprep.mubr.f32.mxu0 0.0
    %4501 = vmatmul.mubr.f32.gmra.mrb[0].mxu0 %v4171
    %v4502 = vpop.f32.mrb[0].mxu0
    %v4503 = vadd.f32 0.0, %v4502
    %v4504 = vpop.f32.mrb[0].mxu0
    %4505 = vmatprep.mubr.f32.mxu0 0.0
    %4506 = vmatmul.mubr.f32.gmra.mrb[0].mxu0 %v4174
    %v4507 = vpop.f32.mrb[0].mxu0
    %v4508 = vadd.f32 0.0, %v4507
    %v4509 = vpop.f32.mrb[0].mxu0
    %4510 = vmatprep.mubr.f32.mxu0 0.0
    %4511 = vmatmul.mubr.f32.gmra.mrb[0].mxu0 %v4177
    %v4512 = vpop.f32.mrb[0].mxu0
    %v4513 = vadd.f32 0.0, %v4512
    %v4514 = vpop.f32.mrb[0].mxu0
    %4515 = vmatprep.mubr.f32.mxu0 0.0
    %4516 = vmatmul.mubr.f32.gmra.mrb[0].mxu0 %v4180
    %v4517 = vpop.f32.mrb[0].mxu0
    %v4518 = vadd.f32 0.0, %v4517
    %v4519 = vpop.f32.mrb[0].mxu0
    %4520 = vmatprep.mubr.f32.mxu0 0.0
    %4521 = vmatmul.mubr.f32.gmra.mrb[0].mxu0 %v4183
    %v4522 = vpop.f32.mrb[0].mxu0
    %v4523 = vadd.f32 0.0, %v4522
    %v4524 = vpop.f32.mrb[0].mxu0
    %4525 = vmatprep.mubr.f32.mxu0 0.0
    %4526 = vmatmul.mubr.f32.gmra.mrb[0].mxu0 %v4186
    %v4527 = vpop.f32.mrb[0].mxu0
    %v4528 = vadd.f32 0.0, %v4527
    %v4529 = vpop.f32.mrb[0].mxu0
    %4530 = vmatprep.mubr.f32.mxu0 0.0
    %4531 = vmatmul.mubr.f32.gmra.mrb[0].mxu0 %v4189
    %v4532 = vpop.f32.mrb[0].mxu0
    %v4533 = vadd.f32 0.0, %v4532
    %v4534 = vpop.f32.mrb[0].mxu0
    %4535 = vmatprep.mubr.f32.mxu0 0.0
    %4536 = vmatmul.mubr.f32.gmra.mrb[0].mxu0 %v4192
    %v4537 = vpop.f32.mrb[0].mxu0
    %v4538 = vadd.f32 0.0, %v4537
    %v4539 = vpop.f32.mrb[0].mxu0
    %4540 = vmatprep.mubr.f32.mxu0 0.0
    %4541 = vmatmul.mubr.f32.gmra.mrb[0].mxu0 %v4195
    %v4542 = vpop.f32.mrb[0].mxu0
    %v4543 = vadd.f32 0.0, %v4542
    %v4544 = vpop.f32.mrb[0].mxu0
    %4545 = vmatprep.mubr.f32.mxu0 0.0
    %4546 = vmatmul.mubr.f32.gmra.mrb[0].mxu0 %v4198
    %v4547 = vpop.f32.mrb[0].mxu0
    %v4548 = vadd.f32 0.0, %v4547
    %v4549 = vpop.f32.mrb[0].mxu0
    %4550 = vmatprep.mubr.f32.mxu0 0.0
    %4551 = vmatmul.mubr.f32.gmra.mrb[0].mxu0 %v4201
    %v4552 = vpop.f32.mrb[0].mxu0
    %v4553 = vadd.f32 0.0, %v4552
    %v4554 = vpop.f32.mrb[0].mxu0
    %4555 = vmatprep.mubr.f32.mxu0 0.0
    %4556 = vmatmul.mubr.f32.gmra.mrb[0].mxu0 %v4204
    %v4557 = vpop.f32.mrb[0].mxu0
    %v4558 = vadd.f32 0.0, %v4557
    %v4559 = vpop.f32.mrb[0].mxu0
    %4560 = vmatprep.mubr.f32.mxu0 0.0
    %4561 = vmatmul.mubr.f32.gmra.mrb[0].mxu0 %v4207
    %v4562 = vpop.f32.mrb[0].mxu0
    %v4563 = vadd.f32 0.0, %v4562
    %v4564 = vpop.f32.mrb[0].mxu0
    %4565 = vmatprep.mubr.f32.mxu0 0.0
    %4566 = vmatmul.mubr.f32.gmra.mrb[0].mxu0 %v4210
    %v4567 = vpop.f32.mrb[0].mxu0
    %v4568 = vadd.f32 0.0, %v4567
    %v4569 = vpop.f32.mrb[0].mxu0
    %4570 = vmatprep.mubr.f32.mxu0 0.0
    %4571 = vmatmul.mubr.f32.gmra.mrb[0].mxu0 %v4213
    %v4572 = vpop.f32.mrb[0].mxu0
    %v4573 = vadd.f32 0.0, %v4572
    %v4574 = vpop.f32.mrb[0].mxu0
    %4575 = vmatprep.mubr.f32.mxu0 0.0
    %4576 = vmatmul.mubr.f32.gmra.mrb[0].mxu0 %v4216
    %v4577 = vpop.f32.mrb[0].mxu0
    %v4578 = vadd.f32 0.0, %v4577
    %v4579 = vpop.f32.mrb[0].mxu0
    %4580 = vmatprep.mubr.f32.mxu0 0.0
    %4581 = vmatmul.mubr.f32.gmra.mrb[0].mxu0 %v4219
    %v4582 = vpop.f32.mrb[0].mxu0
    %v4583 = vadd.f32 0.0, %v4582
    %v4584 = vpop.f32.mrb[0].mxu0
    %4585 = vmatprep.mubr.f32.mxu0 0.0
    %4586 = vmatmul.mubr.f32.gmra.mrb[0].mxu0 %v4222
    %v4587 = vpop.f32.mrb[0].mxu0
    %v4588 = vadd.f32 0.0, %v4587
    %v4589 = vpop.f32.mrb[0].mxu0
    %4590 = vmatprep.mubr.f32.mxu0 0.0
    %4591 = vmatmul.mubr.f32.gmra.mrb[0].mxu0 %v4225
    %v4592 = vpop.f32.mrb[0].mxu0
    %v4593 = vadd.f32 0.0, %v4592
    %v4594 = vpop.f32.mrb[0].mxu0
    %4595 = vmatprep.mubr.f32.mxu0 0.0
    %4596 = vmatmul.mubr.f32.gmra.mrb[0].mxu0 %v4228
    %v4597 = vpop.f32.mrb[0].mxu0
    %v4598 = vadd.f32 0.0, %v4597
    %v4599 = vpop.f32.mrb[0].mxu0
    %4600 = vmatprep.mubr.f32.mxu0 0.0
    %4601 = vmatmul.mubr.f32.gmra.mrb[0].mxu0 %v4231
    %v4602 = vpop.f32.mrb[0].mxu0
    %v4603 = vadd.f32 0.0, %v4602
    %v4604 = vpop.f32.mrb[0].mxu0
    %4605 = vmatprep.mubr.f32.mxu0 0.0
    %4606 = vmatmul.mubr.f32.gmra.mrb[0].mxu0 %v4234
    %v4607 = vpop.f32.mrb[0].mxu0
    %v4608 = vadd.f32 0.0, %v4607
    %v4609 = vpop.f32.mrb[0].mxu0
    %4610 = vmatprep.mubr.f32.mxu0 0.0
    %4611 = vmatmul.mubr.f32.gmra.mrb[0].mxu0 %v4237
    %v4612 = vpop.f32.mrb[0].mxu0
    %v4613 = vadd.f32 0.0, %v4612
    %v4614 = vpop.f32.mrb[0].mxu0
    %4615 = vmatprep.mubr.f32.mxu0 0.0
    %4616 = vmatmul.mubr.f32.gmra.mrb[0].mxu0 %v4240
    %v4617 = vpop.f32.mrb[0].mxu0
    %v4618 = vadd.f32 0.0, %v4617
    %v4619 = vpop.f32.mrb[0].mxu0
    %4620 = vmatprep.mubr.f32.mxu0 0.0
    %4621 = vmatmul.mubr.f32.gmra.mrb[0].mxu0 %v4243
    %v4622 = vpop.f32.mrb[0].mxu0
    %v4623 = vadd.f32 0.0, %v4622
    %v4624 = vpop.f32.mrb[0].mxu0
    %4625 = vmatprep.mubr.f32.mxu0 0.0
    %4626 = vmatmul.mubr.f32.gmra.mrb[0].mxu0 %v4246
    %v4627 = vpop.f32.mrb[0].mxu0
    %v4628 = vadd.f32 0.0, %v4627
    %v4629 = vpop.f32.mrb[0].mxu0
    %4630 = vmatprep.mubr.f32.mxu0 0.0
    %4631 = vmatmul.mubr.f32.gmra.mrb[0].mxu0 %v4249
    %v4632 = vpop.f32.mrb[0].mxu0
    %v4633 = vadd.f32 0.0, %v4632
    %v4634 = vpop.f32.mrb[0].mxu0
    %4635 = vdwg.mxu0
    %v4636 = vlaneseq
    %v4637 = vand.u32 %v4636, 127
    %vm4638 = vcmp.lt.s32.totalorder %v4637, 0
    %v4639 = vsub.s32 0, %v4637
    %v4640 = vsel %vm4638, %v4639, %v4637
    %v4641 = vshrl.u32 %v4640, 4
    %v4642 = vand.u32 %v4640, 15
    %v4643 = vsub.s32 0, %v4642
    %v4644 = vsel %vm4638, %v4643, %v4642
    %vm4645 = vcmp.ne.s32.totalorder %v4644, 0
    %vm4646 = vcmp.lt.s32.totalorder %v4644, 0
    %vm4647 = vmand %vm4646, %vm4645
    %v4648 = vadd.s32 %v4644, 16
    %v4649 = vsel %vm4647, %v4648, %v4644
    %v4650 = vcvt.s32.f32 %v4649
    %v4651 = vsub.f32 %v4318, %v4650
    %v4652 = vsub.f32 %v4323, %v4650
    %v4653 = vsub.f32 %v4328, %v4650
    %v4654 = vsub.f32 %v4333, %v4650
    %v4655 = vsub.f32 %v4338, %v4650
    %v4656 = vsub.f32 %v4343, %v4650
    %v4657 = vsub.f32 %v4348, %v4650
    %v4658 = vsub.f32 %v4353, %v4650
    %v4659 = vsub.f32 %v4358, %v4650
    %v4660 = vsub.f32 %v4363, %v4650
    %v4661 = vsub.f32 %v4368, %v4650
    %v4662 = vsub.f32 %v4373, %v4650
    %v4663 = vsub.f32 %v4378, %v4650
    %v4664 = vsub.f32 %v4383, %v4650
    %v4665 = vsub.f32 %v4388, %v4650
    %v4666 = vsub.f32 %v4393, %v4650
    %v4667 = vsub.f32 %v4398, %v4650
    %v4668 = vsub.f32 %v4403, %v4650
    %v4669 = vsub.f32 %v4408, %v4650
    %v4670 = vsub.f32 %v4413, %v4650
    %v4671 = vsub.f32 %v4418, %v4650
    %v4672 = vsub.f32 %v4423, %v4650
    %v4673 = vsub.f32 %v4428, %v4650
    %v4674 = vsub.f32 %v4433, %v4650
    %v4675 = vsub.f32 %v4438, %v4650
    %v4676 = vsub.f32 %v4443, %v4650
    %v4677 = vsub.f32 %v4448, %v4650
    %v4678 = vsub.f32 %v4453, %v4650
    %v4679 = vsub.f32 %v4458, %v4650
    %v4680 = vsub.f32 %v4463, %v4650
    %v4681 = vsub.f32 %v4468, %v4650
    %v4682 = vsub.f32 %v4473, %v4650
    %v4683 = vsub.f32 %v4478, %v4650
    %v4684 = vsub.f32 %v4483, %v4650
    %v4685 = vsub.f32 %v4488, %v4650
    %v4686 = vsub.f32 %v4493, %v4650
    %v4687 = vsub.f32 %v4498, %v4650
    %v4688 = vsub.f32 %v4503, %v4650
    %v4689 = vsub.f32 %v4508, %v4650
    %v4690 = vsub.f32 %v4513, %v4650
    %v4691 = vsub.f32 %v4518, %v4650
    %v4692 = vsub.f32 %v4523, %v4650
    %v4693 = vsub.f32 %v4528, %v4650
    %v4694 = vsub.f32 %v4533, %v4650
    %v4695 = vsub.f32 %v4538, %v4650
    %v4696 = vsub.f32 %v4543, %v4650
    %v4697 = vsub.f32 %v4548, %v4650
    %v4698 = vsub.f32 %v4553, %v4650
    %v4699 = vsub.f32 %v4558, %v4650
    %v4700 = vsub.f32 %v4563, %v4650
    %v4701 = vsub.f32 %v4568, %v4650
    %v4702 = vsub.f32 %v4573, %v4650
    %v4703 = vsub.f32 %v4578, %v4650
    %v4704 = vsub.f32 %v4583, %v4650
    %v4705 = vsub.f32 %v4588, %v4650
    %v4706 = vsub.f32 %v4593, %v4650
    %v4707 = vsub.f32 %v4598, %v4650
    %v4708 = vsub.f32 %v4603, %v4650
    %v4709 = vsub.f32 %v4608, %v4650
    %v4710 = vsub.f32 %v4613, %v4650
    %v4711 = vsub.f32 %v4618, %v4650
    %v4712 = vsub.f32 %v4623, %v4650
    %v4713 = vsub.f32 %v4628, %v4650
    %v4714 = vsub.f32 %v4633, %v4650
    %v4715 = vand.u32 2147483647, %v4651
    %v4716 = vand.u32 2147483647, %v4652
    %v4717 = vand.u32 2147483647, %v4653
    %v4718 = vand.u32 2147483647, %v4654
    %v4719 = vand.u32 2147483647, %v4655
    %v4720 = vand.u32 2147483647, %v4656
    %v4721 = vand.u32 2147483647, %v4657
    %v4722 = vand.u32 2147483647, %v4658
    %v4723 = vand.u32 2147483647, %v4659
    %v4724 = vand.u32 2147483647, %v4660
    %v4725 = vand.u32 2147483647, %v4661
    %v4726 = vand.u32 2147483647, %v4662
    %v4727 = vand.u32 2147483647, %v4663
    %v4728 = vand.u32 2147483647, %v4664
    %v4729 = vand.u32 2147483647, %v4665
    %v4730 = vand.u32 2147483647, %v4666
    %v4731 = vand.u32 2147483647, %v4667
    %v4732 = vand.u32 2147483647, %v4668
    %v4733 = vand.u32 2147483647, %v4669
    %v4734 = vand.u32 2147483647, %v4670
    %v4735 = vand.u32 2147483647, %v4671
    %v4736 = vand.u32 2147483647, %v4672
    %v4737 = vand.u32 2147483647, %v4673
    %v4738 = vand.u32 2147483647, %v4674
    %v4739 = vand.u32 2147483647, %v4675
    %v4740 = vand.u32 2147483647, %v4676
    %v4741 = vand.u32 2147483647, %v4677
    %v4742 = vand.u32 2147483647, %v4678
    %v4743 = vand.u32 2147483647, %v4679
    %v4744 = vand.u32 2147483647, %v4680
    %v4745 = vand.u32 2147483647, %v4681
    %v4746 = vand.u32 2147483647, %v4682
    %v4747 = vand.u32 2147483647, %v4683
    %v4748 = vand.u32 2147483647, %v4684
    %v4749 = vand.u32 2147483647, %v4685
    %v4750 = vand.u32 2147483647, %v4686
    %v4751 = vand.u32 2147483647, %v4687
    %v4752 = vand.u32 2147483647, %v4688
    %v4753 = vand.u32 2147483647, %v4689
    %v4754 = vand.u32 2147483647, %v4690
    %v4755 = vand.u32 2147483647, %v4691
    %v4756 = vand.u32 2147483647, %v4692
    %v4757 = vand.u32 2147483647, %v4693
    %v4758 = vand.u32 2147483647, %v4694
    %v4759 = vand.u32 2147483647, %v4695
    %v4760 = vand.u32 2147483647, %v4696
    %v4761 = vand.u32 2147483647, %v4697
    %v4762 = vand.u32 2147483647, %v4698
    %v4763 = vand.u32 2147483647, %v4699
    %v4764 = vand.u32 2147483647, %v4700
    %v4765 = vand.u32 2147483647, %v4701
    %v4766 = vand.u32 2147483647, %v4702
    %v4767 = vand.u32 2147483647, %v4703
    %v4768 = vand.u32 2147483647, %v4704
    %v4769 = vand.u32 2147483647, %v4705
    %v4770 = vand.u32 2147483647, %v4706
    %v4771 = vand.u32 2147483647, %v4707
    %v4772 = vand.u32 2147483647, %v4708
    %v4773 = vand.u32 2147483647, %v4709
    %v4774 = vand.u32 2147483647, %v4710
    %v4775 = vand.u32 2147483647, %v4711
    %v4776 = vand.u32 2147483647, %v4712
    %v4777 = vand.u32 2147483647, %v4713
    %v4778 = vand.u32 2147483647, %v4714
    %vm4779 = vcmp.lt.f32.partialorder %v4715, 0.5
    %vm4780 = vcmp.lt.f32.partialorder %v4716, 0.5
    %vm4781 = vcmp.lt.f32.partialorder %v4717, 0.5
    %vm4782 = vcmp.lt.f32.partialorder %v4718, 0.5
    %vm4783 = vcmp.lt.f32.partialorder %v4719, 0.5
    %vm4784 = vcmp.lt.f32.partialorder %v4720, 0.5
    %vm4785 = vcmp.lt.f32.partialorder %v4721, 0.5
    %vm4786 = vcmp.lt.f32.partialorder %v4722, 0.5
    %vm4787 = vcmp.lt.f32.partialorder %v4723, 0.5
    %vm4788 = vcmp.lt.f32.partialorder %v4724, 0.5
    %vm4789 = vcmp.lt.f32.partialorder %v4725, 0.5
    %vm4790 = vcmp.lt.f32.partialorder %v4726, 0.5
    %vm4791 = vcmp.lt.f32.partialorder %v4727, 0.5
    %vm4792 = vcmp.lt.f32.partialorder %v4728, 0.5
    %vm4793 = vcmp.lt.f32.partialorder %v4729, 0.5
    %vm4794 = vcmp.lt.f32.partialorder %v4730, 0.5
    %vm4795 = vcmp.lt.f32.partialorder %v4731, 0.5
    %vm4796 = vcmp.lt.f32.partialorder %v4732, 0.5
    %vm4797 = vcmp.lt.f32.partialorder %v4733, 0.5
    %vm4798 = vcmp.lt.f32.partialorder %v4734, 0.5
    %vm4799 = vcmp.lt.f32.partialorder %v4735, 0.5
    %vm4800 = vcmp.lt.f32.partialorder %v4736, 0.5
    %vm4801 = vcmp.lt.f32.partialorder %v4737, 0.5
    %vm4802 = vcmp.lt.f32.partialorder %v4738, 0.5
    %vm4803 = vcmp.lt.f32.partialorder %v4739, 0.5
    %vm4804 = vcmp.lt.f32.partialorder %v4740, 0.5
    %vm4805 = vcmp.lt.f32.partialorder %v4741, 0.5
    %vm4806 = vcmp.lt.f32.partialorder %v4742, 0.5
    %vm4807 = vcmp.lt.f32.partialorder %v4743, 0.5
    %vm4808 = vcmp.lt.f32.partialorder %v4744, 0.5
    %vm4809 = vcmp.lt.f32.partialorder %v4745, 0.5
    %vm4810 = vcmp.lt.f32.partialorder %v4746, 0.5
    %vm4811 = vcmp.lt.f32.partialorder %v4747, 0.5
    %vm4812 = vcmp.lt.f32.partialorder %v4748, 0.5
    %vm4813 = vcmp.lt.f32.partialorder %v4749, 0.5
    %vm4814 = vcmp.lt.f32.partialorder %v4750, 0.5
    %vm4815 = vcmp.lt.f32.partialorder %v4751, 0.5
    %vm4816 = vcmp.lt.f32.partialorder %v4752, 0.5
    %vm4817 = vcmp.lt.f32.partialorder %v4753, 0.5
    %vm4818 = vcmp.lt.f32.partialorder %v4754, 0.5
    %vm4819 = vcmp.lt.f32.partialorder %v4755, 0.5
    %vm4820 = vcmp.lt.f32.partialorder %v4756, 0.5
    %vm4821 = vcmp.lt.f32.partialorder %v4757, 0.5
    %vm4822 = vcmp.lt.f32.partialorder %v4758, 0.5
    %vm4823 = vcmp.lt.f32.partialorder %v4759, 0.5
    %vm4824 = vcmp.lt.f32.partialorder %v4760, 0.5
    %vm4825 = vcmp.lt.f32.partialorder %v4761, 0.5
    %vm4826 = vcmp.lt.f32.partialorder %v4762, 0.5
    %vm4827 = vcmp.lt.f32.partialorder %v4763, 0.5
    %vm4828 = vcmp.lt.f32.partialorder %v4764, 0.5
    %vm4829 = vcmp.lt.f32.partialorder %v4765, 0.5
    %vm4830 = vcmp.lt.f32.partialorder %v4766, 0.5
    %vm4831 = vcmp.lt.f32.partialorder %v4767, 0.5
    %vm4832 = vcmp.lt.f32.partialorder %v4768, 0.5
    %vm4833 = vcmp.lt.f32.partialorder %v4769, 0.5
    %vm4834 = vcmp.lt.f32.partialorder %v4770, 0.5
    %vm4835 = vcmp.lt.f32.partialorder %v4771, 0.5
    %vm4836 = vcmp.lt.f32.partialorder %v4772, 0.5
    %vm4837 = vcmp.lt.f32.partialorder %v4773, 0.5
    %vm4838 = vcmp.lt.f32.partialorder %v4774, 0.5
    %vm4839 = vcmp.lt.f32.partialorder %v4775, 0.5
    %vm4840 = vcmp.lt.f32.partialorder %v4776, 0.5
    %vm4841 = vcmp.lt.f32.partialorder %v4777, 0.5
    %vm4842 = vcmp.lt.f32.partialorder %v4778, 0.5
    %v4843 = vsel %vm4779, 1, 0
    %v4844 = vsel %vm4780, 1, 0
    %v4845 = vsel %vm4781, 1, 0
    %v4846 = vsel %vm4782, 1, 0
    %v4847 = vsel %vm4783, 1, 0
    %v4848 = vsel %vm4784, 1, 0
    %v4849 = vsel %vm4785, 1, 0
    %v4850 = vsel %vm4786, 1, 0
    %v4851 = vsel %vm4787, 1, 0
    %v4852 = vsel %vm4788, 1, 0
    %v4853 = vsel %vm4789, 1, 0
    %v4854 = vsel %vm4790, 1, 0
    %v4855 = vsel %vm4791, 1, 0
    %v4856 = vsel %vm4792, 1, 0
    %v4857 = vsel %vm4793, 1, 0
    %v4858 = vsel %vm4794, 1, 0
    %v4859 = vsel %vm4795, 1, 0
    %v4860 = vsel %vm4796, 1, 0
    %v4861 = vsel %vm4797, 1, 0
    %v4862 = vsel %vm4798, 1, 0
    %v4863 = vsel %vm4799, 1, 0
    %v4864 = vsel %vm4800, 1, 0
    %v4865 = vsel %vm4801, 1, 0
    %v4866 = vsel %vm4802, 1, 0
    %v4867 = vsel %vm4803, 1, 0
    %v4868 = vsel %vm4804, 1, 0
    %v4869 = vsel %vm4805, 1, 0
    %v4870 = vsel %vm4806, 1, 0
    %v4871 = vsel %vm4807, 1, 0
    %v4872 = vsel %vm4808, 1, 0
    %v4873 = vsel %vm4809, 1, 0
    %v4874 = vsel %vm4810, 1, 0
    %v4875 = vsel %vm4811, 1, 0
    %v4876 = vsel %vm4812, 1, 0
    %v4877 = vsel %vm4813, 1, 0
    %v4878 = vsel %vm4814, 1, 0
    %v4879 = vsel %vm4815, 1, 0
    %v4880 = vsel %vm4816, 1, 0
    %v4881 = vsel %vm4817, 1, 0
    %v4882 = vsel %vm4818, 1, 0
    %v4883 = vsel %vm4819, 1, 0
    %v4884 = vsel %vm4820, 1, 0
    %v4885 = vsel %vm4821, 1, 0
    %v4886 = vsel %vm4822, 1, 0
    %v4887 = vsel %vm4823, 1, 0
    %v4888 = vsel %vm4824, 1, 0
    %v4889 = vsel %vm4825, 1, 0
    %v4890 = vsel %vm4826, 1, 0
    %v4891 = vsel %vm4827, 1, 0
    %v4892 = vsel %vm4828, 1, 0
    %v4893 = vsel %vm4829, 1, 0
    %v4894 = vsel %vm4830, 1, 0
    %v4895 = vsel %vm4831, 1, 0
    %v4896 = vsel %vm4832, 1, 0
    %v4897 = vsel %vm4833, 1, 0
    %v4898 = vsel %vm4834, 1, 0
    %v4899 = vsel %vm4835, 1, 0
    %v4900 = vsel %vm4836, 1, 0
    %v4901 = vsel %vm4837, 1, 0
    %v4902 = vsel %vm4838, 1, 0
    %v4903 = vsel %vm4839, 1, 0
    %v4904 = vsel %vm4840, 1, 0
    %v4905 = vsel %vm4841, 1, 0
    %v4906 = vsel %vm4842, 1, 0
    %v4907 = vcvt.s32.f32 %v4843
    %v4908 = vcvt.s32.f32 %v4844
    %v4909 = vcvt.s32.f32 %v4845
    %v4910 = vcvt.s32.f32 %v4846
    %v4911 = vcvt.s32.f32 %v4847
    %v4912 = vcvt.s32.f32 %v4848
    %v4913 = vcvt.s32.f32 %v4849
    %v4914 = vcvt.s32.f32 %v4850
    %v4915 = vcvt.s32.f32 %v4851
    %v4916 = vcvt.s32.f32 %v4852
    %v4917 = vcvt.s32.f32 %v4853
    %v4918 = vcvt.s32.f32 %v4854
    %v4919 = vcvt.s32.f32 %v4855
    %v4920 = vcvt.s32.f32 %v4856
    %v4921 = vcvt.s32.f32 %v4857
    %v4922 = vcvt.s32.f32 %v4858
    %v4923 = vcvt.s32.f32 %v4859
    %v4924 = vcvt.s32.f32 %v4860
    %v4925 = vcvt.s32.f32 %v4861
    %v4926 = vcvt.s32.f32 %v4862
    %v4927 = vcvt.s32.f32 %v4863
    %v4928 = vcvt.s32.f32 %v4864
    %v4929 = vcvt.s32.f32 %v4865
    %v4930 = vcvt.s32.f32 %v4866
    %v4931 = vcvt.s32.f32 %v4867
    %v4932 = vcvt.s32.f32 %v4868
    %v4933 = vcvt.s32.f32 %v4869
    %v4934 = vcvt.s32.f32 %v4870
    %v4935 = vcvt.s32.f32 %v4871
    %v4936 = vcvt.s32.f32 %v4872
    %v4937 = vcvt.s32.f32 %v4873
    %v4938 = vcvt.s32.f32 %v4874
    %v4939 = vcvt.s32.f32 %v4875
    %v4940 = vcvt.s32.f32 %v4876
    %v4941 = vcvt.s32.f32 %v4877
    %v4942 = vcvt.s32.f32 %v4878
    %v4943 = vcvt.s32.f32 %v4879
    %v4944 = vcvt.s32.f32 %v4880
    %v4945 = vcvt.s32.f32 %v4881
    %v4946 = vcvt.s32.f32 %v4882
    %v4947 = vcvt.s32.f32 %v4883
    %v4948 = vcvt.s32.f32 %v4884
    %v4949 = vcvt.s32.f32 %v4885
    %v4950 = vcvt.s32.f32 %v4886
    %v4951 = vcvt.s32.f32 %v4887
    %v4952 = vcvt.s32.f32 %v4888
    %v4953 = vcvt.s32.f32 %v4889
    %v4954 = vcvt.s32.f32 %v4890
    %v4955 = vcvt.s32.f32 %v4891
    %v4956 = vcvt.s32.f32 %v4892
    %v4957 = vcvt.s32.f32 %v4893
    %v4958 = vcvt.s32.f32 %v4894
    %v4959 = vcvt.s32.f32 %v4895
    %v4960 = vcvt.s32.f32 %v4896
    %v4961 = vcvt.s32.f32 %v4897
    %v4962 = vcvt.s32.f32 %v4898
    %v4963 = vcvt.s32.f32 %v4899
    %v4964 = vcvt.s32.f32 %v4900
    %v4965 = vcvt.s32.f32 %v4901
    %v4966 = vcvt.s32.f32 %v4902
    %v4967 = vcvt.s32.f32 %v4903
    %v4968 = vcvt.s32.f32 %v4904
    %v4969 = vcvt.s32.f32 %v4905
    %v4970 = vcvt.s32.f32 %v4906
    %v4971 = vpack.c.bf16 %v4908, %v4907
    %v4972 = vpack.c.bf16 %v4910, %v4909
    %v4973 = vpack.c.bf16 %v4912, %v4911
    %v4974 = vpack.c.bf16 %v4914, %v4913
    %v4975 = vpack.c.bf16 %v4916, %v4915
    %v4976 = vpack.c.bf16 %v4918, %v4917
    %v4977 = vpack.c.bf16 %v4920, %v4919
    %v4978 = vpack.c.bf16 %v4922, %v4921
    %v4979 = vpack.c.bf16 %v4924, %v4923
    %v4980 = vpack.c.bf16 %v4926, %v4925
    %v4981 = vpack.c.bf16 %v4928, %v4927
    %v4982 = vpack.c.bf16 %v4930, %v4929
    %v4983 = vpack.c.bf16 %v4932, %v4931
    %v4984 = vpack.c.bf16 %v4934, %v4933
    %v4985 = vpack.c.bf16 %v4936, %v4935
    %v4986 = vpack.c.bf16 %v4938, %v4937
    %v4987 = vpack.c.bf16 %v4940, %v4939
    %v4988 = vpack.c.bf16 %v4942, %v4941
    %v4989 = vpack.c.bf16 %v4944, %v4943
    %v4990 = vpack.c.bf16 %v4946, %v4945
    %v4991 = vpack.c.bf16 %v4948, %v4947
    %v4992 = vpack.c.bf16 %v4950, %v4949
    %v4993 = vpack.c.bf16 %v4952, %v4951
    %v4994 = vpack.c.bf16 %v4954, %v4953
    %v4995 = vpack.c.bf16 %v4956, %v4955
    %v4996 = vpack.c.bf16 %v4958, %v4957
    %v4997 = vpack.c.bf16 %v4960, %v4959
    %v4998 = vpack.c.bf16 %v4962, %v4961
    %v4999 = vpack.c.bf16 %v4964, %v4963
    %v5000 = vpack.c.bf16 %v4966, %v4965
    %v5001 = vpack.c.bf16 %v4968, %v4967
    %v5002 = vpack.c.bf16 %v4970, %v4969
    %v5003 = vld [vmem:[%s3] sm:$0xff]
    %v5004 = vld [vmem:[%s3 + $0x8] sm:$0xff]
    %v5005 = vld [vmem:[%s3 + $0x10] sm:$0xff]
    %v5006 = vld [vmem:[%s3 + $0x18] sm:$0xff]
    %v5007 = vld [vmem:[%s3 + $0x20] sm:$0xff]
    %v5008 = vld [vmem:[%s3 + $0x28] sm:$0xff]
    %v5009 = vld [vmem:[%s3 + $0x30] sm:$0xff]
    %v5010 = vld [vmem:[%s3 + $0x38] sm:$0xff]
    %v5011 = vld [vmem:[%s3 + $0x40] sm:$0xff]
    %v5012 = vld [vmem:[%s3 + $0x48] sm:$0xff]
    %v5013 = vld [vmem:[%s3 + $0x50] sm:$0xff]
    %v5014 = vld [vmem:[%s3 + $0x58] sm:$0xff]
    %v5015 = vld [vmem:[%s3 + $0x60] sm:$0xff]
    %v5016 = vld [vmem:[%s3 + $0x68] sm:$0xff]
    %v5017 = vld [vmem:[%s3 + $0x70] sm:$0xff]
    %v5018 = vld [vmem:[%s3 + $0x78] sm:$0xff]
    %v5019 = vld [vmem:[%s4] sm:$0x3]
    %v5021 = vlaneseq
    %v5022 = vshrl.u32 %v5021, 7
    %v5023 = vsub.s32 0, %v5022
    %v5024 = vrot.slane %v5019, %v5023
    %v5025 = vlaneseq
    %v5026 = vshrl.u32 %v5025, 7
    %v5027 = vsub.s32 1, %v5026
    %v5028 = vrot.slane %v5019, %v5027
    %v5047 = vunpack.c.l.b16 %v5003
    %v5048 = vunpack.c.h.b16 %v5003
    %v5049 = vunpack.c.l.b16 %v5004
    %v5050 = vunpack.c.h.b16 %v5004
    %v5051 = vunpack.c.l.b16 %v5005
    %v5052 = vunpack.c.h.b16 %v5005
    %v5053 = vunpack.c.l.b16 %v5006
    %v5054 = vunpack.c.h.b16 %v5006
    %v5055 = vunpack.c.l.b16 %v5007
    %v5056 = vunpack.c.h.b16 %v5007
    %v5057 = vunpack.c.l.b16 %v5008
    %v5058 = vunpack.c.h.b16 %v5008
    %v5059 = vunpack.c.l.b16 %v5009
    %v5060 = vunpack.c.h.b16 %v5009
    %v5061 = vunpack.c.l.b16 %v5010
    %v5062 = vunpack.c.h.b16 %v5010
    %v5063 = vunpack.c.l.b16 %v5011
    %v5064 = vunpack.c.h.b16 %v5011
    %v5065 = vunpack.c.l.b16 %v5012
    %v5066 = vunpack.c.h.b16 %v5012
    %v5067 = vunpack.c.l.b16 %v5013
    %v5068 = vunpack.c.h.b16 %v5013
    %v5069 = vunpack.c.l.b16 %v5014
    %v5070 = vunpack.c.h.b16 %v5014
    %v5071 = vunpack.c.l.b16 %v5015
    %v5072 = vunpack.c.h.b16 %v5015
    %v5073 = vunpack.c.l.b16 %v5016
    %v5074 = vunpack.c.h.b16 %v5016
    %v5075 = vunpack.c.l.b16 %v5017
    %v5076 = vunpack.c.h.b16 %v5017
    %v5077 = vunpack.c.l.b16 %v5018
    %v5078 = vunpack.c.h.b16 %v5018
    %v5079 = vpack.c.b16 %v5049, %v5047
    %v5080 = vpack.c.b16 %v5050, %v5048
    %v5081 = vpack.c.b16 %v5053, %v5051
    %v5082 = vpack.c.b16 %v5054, %v5052
    %v5083 = vpack.c.b16 %v5057, %v5055
    %v5084 = vpack.c.b16 %v5058, %v5056
    %v5085 = vpack.c.b16 %v5061, %v5059
    %v5086 = vpack.c.b16 %v5062, %v5060
    %v5087 = vpack.c.b16 %v5065, %v5063
    %v5088 = vpack.c.b16 %v5066, %v5064
    %v5089 = vpack.c.b16 %v5069, %v5067
    %v5090 = vpack.c.b16 %v5070, %v5068
    %v5091 = vpack.c.b16 %v5073, %v5071
    %v5092 = vpack.c.b16 %v5074, %v5072
    %v5093 = vpack.c.b16 %v5077, %v5075
    %v5094 = vpack.c.b16 %v5078, %v5076
    %5111 = vmatprep.subr.bf16.mxu0 %v5080
    %5112 = vmatpush1.bf16.msra.mxu0 %v5079
    %5113 = vmatprep.subr.bf16.mxu0 %v5082
    %5114 = vmatpush1.bf16.msra.mxu0 %v5081
    %5115 = vmatprep.subr.bf16.mxu0 %v5084
    %5116 = vmatpush1.bf16.msra.mxu0 %v5083
    %5117 = vmatprep.subr.bf16.mxu0 %v5086
    %5118 = vmatpush1.bf16.msra.mxu0 %v5085
    %5119 = vmatprep.subr.bf16.mxu0 %v5088
    %5120 = vmatpush1.bf16.msra.mxu0 %v5087
    %5121 = vmatprep.subr.bf16.mxu0 %v5090
    %5122 = vmatpush1.bf16.msra.mxu0 %v5089
    %5123 = vmatprep.subr.bf16.mxu0 %v5092
    %5124 = vmatpush1.bf16.msra.mxu0 %v5091
    %5125 = vmatprep.subr.bf16.mxu0 %v5094
    %5126 = vmatpush1.bf16.msra.mxu0 %v5093
    %5127 = vmatprep.subr.bf16.mxu0 0
    %5128 = vmatpush1.bf16.msra.mxu0 0
    %5129 = vmatprep.subr.bf16.mxu0 0
    %5130 = vmatpush1.bf16.msra.mxu0 0
    %5131 = vmatprep.subr.bf16.mxu0 0
    %5132 = vmatpush1.bf16.msra.mxu0 0
    %5133 = vmatprep.subr.bf16.mxu0 0
    %5134 = vmatpush1.bf16.msra.mxu0 0
    %5135 = vmatprep.subr.bf16.mxu0 0
    %5136 = vmatpush1.bf16.msra.mxu0 0
    %5137 = vmatprep.subr.bf16.mxu0 0
    %5138 = vmatpush1.bf16.msra.mxu0 0
    %5139 = vmatprep.subr.bf16.mxu0 0
    %5140 = vmatpush1.bf16.msra.mxu0 0
    %5141 = vmatprep.subr.bf16.mxu0 0
    %5142 = vmatpush1.bf16.msra.mxu0 0
    %5143 = vmatprep.mubr.bf16.mxu0 0
    %5144 = vmatmul.mubr.bf16.gmra.mrb[0].mxu0 %v4971
    %v5145 = vpop.f32.mrb[0].mxu0
    %v5146 = vadd.f32 %v5024, %v5145
    %v5147 = vpop.f32.mrb[0].mxu0
    %v5148 = vadd.f32 %v5028, %v5147
    %v5149 = vpop.f32.mrb[0].mxu0
    %v5150 = vadd.f32 %v5024, %v5149
    %v5151 = vpop.f32.mrb[0].mxu0
    %v5152 = vadd.f32 %v5028, %v5151
    %5153 = vmatprep.mubr.bf16.mxu0 0
    %5154 = vmatmul.mubr.bf16.gmra.mrb[0].mxu0 %v4972
    %v5155 = vpop.f32.mrb[0].mxu0
    %v5156 = vadd.f32 %v5024, %v5155
    %v5157 = vpop.f32.mrb[0].mxu0
    %v5158 = vadd.f32 %v5028, %v5157
    %v5159 = vpop.f32.mrb[0].mxu0
    %v5160 = vadd.f32 %v5024, %v5159
    %v5161 = vpop.f32.mrb[0].mxu0
    %v5162 = vadd.f32 %v5028, %v5161
    %5163 = vmatprep.mubr.bf16.mxu0 0
    %5164 = vmatmul.mubr.bf16.gmra.mrb[0].mxu0 %v4973
    %v5165 = vpop.f32.mrb[0].mxu0
    %v5166 = vadd.f32 %v5024, %v5165
    %v5167 = vpop.f32.mrb[0].mxu0
    %v5168 = vadd.f32 %v5028, %v5167
    %v5169 = vpop.f32.mrb[0].mxu0
    %v5170 = vadd.f32 %v5024, %v5169
    %v5171 = vpop.f32.mrb[0].mxu0
    %v5172 = vadd.f32 %v5028, %v5171
    %5173 = vmatprep.mubr.bf16.mxu0 0
    %5174 = vmatmul.mubr.bf16.gmra.mrb[0].mxu0 %v4974
    %v5175 = vpop.f32.mrb[0].mxu0
    %v5176 = vadd.f32 %v5024, %v5175
    %v5177 = vpop.f32.mrb[0].mxu0
    %v5178 = vadd.f32 %v5028, %v5177
    %v5179 = vpop.f32.mrb[0].mxu0
    %v5180 = vadd.f32 %v5024, %v5179
    %v5181 = vpop.f32.mrb[0].mxu0
    %v5182 = vadd.f32 %v5028, %v5181
    %5183 = vmatprep.mubr.bf16.mxu0 0
    %5184 = vmatmul.mubr.bf16.gmra.mrb[0].mxu0 %v4975
    %v5185 = vpop.f32.mrb[0].mxu0
    %v5186 = vadd.f32 %v5024, %v5185
    %v5187 = vpop.f32.mrb[0].mxu0
    %v5188 = vadd.f32 %v5028, %v5187
    %v5189 = vpop.f32.mrb[0].mxu0
    %v5190 = vadd.f32 %v5024, %v5189
    %v5191 = vpop.f32.mrb[0].mxu0
    %v5192 = vadd.f32 %v5028, %v5191
    %5193 = vmatprep.mubr.bf16.mxu0 0
    %5194 = vmatmul.mubr.bf16.gmra.mrb[0].mxu0 %v4976
    %v5195 = vpop.f32.mrb[0].mxu0
    %v5196 = vadd.f32 %v5024, %v5195
    %v5197 = vpop.f32.mrb[0].mxu0
    %v5198 = vadd.f32 %v5028, %v5197
    %v5199 = vpop.f32.mrb[0].mxu0
    %v5200 = vadd.f32 %v5024, %v5199
    %v5201 = vpop.f32.mrb[0].mxu0
    %v5202 = vadd.f32 %v5028, %v5201
    %5203 = vmatprep.mubr.bf16.mxu0 0
    %5204 = vmatmul.mubr.bf16.gmra.mrb[0].mxu0 %v4977
    %v5205 = vpop.f32.mrb[0].mxu0
    %v5206 = vadd.f32 %v5024, %v5205
    %v5207 = vpop.f32.mrb[0].mxu0
    %v5208 = vadd.f32 %v5028, %v5207
    %v5209 = vpop.f32.mrb[0].mxu0
    %v5210 = vadd.f32 %v5024, %v5209
    %v5211 = vpop.f32.mrb[0].mxu0
    %v5212 = vadd.f32 %v5028, %v5211
    %5213 = vmatprep.mubr.bf16.mxu0 0
    %5214 = vmatmul.mubr.bf16.gmra.mrb[0].mxu0 %v4978
    %v5215 = vpop.f32.mrb[0].mxu0
    %v5216 = vadd.f32 %v5024, %v5215
    %v5217 = vpop.f32.mrb[0].mxu0
    %v5218 = vadd.f32 %v5028, %v5217
    %v5219 = vpop.f32.mrb[0].mxu0
    %v5220 = vadd.f32 %v5024, %v5219
    %v5221 = vpop.f32.mrb[0].mxu0
    %v5222 = vadd.f32 %v5028, %v5221
    %5223 = vmatprep.mubr.bf16.mxu0 0
    %5224 = vmatmul.mubr.bf16.gmra.mrb[0].mxu0 %v4979
    %v5225 = vpop.f32.mrb[0].mxu0
    %v5226 = vadd.f32 %v5024, %v5225
    %v5227 = vpop.f32.mrb[0].mxu0
    %v5228 = vadd.f32 %v5028, %v5227
    %v5229 = vpop.f32.mrb[0].mxu0
    %v5230 = vadd.f32 %v5024, %v5229
    %v5231 = vpop.f32.mrb[0].mxu0
    %v5232 = vadd.f32 %v5028, %v5231
    %5233 = vmatprep.mubr.bf16.mxu0 0
    %5234 = vmatmul.mubr.bf16.gmra.mrb[0].mxu0 %v4980
    %v5235 = vpop.f32.mrb[0].mxu0
    %v5236 = vadd.f32 %v5024, %v5235
    %v5237 = vpop.f32.mrb[0].mxu0
    %v5238 = vadd.f32 %v5028, %v5237
    %v5239 = vpop.f32.mrb[0].mxu0
    %v5240 = vadd.f32 %v5024, %v5239
    %v5241 = vpop.f32.mrb[0].mxu0
    %v5242 = vadd.f32 %v5028, %v5241
    %5243 = vmatprep.mubr.bf16.mxu0 0
    %5244 = vmatmul.mubr.bf16.gmra.mrb[0].mxu0 %v4981
    %v5245 = vpop.f32.mrb[0].mxu0
    %v5246 = vadd.f32 %v5024, %v5245
    %v5247 = vpop.f32.mrb[0].mxu0
    %v5248 = vadd.f32 %v5028, %v5247
    %v5249 = vpop.f32.mrb[0].mxu0
    %v5250 = vadd.f32 %v5024, %v5249
    %v5251 = vpop.f32.mrb[0].mxu0
    %v5252 = vadd.f32 %v5028, %v5251
    %5253 = vmatprep.mubr.bf16.mxu0 0
    %5254 = vmatmul.mubr.bf16.gmra.mrb[0].mxu0 %v4982
    %v5255 = vpop.f32.mrb[0].mxu0
    %v5256 = vadd.f32 %v5024, %v5255
    %v5257 = vpop.f32.mrb[0].mxu0
    %v5258 = vadd.f32 %v5028, %v5257
    %v5259 = vpop.f32.mrb[0].mxu0
    %v5260 = vadd.f32 %v5024, %v5259
    %v5261 = vpop.f32.mrb[0].mxu0
    %v5262 = vadd.f32 %v5028, %v5261
    %5263 = vmatprep.mubr.bf16.mxu0 0
    %5264 = vmatmul.mubr.bf16.gmra.mrb[0].mxu0 %v4983
    %v5265 = vpop.f32.mrb[0].mxu0
    %v5266 = vadd.f32 %v5024, %v5265
    %v5267 = vpop.f32.mrb[0].mxu0
    %v5268 = vadd.f32 %v5028, %v5267
    %v5269 = vpop.f32.mrb[0].mxu0
    %v5270 = vadd.f32 %v5024, %v5269
    %v5271 = vpop.f32.mrb[0].mxu0
    %v5272 = vadd.f32 %v5028, %v5271
    %5273 = vmatprep.mubr.bf16.mxu0 0
    %5274 = vmatmul.mubr.bf16.gmra.mrb[0].mxu0 %v4984
    %v5275 = vpop.f32.mrb[0].mxu0
    %v5276 = vadd.f32 %v5024, %v5275
    %v5277 = vpop.f32.mrb[0].mxu0
    %v5278 = vadd.f32 %v5028, %v5277
    %v5279 = vpop.f32.mrb[0].mxu0
    %v5280 = vadd.f32 %v5024, %v5279
    %v5281 = vpop.f32.mrb[0].mxu0
    %v5282 = vadd.f32 %v5028, %v5281
    %5283 = vmatprep.mubr.bf16.mxu0 0
    %5284 = vmatmul.mubr.bf16.gmra.mrb[0].mxu0 %v4985
    %v5285 = vpop.f32.mrb[0].mxu0
    %v5286 = vadd.f32 %v5024, %v5285
    %v5287 = vpop.f32.mrb[0].mxu0
    %v5288 = vadd.f32 %v5028, %v5287
    %v5289 = vpop.f32.mrb[0].mxu0
    %v5290 = vadd.f32 %v5024, %v5289
    %v5291 = vpop.f32.mrb[0].mxu0
    %v5292 = vadd.f32 %v5028, %v5291
    %5293 = vmatprep.mubr.bf16.mxu0 0
    %5294 = vmatmul.mubr.bf16.gmra.mrb[0].mxu0 %v4986
    %v5295 = vpop.f32.mrb[0].mxu0
    %v5296 = vadd.f32 %v5024, %v5295
    %v5297 = vpop.f32.mrb[0].mxu0
    %v5298 = vadd.f32 %v5028, %v5297
    %v5299 = vpop.f32.mrb[0].mxu0
    %v5300 = vadd.f32 %v5024, %v5299
    %v5301 = vpop.f32.mrb[0].mxu0
    %v5302 = vadd.f32 %v5028, %v5301
    %5303 = vmatprep.mubr.bf16.mxu0 0
    %5304 = vmatmul.mubr.bf16.gmra.mrb[0].mxu0 %v4987
    %v5305 = vpop.f32.mrb[0].mxu0
    %v5306 = vadd.f32 %v5024, %v5305
    %v5307 = vpop.f32.mrb[0].mxu0
    %v5308 = vadd.f32 %v5028, %v5307
    %v5309 = vpop.f32.mrb[0].mxu0
    %v5310 = vadd.f32 %v5024, %v5309
    %v5311 = vpop.f32.mrb[0].mxu0
    %v5312 = vadd.f32 %v5028, %v5311
    %5313 = vmatprep.mubr.bf16.mxu0 0
    %5314 = vmatmul.mubr.bf16.gmra.mrb[0].mxu0 %v4988
    %v5315 = vpop.f32.mrb[0].mxu0
    %v5316 = vadd.f32 %v5024, %v5315
    %v5317 = vpop.f32.mrb[0].mxu0
    %v5318 = vadd.f32 %v5028, %v5317
    %v5319 = vpop.f32.mrb[0].mxu0
    %v5320 = vadd.f32 %v5024, %v5319
    %v5321 = vpop.f32.mrb[0].mxu0
    %v5322 = vadd.f32 %v5028, %v5321
    %5323 = vmatprep.mubr.bf16.mxu0 0
    %5324 = vmatmul.mubr.bf16.gmra.mrb[0].mxu0 %v4989
    %v5325 = vpop.f32.mrb[0].mxu0
    %v5326 = vadd.f32 %v5024, %v5325
    %v5327 = vpop.f32.mrb[0].mxu0
    %v5328 = vadd.f32 %v5028, %v5327
    %v5329 = vpop.f32.mrb[0].mxu0
    %v5330 = vadd.f32 %v5024, %v5329
    %v5331 = vpop.f32.mrb[0].mxu0
    %v5332 = vadd.f32 %v5028, %v5331
    %5333 = vmatprep.mubr.bf16.mxu0 0
    %5334 = vmatmul.mubr.bf16.gmra.mrb[0].mxu0 %v4990
    %v5335 = vpop.f32.mrb[0].mxu0
    %v5336 = vadd.f32 %v5024, %v5335
    %v5337 = vpop.f32.mrb[0].mxu0
    %v5338 = vadd.f32 %v5028, %v5337
    %v5339 = vpop.f32.mrb[0].mxu0
    %v5340 = vadd.f32 %v5024, %v5339
    %v5341 = vpop.f32.mrb[0].mxu0
    %v5342 = vadd.f32 %v5028, %v5341
    %5343 = vmatprep.mubr.bf16.mxu0 0
    %5344 = vmatmul.mubr.bf16.gmra.mrb[0].mxu0 %v4991
    %v5345 = vpop.f32.mrb[0].mxu0
    %v5346 = vadd.f32 %v5024, %v5345
    %v5347 = vpop.f32.mrb[0].mxu0
    %v5348 = vadd.f32 %v5028, %v5347
    %v5349 = vpop.f32.mrb[0].mxu0
    %v5350 = vadd.f32 %v5024, %v5349
    %v5351 = vpop.f32.mrb[0].mxu0
    %v5352 = vadd.f32 %v5028, %v5351
    %5353 = vmatprep.mubr.bf16.mxu0 0
    %5354 = vmatmul.mubr.bf16.gmra.mrb[0].mxu0 %v4992
    %v5355 = vpop.f32.mrb[0].mxu0
    %v5356 = vadd.f32 %v5024, %v5355
    %v5357 = vpop.f32.mrb[0].mxu0
    %v5358 = vadd.f32 %v5028, %v5357
    %v5359 = vpop.f32.mrb[0].mxu0
    %v5360 = vadd.f32 %v5024, %v5359
    %v5361 = vpop.f32.mrb[0].mxu0
    %v5362 = vadd.f32 %v5028, %v5361
    %5363 = vmatprep.mubr.bf16.mxu0 0
    %5364 = vmatmul.mubr.bf16.gmra.mrb[0].mxu0 %v4993
    %v5365 = vpop.f32.mrb[0].mxu0
    %v5366 = vadd.f32 %v5024, %v5365
    %v5367 = vpop.f32.mrb[0].mxu0
    %v5368 = vadd.f32 %v5028, %v5367
    %v5369 = vpop.f32.mrb[0].mxu0
    %v5370 = vadd.f32 %v5024, %v5369
    %v5371 = vpop.f32.mrb[0].mxu0
    %v5372 = vadd.f32 %v5028, %v5371
    %5373 = vmatprep.mubr.bf16.mxu0 0
    %5374 = vmatmul.mubr.bf16.gmra.mrb[0].mxu0 %v4994
    %v5375 = vpop.f32.mrb[0].mxu0
    %v5376 = vadd.f32 %v5024, %v5375
    %v5377 = vpop.f32.mrb[0].mxu0
    %v5378 = vadd.f32 %v5028, %v5377
    %v5379 = vpop.f32.mrb[0].mxu0
    %v5380 = vadd.f32 %v5024, %v5379
    %v5381 = vpop.f32.mrb[0].mxu0
    %v5382 = vadd.f32 %v5028, %v5381
    %5383 = vmatprep.mubr.bf16.mxu0 0
    %5384 = vmatmul.mubr.bf16.gmra.mrb[0].mxu0 %v4995
    %v5385 = vpop.f32.mrb[0].mxu0
    %v5386 = vadd.f32 %v5024, %v5385
    %v5387 = vpop.f32.mrb[0].mxu0
    %v5388 = vadd.f32 %v5028, %v5387
    %v5389 = vpop.f32.mrb[0].mxu0
    %v5390 = vadd.f32 %v5024, %v5389
    %v5391 = vpop.f32.mrb[0].mxu0
    %v5392 = vadd.f32 %v5028, %v5391
    %5393 = vmatprep.mubr.bf16.mxu0 0
    %5394 = vmatmul.mubr.bf16.gmra.mrb[0].mxu0 %v4996
    %v5395 = vpop.f32.mrb[0].mxu0
    %v5396 = vadd.f32 %v5024, %v5395
    %v5397 = vpop.f32.mrb[0].mxu0
    %v5398 = vadd.f32 %v5028, %v5397
    %v5399 = vpop.f32.mrb[0].mxu0
    %v5400 = vadd.f32 %v5024, %v5399
    %v5401 = vpop.f32.mrb[0].mxu0
    %v5402 = vadd.f32 %v5028, %v5401
    %5403 = vmatprep.mubr.bf16.mxu0 0
    %5404 = vmatmul.mubr.bf16.gmra.mrb[0].mxu0 %v4997
    %v5405 = vpop.f32.mrb[0].mxu0
    %v5406 = vadd.f32 %v5024, %v5405
    %v5407 = vpop.f32.mrb[0].mxu0
    %v5408 = vadd.f32 %v5028, %v5407
    %v5409 = vpop.f32.mrb[0].mxu0
    %v5410 = vadd.f32 %v5024, %v5409
    %v5411 = vpop.f32.mrb[0].mxu0
    %v5412 = vadd.f32 %v5028, %v5411
    %5413 = vmatprep.mubr.bf16.mxu0 0
    %5414 = vmatmul.mubr.bf16.gmra.mrb[0].mxu0 %v4998
    %v5415 = vpop.f32.mrb[0].mxu0
    %v5416 = vadd.f32 %v5024, %v5415
    %v5417 = vpop.f32.mrb[0].mxu0
    %v5418 = vadd.f32 %v5028, %v5417
    %v5419 = vpop.f32.mrb[0].mxu0
    %v5420 = vadd.f32 %v5024, %v5419
    %v5421 = vpop.f32.mrb[0].mxu0
    %v5422 = vadd.f32 %v5028, %v5421
    %5423 = vmatprep.mubr.bf16.mxu0 0
    %5424 = vmatmul.mubr.bf16.gmra.mrb[0].mxu0 %v4999
    %v5425 = vpop.f32.mrb[0].mxu0
    %v5426 = vadd.f32 %v5024, %v5425
    %v5427 = vpop.f32.mrb[0].mxu0
    %v5428 = vadd.f32 %v5028, %v5427
    %v5429 = vpop.f32.mrb[0].mxu0
    %v5430 = vadd.f32 %v5024, %v5429
    %v5431 = vpop.f32.mrb[0].mxu0
    %v5432 = vadd.f32 %v5028, %v5431
    %5433 = vmatprep.mubr.bf16.mxu0 0
    %5434 = vmatmul.mubr.bf16.gmra.mrb[0].mxu0 %v5000
    %v5435 = vpop.f32.mrb[0].mxu0
    %v5436 = vadd.f32 %v5024, %v5435
    %v5437 = vpop.f32.mrb[0].mxu0
    %v5438 = vadd.f32 %v5028, %v5437
    %v5439 = vpop.f32.mrb[0].mxu0
    %v5440 = vadd.f32 %v5024, %v5439
    %v5441 = vpop.f32.mrb[0].mxu0
    %v5442 = vadd.f32 %v5028, %v5441
    %5443 = vmatprep.mubr.bf16.mxu0 0
    %5444 = vmatmul.mubr.bf16.gmra.mrb[0].mxu0 %v5001
    %v5445 = vpop.f32.mrb[0].mxu0
    %v5446 = vadd.f32 %v5024, %v5445
    %v5447 = vpop.f32.mrb[0].mxu0
    %v5448 = vadd.f32 %v5028, %v5447
    %v5449 = vpop.f32.mrb[0].mxu0
    %v5450 = vadd.f32 %v5024, %v5449
    %v5451 = vpop.f32.mrb[0].mxu0
    %v5452 = vadd.f32 %v5028, %v5451
    %5453 = vmatprep.mubr.bf16.mxu0 0
    %5454 = vmatmul.mubr.bf16.gmra.mrb[0].mxu0 %v5002
    %v5455 = vpop.f32.mrb[0].mxu0
    %v5456 = vadd.f32 %v5024, %v5455
    %v5457 = vpop.f32.mrb[0].mxu0
    %v5458 = vadd.f32 %v5028, %v5457
    %v5459 = vpop.f32.mrb[0].mxu0
    %v5460 = vadd.f32 %v5024, %v5459
    %v5461 = vpop.f32.mrb[0].mxu0
    %v5462 = vadd.f32 %v5028, %v5461
    %5463 = vdwg.mxu0
    %5464 = vst [vmem:[#allocation2] sm:$0xff] %v5146
    %5465 = vst [vmem:[#allocation2 + $0x8] sm:$0xff] %v5148
    %5466 = vst [vmem:[#allocation2 + $0x10] sm:$0xff] %v5150
    %5467 = vst [vmem:[#allocation2 + $0x18] sm:$0xff] %v5152
    %5468 = vst [vmem:[#allocation2 + $0x20] sm:$0xff] %v5156
    %5469 = vst [vmem:[#allocation2 + $0x28] sm:$0xff] %v5158
    %5470 = vst [vmem:[#allocation2 + $0x30] sm:$0xff] %v5160
    %5471 = vst [vmem:[#allocation2 + $0x38] sm:$0xff] %v5162
    %5472 = vst [vmem:[#allocation2 + $0x40] sm:$0xff] %v5166
    %5473 = vst [vmem:[#allocation2 + $0x48] sm:$0xff] %v5168
    %5474 = vst [vmem:[#allocation2 + $0x50] sm:$0xff] %v5170
    %5475 = vst [vmem:[#allocation2 + $0x58] sm:$0xff] %v5172
    %5476 = vst [vmem:[#allocation2 + $0x60] sm:$0xff] %v5176
    %5477 = vst [vmem:[#allocation2 + $0x68] sm:$0xff] %v5178
    %5478 = vst [vmem:[#allocation2 + $0x70] sm:$0xff] %v5180
    %5479 = vst [vmem:[#allocation2 + $0x78] sm:$0xff] %v5182
    %5480 = vst [vmem:[#allocation2 + $0x80] sm:$0xff] %v5186
    %5481 = vst [vmem:[#allocation2 + $0x88] sm:$0xff] %v5188
    %5482 = vst [vmem:[#allocation2 + $0x90] sm:$0xff] %v5190
    %5483 = vst [vmem:[#allocation2 + $0x98] sm:$0xff] %v5192
    %5484 = vst [vmem:[#allocation2 + $0xa0] sm:$0xff] %v5196
    %5485 = vst [vmem:[#allocation2 + $0xa8] sm:$0xff] %v5198
    %5486 = vst [vmem:[#allocation2 + $0xb0] sm:$0xff] %v5200
    %5487 = vst [vmem:[#allocation2 + $0xb8] sm:$0xff] %v5202
    %5488 = vst [vmem:[#allocation2 + $0xc0] sm:$0xff] %v5206
    %5489 = vst [vmem:[#allocation2 + $0xc8] sm:$0xff] %v5208
    %5490 = vst [vmem:[#allocation2 + $0xd0] sm:$0xff] %v5210
    %5491 = vst [vmem:[#allocation2 + $0xd8] sm:$0xff] %v5212
    %5492 = vst [vmem:[#allocation2 + $0xe0] sm:$0xff] %v5216
    %5493 = vst [vmem:[#allocation2 + $0xe8] sm:$0xff] %v5218
    %5494 = vst [vmem:[#allocation2 + $0xf0] sm:$0xff] %v5220
    %5495 = vst [vmem:[#allocation2 + $0xf8] sm:$0xff] %v5222
    %5496 = vst [vmem:[#allocation2 + $0x100] sm:$0xff] %v5226
    %5497 = vst [vmem:[#allocation2 + $0x108] sm:$0xff] %v5228
    %5498 = vst [vmem:[#allocation2 + $0x110] sm:$0xff] %v5230
    %5499 = vst [vmem:[#allocation2 + $0x118] sm:$0xff] %v5232
    %5500 = vst [vmem:[#allocation2 + $0x120] sm:$0xff] %v5236
    %5501 = vst [vmem:[#allocation2 + $0x128] sm:$0xff] %v5238
    %5502 = vst [vmem:[#allocation2 + $0x130] sm:$0xff] %v5240
    %5503 = vst [vmem:[#allocation2 + $0x138] sm:$0xff] %v5242
    %5504 = vst [vmem:[#allocation2 + $0x140] sm:$0xff] %v5246
    %5505 = vst [vmem:[#allocation2 + $0x148] sm:$0xff] %v5248
    %5506 = vst [vmem:[#allocation2 + $0x150] sm:$0xff] %v5250
    %5507 = vst [vmem:[#allocation2 + $0x158] sm:$0xff] %v5252
    %5508 = vst [vmem:[#allocation2 + $0x160] sm:$0xff] %v5256
    %5509 = vst [vmem:[#allocation2 + $0x168] sm:$0xff] %v5258
    %5510 = vst [vmem:[#allocation2 + $0x170] sm:$0xff] %v5260
    %5511 = vst [vmem:[#allocation2 + $0x178] sm:$0xff] %v5262
    %5512 = vst [vmem:[#allocation2 + $0x180] sm:$0xff] %v5266
    %5513 = vst [vmem:[#allocation2 + $0x188] sm:$0xff] %v5268
    %5514 = vst [vmem:[#allocation2 + $0x190] sm:$0xff] %v5270
    %5515 = vst [vmem:[#allocation2 + $0x198] sm:$0xff] %v5272
    %5516 = vst [vmem:[#allocation2 + $0x1a0] sm:$0xff] %v5276
    %5517 = vst [vmem:[#allocation2 + $0x1a8] sm:$0xff] %v5278
    %5518 = vst [vmem:[#allocation2 + $0x1b0] sm:$0xff] %v5280
    %5519 = vst [vmem:[#allocation2 + $0x1b8] sm:$0xff] %v5282
    %5520 = vst [vmem:[#allocation2 + $0x1c0] sm:$0xff] %v5286
    %5521 = vst [vmem:[#allocation2 + $0x1c8] sm:$0xff] %v5288
    %5522 = vst [vmem:[#allocation2 + $0x1d0] sm:$0xff] %v5290
    %5523 = vst [vmem:[#allocation2 + $0x1d8] sm:$0xff] %v5292
    %5524 = vst [vmem:[#allocation2 + $0x1e0] sm:$0xff] %v5296
    %5525 = vst [vmem:[#allocation2 + $0x1e8] sm:$0xff] %v5298
    %5526 = vst [vmem:[#allocation2 + $0x1f0] sm:$0xff] %v5300
    %5527 = vst [vmem:[#allocation2 + $0x1f8] sm:$0xff] %v5302
    %5528 = vst [vmem:[#allocation2 + $0x200] sm:$0xff] %v5306
    %5529 = vst [vmem:[#allocation2 + $0x208] sm:$0xff] %v5308
    %5530 = vst [vmem:[#allocation2 + $0x210] sm:$0xff] %v5310
    %5531 = vst [vmem:[#allocation2 + $0x218] sm:$0xff] %v5312
    %5532 = vst [vmem:[#allocation2 + $0x220] sm:$0xff] %v5316
    %5533 = vst [vmem:[#allocation2 + $0x228] sm:$0xff] %v5318
    %5534 = vst [vmem:[#allocation2 + $0x230] sm:$0xff] %v5320
    %5535 = vst [vmem:[#allocation2 + $0x238] sm:$0xff] %v5322
    %5536 = vst [vmem:[#allocation2 + $0x240] sm:$0xff] %v5326
    %5537 = vst [vmem:[#allocation2 + $0x248] sm:$0xff] %v5328
    %5538 = vst [vmem:[#allocation2 + $0x250] sm:$0xff] %v5330
    %5539 = vst [vmem:[#allocation2 + $0x258] sm:$0xff] %v5332
    %5540 = vst [vmem:[#allocation2 + $0x260] sm:$0xff] %v5336
    %5541 = vst [vmem:[#allocation2 + $0x268] sm:$0xff] %v5338
    %5542 = vst [vmem:[#allocation2 + $0x270] sm:$0xff] %v5340
    %5543 = vst [vmem:[#allocation2 + $0x278] sm:$0xff] %v5342
    %5544 = vst [vmem:[#allocation2 + $0x280] sm:$0xff] %v5346
    %5545 = vst [vmem:[#allocation2 + $0x288] sm:$0xff] %v5348
    %5546 = vst [vmem:[#allocation2 + $0x290] sm:$0xff] %v5350
    %5547 = vst [vmem:[#allocation2 + $0x298] sm:$0xff] %v5352
    %5548 = vst [vmem:[#allocation2 + $0x2a0] sm:$0xff] %v5356
    %5549 = vst [vmem:[#allocation2 + $0x2a8] sm:$0xff] %v5358
    %5550 = vst [vmem:[#allocation2 + $0x2b0] sm:$0xff] %v5360
    %5551 = vst [vmem:[#allocation2 + $0x2b8] sm:$0xff] %v5362
    %5552 = vst [vmem:[#allocation2 + $0x2c0] sm:$0xff] %v5366
    %5553 = vst [vmem:[#allocation2 + $0x2c8] sm:$0xff] %v5368
    %5554 = vst [vmem:[#allocation2 + $0x2d0] sm:$0xff] %v5370
    %5555 = vst [vmem:[#allocation2 + $0x2d8] sm:$0xff] %v5372
    %5556 = vst [vmem:[#allocation2 + $0x2e0] sm:$0xff] %v5376
    %5557 = vst [vmem:[#allocation2 + $0x2e8] sm:$0xff] %v5378
    %5558 = vst [vmem:[#allocation2 + $0x2f0] sm:$0xff] %v5380
    %5559 = vst [vmem:[#allocation2 + $0x2f8] sm:$0xff] %v5382
    %5560 = vst [vmem:[#allocation2 + $0x300] sm:$0xff] %v5386
    %5561 = vst [vmem:[#allocation2 + $0x308] sm:$0xff] %v5388
    %5562 = vst [vmem:[#allocation2 + $0x310] sm:$0xff] %v5390
    %5563 = vst [vmem:[#allocation2 + $0x318] sm:$0xff] %v5392
    %5564 = vst [vmem:[#allocation2 + $0x320] sm:$0xff] %v5396
    %5565 = vst [vmem:[#allocation2 + $0x328] sm:$0xff] %v5398
    %5566 = vst [vmem:[#allocation2 + $0x330] sm:$0xff] %v5400
    %5567 = vst [vmem:[#allocation2 + $0x338] sm:$0xff] %v5402
    %5568 = vst [vmem:[#allocation2 + $0x340] sm:$0xff] %v5406
    %5569 = vst [vmem:[#allocation2 + $0x348] sm:$0xff] %v5408
    %5570 = vst [vmem:[#allocation2 + $0x350] sm:$0xff] %v5410
    %5571 = vst [vmem:[#allocation2 + $0x358] sm:$0xff] %v5412
    %5572 = vst [vmem:[#allocation2 + $0x360] sm:$0xff] %v5416
    %5573 = vst [vmem:[#allocation2 + $0x368] sm:$0xff] %v5418
    %5574 = vst [vmem:[#allocation2 + $0x370] sm:$0xff] %v5420
    %5575 = vst [vmem:[#allocation2 + $0x378] sm:$0xff] %v5422
    %5576 = vst [vmem:[#allocation2 + $0x380] sm:$0xff] %v5426
    %5577 = vst [vmem:[#allocation2 + $0x388] sm:$0xff] %v5428
    %5578 = vst [vmem:[#allocation2 + $0x390] sm:$0xff] %v5430
    %5579 = vst [vmem:[#allocation2 + $0x398] sm:$0xff] %v5432
    %5580 = vst [vmem:[#allocation2 + $0x3a0] sm:$0xff] %v5436
    %5581 = vst [vmem:[#allocation2 + $0x3a8] sm:$0xff] %v5438
    %5582 = vst [vmem:[#allocation2 + $0x3b0] sm:$0xff] %v5440
    %5583 = vst [vmem:[#allocation2 + $0x3b8] sm:$0xff] %v5442
    %5584 = vst [vmem:[#allocation2 + $0x3c0] sm:$0xff] %v5446
    %5585 = vst [vmem:[#allocation2 + $0x3c8] sm:$0xff] %v5448
    %5586 = vst [vmem:[#allocation2 + $0x3d0] sm:$0xff] %v5450
    %5587 = vst [vmem:[#allocation2 + $0x3d8] sm:$0xff] %v5452
    %5588 = vst [vmem:[#allocation2 + $0x3e0] sm:$0xff] %v5456
    %5589 = vst [vmem:[#allocation2 + $0x3e8] sm:$0xff] %v5458
    %5590 = vst [vmem:[#allocation2 + $0x3f0] sm:$0xff] %v5460
    %5591 = vst [vmem:[#allocation2 + $0x3f8] sm:$0xff] %v5462
    // Predicated region
    $region22: #{tpu_custom_call.1} parent=1 // pred_check
      _
    $region23: #{tpu_custom_call.1} parent=1 // pred_check_branch
      %5593 = sbr.rel (0) target = $region25
    $region24: #{tpu_custom_call.1} parent=1 // pred_region
      %s5595 = ssub.s32 16384, 16384
      %5596 = vsyncadd [#allocation3], %s5595
      %s5597 = sshll.u32 [#allocation2], 4
      %s5598 = int_to_ptr.vmem [resolvable:$true] %s5597
      %5603 = dma.vmem_to_hbm [thread:$0]  %s5598, 16384, %s5, [#allocation3], 256, 256, 16
    $region25: #{tpu_custom_call.1} parent=1 // pred_fallthru
      _
    // Predicated region
    $region26: #{tpu_custom_call.1} parent=1 // pred_check
      _
    $region27: #{tpu_custom_call.1} parent=1 // pred_check_branch
      %5605 = sbr.rel (0) target = $region29
    $region28: #{tpu_custom_call.1} parent=1 // pred_region
      %5606 = dma.done [#allocation3], 16384
    $region29: #{tpu_custom_call.1} parent=1 // pred_fallthru
      _
    %5607 = vsyncpa [#allocation3], 1

</llo_original>
